<compile_context>
chip_gen: v7x
topology: tpu7x:2x2x1
jax: 0.10.0
libtpu: 0.0.40
codegen_flags: <defaults>
</compile_context>

<pallas_src>
import functools

import jax
import jax.numpy as jnp
from jax.experimental import pallas as pl
from jax.experimental.pallas import tpu as pltpu

EPS = 1e-5                       # PyTorch BatchNorm default
_VMEM_LIMIT = 48 * 1024 * 1024   # safe on v5e/v6e/v7x (v7x physical = 64 MiB)


def _round_up(x, m):
    return ((x + m - 1) // m) * m


def _tile(dim, pref, unit):
    """Largest multiple of `unit` <= pref that divides dim; else the full dim."""
    if dim % unit != 0:
        return dim
    t = min(max(unit, (pref // unit) * unit), dim)
    while dim % t != 0:
        t -= unit
    return t


# ----------------------------------------------------------------------------
# Kernel 1: fused adaptive-avg-pool + BatchNorm(train) for BOTH streams.
#   xs/xp:      (B, tC, tHW)   native channels-second layout, reduce last axis
#   gamma/beta: (1, tC)
# outputs: pooled_s (B, tC) f32, bn (2, B, tC) bf16 (stream 0 = s, 1 = p)
# scratch: per-stream spatial-sum accumulators (B, tC) f32
# ----------------------------------------------------------------------------
def _pool_bn_kernel(xs_ref, xp_ref, sg_ref, sb_ref, pg_ref, pb_ref,
                    pooled_s_ref, bn_ref, acc_s, acc_p, *, inv_hw):
    hw = pl.program_id(1)

    @pl.when(hw == 0)
    def _():
        acc_s[...] = jnp.zeros_like(acc_s)
        acc_p[...] = jnp.zeros_like(acc_p)

    # Partial spatial sums: XLU lane reduction over the HW tile.
    acc_s[...] += jnp.sum(xs_ref[...], axis=-1)
    acc_p[...] += jnp.sum(xp_ref[...], axis=-1)

    @pl.when(hw == pl.num_programs(1) - 1)
    def _():
        # Mean uses the TOTAL H*W (not the tile size) — exact AdaptiveAvgPool2d(1).
        pooled_s = acc_s[...] * inv_hw
        pooled_p = acc_p[...] * inv_hw
        pooled_s_ref[...] = pooled_s

        def bn(x, g, b):
            mu = jnp.mean(x, axis=0, keepdims=True)                 # f32 stats
            var = jnp.mean((x - mu) ** 2, axis=0, keepdims=True)    # biased var
            return (x - mu) * jax.lax.rsqrt(var + EPS) * g + b

        bn_ref[0] = bn(pooled_s, sg_ref[...], sb_ref[...]).astype(bn_ref.dtype)
        bn_ref[1] = bn(pooled_p, pg_ref[...], pb_ref[...]).astype(bn_ref.dtype)


def make_pool_bn(B, C, HW, tc_pref=128, thw_pref=128):
    tC = _tile(C, tc_pref, 128)
    tHW = _tile(HW, thw_pref, 128)
    grid = (C // tC, HW // tHW)
    kernel = functools.partial(_pool_bn_kernel, inv_hw=1.0 / HW)
    return pl.pallas_call(
        kernel,
        grid=grid,
        in_specs=[
            pl.BlockSpec((B, tC, tHW), lambda c, k: (0, c, k)),
            pl.BlockSpec((B, tC, tHW), lambda c, k: (0, c, k)),
            pl.BlockSpec((1, tC), lambda c, k: (0, c)),
            pl.BlockSpec((1, tC), lambda c, k: (0, c)),
            pl.BlockSpec((1, tC), lambda c, k: (0, c)),
            pl.BlockSpec((1, tC), lambda c, k: (0, c)),
        ],
        out_specs=(
            pl.BlockSpec((B, tC), lambda c, k: (0, c)),
            pl.BlockSpec((2, B, tC), lambda c, k: (0, 0, c)),
        ),
        out_shape=(
            jax.ShapeDtypeStruct((B, C), jnp.float32),
            jax.ShapeDtypeStruct((2, B, C), jnp.bfloat16),
        ),
        scratch_shapes=[
            pltpu.VMEM((B, tC), jnp.float32),
            pltpu.VMEM((B, tC), jnp.float32),
        ],
        compiler_params=pltpu.CompilerParams(
            dimension_semantics=("parallel", "arbitrary"),
            vmem_limit_bytes=_VMEM_LIMIT,
        ),
    )


# ----------------------------------------------------------------------------
# Kernel 2: bias-free Linear classifiers for both streams (bf16 MXU, f32 acc).
#   bn:  (1, B, C) bf16     w: (1, C, tNC) bf16     out: (1, B, tNC) f32
# ----------------------------------------------------------------------------
def _cls_kernel(bn_ref, w_ref, out_ref):
    out_ref[0] = jax.lax.dot_general(
        bn_ref[0], w_ref[0],
        dimension_numbers=(((1,), (0,)), ((), ())),
        preferred_element_type=jnp.float32)


def make_cls(B, C, NCp, tnc_pref=256):
    tNC = _tile(NCp, tnc_pref, 128)
    grid = (2, NCp // tNC)
    return pl.pallas_call(
        _cls_kernel,
        grid=grid,
        in_specs=[
            pl.BlockSpec((1, B, C), lambda s, j: (s, 0, 0)),
            pl.BlockSpec((1, C, tNC), lambda s, j: (s, 0, j)),
        ],
        out_specs=pl.BlockSpec((1, B, tNC), lambda s, j: (s, 0, j)),
        out_shape=jax.ShapeDtypeStruct((2, B, NCp), jnp.float32),
        compiler_params=pltpu.CompilerParams(
            dimension_semantics=("parallel", "parallel"),
            vmem_limit_bytes=_VMEM_LIMIT,
        ),
    )


# ----------------------------------------------------------------------------
# Kernel 3: BNC — per-head BatchNorm(train) + bias-free Linear.
# Grid (P, NC_tiles), both parallel; BN stats are recomputed per NC tile
# (tiny B x C work) so the NC axis stays freely splittable across cores.
# ----------------------------------------------------------------------------
def _bnc_kernel(x_ref, g_ref, b_ref, w_ref, out_ref):
    x = x_ref[0]                                        # (B, C) f32
    mu = jnp.mean(x, axis=0, keepdims=True)
    var = jnp.mean((x - mu) ** 2, axis=0, keepdims=True)
    bn = (x - mu) * jax.lax.rsqrt(var + EPS) * g_ref[0] + b_ref[0]
    out_ref[0] = jax.lax.dot_general(
        bn.astype(jnp.bfloat16), w_ref[0],
        dimension_numbers=(((1,), (0,)), ((), ())),
        preferred_element_type=jnp.float32)


def make_bnc(P, B, C, NCp, tnc_pref=256):
    tNC = _tile(NCp, tnc_pref, 128)
    grid = (P, NCp // tNC)
    return pl.pallas_call(
        _bnc_kernel,
        grid=grid,
        in_specs=[
            pl.BlockSpec((1, B, C), lambda p, j: (p, 0, 0)),
            pl.BlockSpec((1, 1, C), lambda p, j: (p, 0, 0)),
            pl.BlockSpec((1, 1, C), lambda p, j: (p, 0, 0)),
            pl.BlockSpec((1, C, tNC), lambda p, j: (p, 0, j)),
        ],
        out_specs=pl.BlockSpec((1, B, tNC), lambda p, j: (p, 0, j)),
        out_shape=jax.ShapeDtypeStruct((P, B, NCp), jnp.float32),
        compiler_params=pltpu.CompilerParams(
            dimension_semantics=("parallel", "parallel"),
            vmem_limit_bytes=_VMEM_LIMIT,
        ),
    )


# ----------------------------------------------------------------------------
# Parameter init.  BN: weight=1, bias=0 (bias_freeze=True).  Linear ~ N(0,1e-3).
# Classifier weights are stored KERNEL-READY: transposed to (C, NC), padded to a
# multiple of 128 classes (lane-dense stores), bf16, streams / heads stacked —
# no per-forward .T / jnp.transpose relayouts of multi-MB weights.
# ----------------------------------------------------------------------------
def init_params(key, C, NC, P):
    NCp = _round_up(NC, 128)
    k1, k2, k3 = jax.random.split(key, 3)

    def cls_weight(k):
        w = 0.001 * jax.random.normal(k, (NC, C), jnp.float32)   # torch layout
        wp = jnp.zeros((C, NCp), jnp.float32).at[:, :NC].set(w.T)
        return wp.astype(jnp.bfloat16)

    sp_cls_w = jnp.stack([cls_weight(k1), cls_weight(k2)])        # (2, C, NCp)
    bnc_w = jnp.stack([cls_weight(kk) for kk in jax.random.split(k3, P)])

    return {
        "sbn_gamma": jnp.ones((1, C), jnp.float32),
        "sbn_beta": jnp.zeros((1, C), jnp.float32),     # frozen bias
        "pbn_gamma": jnp.ones((1, C), jnp.float32),
        "pbn_beta": jnp.zeros((1, C), jnp.float32),
        "sp_cls_w": sp_cls_w,                           # (2, C, NCp) bf16
        "bnc_gamma": jnp.ones((P, 1, C), jnp.float32),
        "bnc_beta": jnp.zeros((P, 1, C), jnp.float32),
        "bnc_w": bnc_w,                                 # (P, C, NCp) bf16
    }


# ----------------------------------------------------------------------------
# Forward wrapper (training-mode AGGHead.forward).
# seatures, peatures: NCHW (B, C, H, W);  cls_feats: (B, C, P)
# ----------------------------------------------------------------------------
def agg_head_forward(params, seatures, peatures, cls_feats, *, num_classes):
    B, C, H, W = seatures.shape
    P = cls_feats.shape[-1]
    NCp = params["sp_cls_w"].shape[-1]
    HW = H * W

    # Free reshape (no relayout) — kernel pools over the last (lane) axis.
    xs = seatures.reshape(B, C, HW)
    xp = peatures.reshape(B, C, HW)

    pooled_s, bn_sp = make_pool_bn(B, C, HW)(
        xs, xp,
        params["sbn_gamma"], params["sbn_beta"],
        params["pbn_gamma"], params["pbn_beta"])

    logits_sp = make_cls(B, C, NCp)(bn_sp, params["sp_cls_w"])
    stp_outputs = logits_sp[0, :, :num_classes]
    pth_outputs = logits_sp[1, :, :num_classes]

    # BNC: (B, C, P) -> (P, B, C); small tensor, relayout cost negligible.
    x_pbc = jnp.transpose(cls_feats, (2, 0, 1))
    key_pbn = make_bnc(P, B, C, NCp)(
        x_pbc, params["bnc_gamma"], params["bnc_beta"], params["bnc_w"])
    key_outputs = jnp.transpose(key_pbn[:, :, :num_classes], (1, 2, 0))

    # self.count / confs passthrough have no effect on training outputs.
    # TODO(synk): eval-mode branch (running-stats BN, tuple return) and BN
    # running-stat updates are not wired; training branch covers the hot path.
    return {
        "stp_outputs": stp_outputs,             # (B, NC)
        "pth_outputs": pth_outputs,             # (B, NC)
        "key_outputs": key_outputs,             # (B, NC, P)
        "global_features": pooled_s,            # seatures.squeeze() -> (B, C)
        "key_feats": cls_feats,                 # (B, C, P)
    }


if __name__ == "__main__":
    B, C, H, W = 8, 256, 16, 16   # small stand-in for (b, 2048, h, w)
    NC, P = 300, 3                # num_classes (padded to 384 internally), heads

    key = jax.random.PRNGKey(0)
    k_s, k_p, k_c, k_params = jax.random.split(key, 4)

    seatures = jax.random.normal(k_s, (B, C, H, W), jnp.float32)
    peatures = jax.random.normal(k_p, (B, C, H, W), jnp.float32)
    cls_feats = jax.random.normal(k_c, (B, C, P), jnp.float32)
    params = init_params(k_params, C, NC, P)

    fwd = jax.jit(functools.partial(agg_head_forward, num_classes=NC))
    out = jax.block_until_ready(fwd(params, seatures, peatures, cls_feats))

    assert out["stp_outputs"].shape == (B, NC)
    assert out["pth_outputs"].shape == (B, NC)
    assert out["key_outputs"].shape == (B, NC, P)
    assert out["global_features"].shape == (B, C)
    assert out["key_feats"].shape == (B, C, P)
    print("KERNEL_OK")
</pallas_src>

<mosaic_0001>
module attributes {stable_mosaic.version = 11 : i64} {
  func.func @_cls_kernel(%arg0: i32, %arg1: i32, %arg2: memref<1x8x256xbf16, #tpu.memory_space<vmem>>, %arg3: memref<1x256x128xbf16, #tpu.memory_space<vmem>>, %arg4: memref<1x8x128xf32, #tpu.memory_space<vmem>>) attributes {dimension_semantics = [#tpu.dimension_semantics<parallel>, #tpu.dimension_semantics<parallel>], iteration_bounds = array<i64: 2, 3>, scalar_prefetch = 0 : i64, scratch_operands = 0 : i64, tpu.core_type = #tpu.core_type<tc>, window_params = [{transform_indices = @transform_0, window_bounds = array<i64: 1, 8, 256>}, {transform_indices = @transform_1, window_bounds = array<i64: 1, 256, 128>}, {transform_indices = @transform_2, window_bounds = array<i64: 1, 8, 128>}]} {
    %c0 = arith.constant 0 : index
    %c0_0 = arith.constant 0 : index
    %c0_1 = arith.constant 0 : index
    %0 = vector.load %arg2[%c0, %c0_0, %c0_1] : memref<1x8x256xbf16, #tpu.memory_space<vmem>>, vector<1x8x256xbf16>
    %1 = vector.shape_cast %0 : vector<1x8x256xbf16> to vector<8x256xbf16>
    %c0_2 = arith.constant 0 : index
    %c0_3 = arith.constant 0 : index
    %c0_4 = arith.constant 0 : index
    %2 = vector.load %arg3[%c0_2, %c0_3, %c0_4] : memref<1x256x128xbf16, #tpu.memory_space<vmem>>, vector<1x256x128xbf16>
    %3 = vector.shape_cast %2 : vector<1x256x128xbf16> to vector<256x128xbf16>
    %cst = arith.constant dense<0.000000e+00> : vector<8x128xf32>
    %4 = tpu.matmul %1, %3, %cst {dimension_numbers = #tpu.dot_dimension_numbers<[1], [0], [0], [1], [0, 0, 1, 1], [], []>} : vector<8x256xbf16>, vector<256x128xbf16>, vector<8x128xf32> -> vector<8x128xf32>
    %c0_5 = arith.constant 0 : index
    %c0_6 = arith.constant 0 : index
    %c0_7 = arith.constant 0 : index
    %5 = vector.load %arg4[%c0_5, %c0_6, %c0_7] : memref<1x8x128xf32, #tpu.memory_space<vmem>>, vector<1x8x128xf32>
    %6 = vector.shape_cast %5 : vector<1x8x128xf32> to vector<8x128xf32>
    %7 = vector.shape_cast %4 : vector<8x128xf32> to vector<1x8x128xf32>
    tpu.vector_store %arg4[%c0_5, %c0_6, %c0_7], %7 {strides = array<i32>} : memref<1x8x128xf32, #tpu.memory_space<vmem>>, vector<1x8x128xf32>,
    return
  }
  func.func @transform_0(%arg0: i32, %arg1: i32) -> (i32, i32, i32) {
    %c0_i32 = arith.constant 0 : i32
    %c0_i32_0 = arith.constant 0 : i32
    %c0_i32_1 = arith.constant 0 : i32
    return %arg0, %c0_i32, %c0_i32_0 : i32, i32, i32
  }
  func.func @transform_1(%arg0: i32, %arg1: i32) -> (i32, i32, i32) {
    %c0_i32 = arith.constant 0 : i32
    %c0_i32_0 = arith.constant 0 : i32
    return %arg0, %c0_i32, %arg1 : i32, i32, i32
  }
  func.func @transform_2(%arg0: i32, %arg1: i32) -> (i32, i32, i32) {
    %c0_i32 = arith.constant 0 : i32
    %c0_i32_0 = arith.constant 0 : i32
    return %arg0, %c0_i32, %arg1 : i32, i32, i32
  }
}

module attributes {stable_mosaic.version = 11 : i64} {
  func.func @_pool_bn_kernel(%arg0: i32, %arg1: i32, %arg2: memref<8x128x128xf32, #tpu.memory_space<vmem>>, %arg3: memref<8x128x128xf32, #tpu.memory_space<vmem>>, %arg4: memref<1x128xf32, #tpu.memory_space<vmem>>, %arg5: memref<1x128xf32, #tpu.memory_space<vmem>>, %arg6: memref<1x128xf32, #tpu.memory_space<vmem>>, %arg7: memref<1x128xf32, #tpu.memory_space<vmem>>, %arg8: memref<8x128xf32, #tpu.memory_space<vmem>>, %arg9: memref<2x8x128xbf16, #tpu.memory_space<vmem>>, %arg10: memref<8x128xf32, #tpu.memory_space<vmem>>, %arg11: memref<8x128xf32, #tpu.memory_space<vmem>>) attributes {dimension_semantics = [#tpu.dimension_semantics<parallel>, #tpu.dimension_semantics<arbitrary>], iteration_bounds = array<i64: 2, 2>, scalar_prefetch = 0 : i64, scratch_operands = 2 : i64, tpu.core_type = #tpu.core_type<tc>, window_params = [{transform_indices = @transform_0, window_bounds = array<i64: 8, 128, 128>}, {transform_indices = @transform_1, window_bounds = array<i64: 8, 128, 128>}, {transform_indices = @transform_2, window_bounds = array<i64: 1, 128>}, {transform_indices = @transform_3, window_bounds = array<i64: 1, 128>}, {transform_indices = @transform_4, window_bounds = array<i64: 1, 128>}, {transform_indices = @transform_5, window_bounds = array<i64: 1, 128>}, {transform_indices = @transform_6, window_bounds = array<i64: 8, 128>}, {transform_indices = @transform_7, window_bounds = array<i64: 2, 8, 128>}]} {
    %c0_i32 = arith.constant 0 : i32
    %0 = arith.cmpi eq, %arg1, %c0_i32 : i32
    %1 = arith.extui %0 : i1 to i32
    %c0_i32_0 = arith.constant 0 : i32
    %2 = arith.cmpi ne, %1, %c0_i32_0 : i32
    scf.if %2 {
      %cst_16 = arith.constant 0.000000e+00 : f32
      %16 = vector.broadcast %cst_16 : f32 to vector<8x128xf32>
      %c0_17 = arith.constant 0 : index
      %c0_18 = arith.constant 0 : index
      %17 = vector.load %arg10[%c0_17, %c0_18] : memref<8x128xf32, #tpu.memory_space<vmem>>, vector<8x128xf32>
      tpu.vector_store %arg10[%c0_17, %c0_18], %16 {strides = array<i32>} : memref<8x128xf32, #tpu.memory_space<vmem>>, vector<8x128xf32>,
      %cst_19 = arith.constant 0.000000e+00 : f32
      %18 = vector.broadcast %cst_19 : f32 to vector<8x128xf32>
      %c0_20 = arith.constant 0 : index
      %c0_21 = arith.constant 0 : index
      %19 = vector.load %arg11[%c0_20, %c0_21] : memref<8x128xf32, #tpu.memory_space<vmem>>, vector<8x128xf32>
      tpu.vector_store %arg11[%c0_20, %c0_21], %18 {strides = array<i32>} : memref<8x128xf32, #tpu.memory_space<vmem>>, vector<8x128xf32>,
    } else {
    }
    %c0 = arith.constant 0 : index
    %c0_1 = arith.constant 0 : index
    %3 = vector.load %arg10[%c0, %c0_1] : memref<8x128xf32, #tpu.memory_space<vmem>>, vector<8x128xf32>
    %c0_2 = arith.constant 0 : index
    %c0_3 = arith.constant 0 : index
    %c0_4 = arith.constant 0 : index
    %4 = vector.load %arg2[%c0_2, %c0_3, %c0_4] : memref<8x128x128xf32, #tpu.memory_space<vmem>>, vector<8x128x128xf32>
    %cst = arith.constant dense<0.000000e+00> : vector<8x128xf32>
    %5 = vector.multi_reduction <add>, %4, %cst [2] : vector<8x128x128xf32> to vector<8x128xf32>
    %6 = arith.addf %3, %5 : vector<8x128xf32>
    %c0_5 = arith.constant 0 : index
    %c0_6 = arith.constant 0 : index
    %7 = vector.load %arg10[%c0_5, %c0_6] : memref<8x128xf32, #tpu.memory_space<vmem>>, vector<8x128xf32>
    tpu.vector_store %arg10[%c0_5, %c0_6], %6 {strides = array<i32>} : memref<8x128xf32, #tpu.memory_space<vmem>>, vector<8x128xf32>,
    %c0_7 = arith.constant 0 : index
    %c0_8 = arith.constant 0 : index
    %8 = vector.load %arg11[%c0_7, %c0_8] : memref<8x128xf32, #tpu.memory_space<vmem>>, vector<8x128xf32>
    %c0_9 = arith.constant 0 : index
    %c0_10 = arith.constant 0 : index
    %c0_11 = arith.constant 0 : index
    %9 = vector.load %arg3[%c0_9, %c0_10, %c0_11] : memref<8x128x128xf32, #tpu.memory_space<vmem>>, vector<8x128x128xf32>
    %cst_12 = arith.constant dense<0.000000e+00> : vector<8x128xf32>
    %10 = vector.multi_reduction <add>, %9, %cst_12 [2] : vector<8x128x128xf32> to vector<8x128xf32>
    %11 = arith.addf %8, %10 : vector<8x128xf32>
    %c0_13 = arith.constant 0 : index
    %c0_14 = arith.constant 0 : index
    %12 = vector.load %arg11[%c0_13, %c0_14] : memref<8x128xf32, #tpu.memory_space<vmem>>, vector<8x128xf32>
    tpu.vector_store %arg11[%c0_13, %c0_14], %11 {strides = array<i32>} : memref<8x128xf32, #tpu.memory_space<vmem>>, vector<8x128xf32>,
    %c1_i32 = arith.constant 1 : i32
    %13 = arith.cmpi eq, %arg1, %c1_i32 : i32
    %14 = arith.extui %13 : i1 to i32
    %c0_i32_15 = arith.constant 0 : i32
    %15 = arith.cmpi ne, %14, %c0_i32_15 : i32
    scf.if %15 {
      %c0_16 = arith.constant 0 : index
      %c0_17 = arith.constant 0 : index
      %16 = vector.load %arg10[%c0_16, %c0_17] : memref<8x128xf32, #tpu.memory_space<vmem>>, vector<8x128xf32>
      %cst_18 = arith.constant 3.906250e-03 : f32
      %17 = vector.broadcast %cst_18 : f32 to vector<8x128xf32>
      %18 = arith.mulf %16, %17 : vector<8x128xf32>
      %c0_19 = arith.constant 0 : index
      %c0_20 = arith.constant 0 : index
      %19 = vector.load %arg11[%c0_19, %c0_20] : memref<8x128xf32, #tpu.memory_space<vmem>>, vector<8x128xf32>
      %cst_21 = arith.constant 3.906250e-03 : f32
      %20 = vector.broadcast %cst_21 : f32 to vector<8x128xf32>
      %21 = arith.mulf %19, %20 : vector<8x128xf32>
      %c0_22 = arith.constant 0 : index
      %c0_23 = arith.constant 0 : index
      %22 = vector.load %arg8[%c0_22, %c0_23] : memref<8x128xf32, #tpu.memory_space<vmem>>, vector<8x128xf32>
      tpu.vector_store %arg8[%c0_22, %c0_23], %18 {strides = array<i32>} : memref<8x128xf32, #tpu.memory_space<vmem>>, vector<8x128xf32>,
      %c0_24 = arith.constant 0 : index
      %c0_25 = arith.constant 0 : index
      %23 = vector.load %arg4[%c0_24, %c0_25] : memref<1x128xf32, #tpu.memory_space<vmem>>, vector<1x128xf32>
      %c0_26 = arith.constant 0 : index
      %c0_27 = arith.constant 0 : index
      %24 = vector.load %arg5[%c0_26, %c0_27] : memref<1x128xf32, #tpu.memory_space<vmem>>, vector<1x128xf32>
      %cst_28 = arith.constant dense<0.000000e+00> : vector<128xf32>
      %25 = vector.multi_reduction <add>, %18, %cst_28 [0] : vector<8x128xf32> to vector<128xf32>
      %26 = vector.shape_cast %25 : vector<128xf32> to vector<1x128xf32>
      %cst_29 = arith.constant 8.000000e+00 : f32
      %27 = vector.broadcast %cst_29 : f32 to vector<1x128xf32>
      %28 = arith.divf %26, %27 : vector<1x128xf32>
      %29 = vector.broadcast %28 : vector<1x128xf32> to vector<8x128xf32>
      %30 = arith.subf %18, %29 : vector<8x128xf32>
      %31 = arith.mulf %30, %30 : vector<8x128xf32>
      %cst_30 = arith.constant dense<0.000000e+00> : vector<128xf32>
      %32 = vector.multi_reduction <add>, %31, %cst_30 [0] : vector<8x128xf32> to vector<128xf32>
      %33 = vector.shape_cast %32 : vector<128xf32> to vector<1x128xf32>
      %cst_31 = arith.constant 8.000000e+00 : f32
      %34 = vector.broadcast %cst_31 : f32 to vector<1x128xf32>
      %35 = arith.divf %33, %34 : vector<1x128xf32>
      %36 = vector.broadcast %28 : vector<1x128xf32> to vector<8x128xf32>
      %37 = arith.subf %18, %36 : vector<8x128xf32>
      %cst_32 = arith.constant 9.99999974E-6 : f32
      %38 = vector.broadcast %cst_32 : f32 to vector<1x128xf32>
      %39 = arith.addf %35, %38 : vector<1x128xf32>
      %40 = math.rsqrt %39 : vector<1x128xf32>
      %41 = vector.broadcast %40 : vector<1x128xf32> to vector<8x128xf32>
      %42 = arith.mulf %37, %41 : vector<8x128xf32>
      %43 = vector.broadcast %23 : vector<1x128xf32> to vector<8x128xf32>
      %44 = arith.mulf %42, %43 : vector<8x128xf32>
      %45 = vector.broadcast %24 : vector<1x128xf32> to vector<8x128xf32>
      %46 = arith.addf %44, %45 : vector<8x128xf32>
      %47 = arith.truncf %46 : vector<8x128xf32> to vector<8x128xbf16>
      %c0_33 = arith.constant 0 : index
      %c0_34 = arith.constant 0 : index
      %c0_35 = arith.constant 0 : index
      %48 = vector.load %arg9[%c0_33, %c0_34, %c0_35] : memref<2x8x128xbf16, #tpu.memory_space<vmem>>, vector<1x8x128xbf16>
      %49 = vector.shape_cast %48 : vector<1x8x128xbf16> to vector<8x128xbf16>
      %50 = vector.shape_cast %47 : vector<8x128xbf16> to vector<1x8x128xbf16>
      tpu.vector_store %arg9[%c0_33, %c0_34, %c0_35], %50 {strides = array<i32>} : memref<2x8x128xbf16, #tpu.memory_space<vmem>>, vector<1x8x128xbf16>,
      %c0_36 = arith.constant 0 : index
      %c0_37 = arith.constant 0 : index
      %51 = vector.load %arg6[%c0_36, %c0_37] : memref<1x128xf32, #tpu.memory_space<vmem>>, vector<1x128xf32>
      %c0_38 = arith.constant 0 : index
      %c0_39 = arith.constant 0 : index
      %52 = vector.load %arg7[%c0_38, %c0_39] : memref<1x128xf32, #tpu.memory_space<vmem>>, vector<1x128xf32>
      %cst_40 = arith.constant dense<0.000000e+00> : vector<128xf32>
      %53 = vector.multi_reduction <add>, %21, %cst_40 [0] : vector<8x128xf32> to vector<128xf32>
      %54 = vector.shape_cast %53 : vector<128xf32> to vector<1x128xf32>
      %cst_41 = arith.constant 8.000000e+00 : f32
      %55 = vector.broadcast %cst_41 : f32 to vector<1x128xf32>
      %56 = arith.divf %54, %55 : vector<1x128xf32>
      %57 = vector.broadcast %56 : vector<1x128xf32> to vector<8x128xf32>
      %58 = arith.subf %21, %57 : vector<8x128xf32>
      %59 = arith.mulf %58, %58 : vector<8x128xf32>
      %cst_42 = arith.constant dense<0.000000e+00> : vector<128xf32>
      %60 = vector.multi_reduction <add>, %59, %cst_42 [0] : vector<8x128xf32> to vector<128xf32>
      %61 = vector.shape_cast %60 : vector<128xf32> to vector<1x128xf32>
      %cst_43 = arith.constant 8.000000e+00 : f32
      %62 = vector.broadcast %cst_43 : f32 to vector<1x128xf32>
      %63 = arith.divf %61, %62 : vector<1x128xf32>
      %64 = vector.broadcast %56 : vector<1x128xf32> to vector<8x128xf32>
      %65 = arith.subf %21, %64 : vector<8x128xf32>
      %cst_44 = arith.constant 9.99999974E-6 : f32
      %66 = vector.broadcast %cst_44 : f32 to vector<1x128xf32>
      %67 = arith.addf %63, %66 : vector<1x128xf32>
      %68 = math.rsqrt %67 : vector<1x128xf32>
      %69 = vector.broadcast %68 : vector<1x128xf32> to vector<8x128xf32>
      %70 = arith.mulf %65, %69 : vector<8x128xf32>
      %71 = vector.broadcast %51 : vector<1x128xf32> to vector<8x128xf32>
      %72 = arith.mulf %70, %71 : vector<8x128xf32>
      %73 = vector.broadcast %52 : vector<1x128xf32> to vector<8x128xf32>
      %74 = arith.addf %72, %73 : vector<8x128xf32>
      %75 = arith.truncf %74 : vector<8x128xf32> to vector<8x128xbf16>
      %c1 = arith.constant 1 : index
      %c0_45 = arith.constant 0 : index
      %c0_46 = arith.constant 0 : index
      %76 = vector.load %arg9[%c1, %c0_45, %c0_46] : memref<2x8x128xbf16, #tpu.memory_space<vmem>>, vector<1x8x128xbf16>
      %77 = vector.shape_cast %76 : vector<1x8x128xbf16> to vector<8x128xbf16>
      %78 = vector.shape_cast %75 : vector<8x128xbf16> to vector<1x8x128xbf16>
      tpu.vector_store %arg9[%c1, %c0_45, %c0_46], %78 {strides = array<i32>} : memref<2x8x128xbf16, #tpu.memory_space<vmem>>, vector<1x8x128xbf16>,
    } else {
    }
    return
  }
  func.func @transform_0(%arg0: i32, %arg1: i32) -> (i32, i32, i32) {
    %c0_i32 = arith.constant 0 : i32
    %c0_i32_0 = arith.constant 0 : i32
    return %c0_i32, %arg0, %arg1 : i32, i32, i32
  }
  func.func @transform_1(%arg0: i32, %arg1: i32) -> (i32, i32, i32) {
    %c0_i32 = arith.constant 0 : i32
    %c0_i32_0 = arith.constant 0 : i32
    return %c0_i32, %arg0, %arg1 : i32, i32, i32
  }
  func.func @transform_2(%arg0: i32, %arg1: i32) -> (i32, i32) {
    %c0_i32 = arith.constant 0 : i32
    %c0_i32_0 = arith.constant 0 : i32
    return %c0_i32, %arg0 : i32, i32
  }
  func.func @transform_3(%arg0: i32, %arg1: i32) -> (i32, i32) {
    %c0_i32 = arith.constant 0 : i32
    %c0_i32_0 = arith.constant 0 : i32
    return %c0_i32, %arg0 : i32, i32
  }
  func.func @transform_4(%arg0: i32, %arg1: i32) -> (i32, i32) {
    %c0_i32 = arith.constant 0 : i32
    %c0_i32_0 = arith.constant 0 : i32
    return %c0_i32, %arg0 : i32, i32
  }
  func.func @transform_5(%arg0: i32, %arg1: i32) -> (i32, i32) {
    %c0_i32 = arith.constant 0 : i32
    %c0_i32_0 = arith.constant 0 : i32
    return %c0_i32, %arg0 : i32, i32
  }
  func.func @transform_6(%arg0: i32, %arg1: i32) -> (i32, i32) {
    %c0_i32 = arith.constant 0 : i32
    %c0_i32_0 = arith.constant 0 : i32
    return %c0_i32, %arg0 : i32, i32
  }
  func.func @transform_7(%arg0: i32, %arg1: i32) -> (i32, i32, i32) {
    %c0_i32 = arith.constant 0 : i32
    %c0_i32_0 = arith.constant 0 : i32
    %c0_i32_1 = arith.constant 0 : i32
    return %c0_i32, %c0_i32_0, %arg0 : i32, i32, i32
  }
}

module attributes {stable_mosaic.version = 11 : i64} {
  func.func @_bnc_kernel(%arg0: i32, %arg1: i32, %arg2: memref<1x8x256xf32, #tpu.memory_space<vmem>>, %arg3: memref<1x1x256xf32, #tpu.memory_space<vmem>>, %arg4: memref<1x1x256xf32, #tpu.memory_space<vmem>>, %arg5: memref<1x256x128xbf16, #tpu.memory_space<vmem>>, %arg6: memref<1x8x128xf32, #tpu.memory_space<vmem>>) attributes {dimension_semantics = [#tpu.dimension_semantics<parallel>, #tpu.dimension_semantics<parallel>], iteration_bounds = array<i64: 3, 3>, scalar_prefetch = 0 : i64, scratch_operands = 0 : i64, tpu.core_type = #tpu.core_type<tc>, window_params = [{transform_indices = @transform_0, window_bounds = array<i64: 1, 8, 256>}, {transform_indices = @transform_1, window_bounds = array<i64: 1, 1, 256>}, {transform_indices = @transform_2, window_bounds = array<i64: 1, 1, 256>}, {transform_indices = @transform_3, window_bounds = array<i64: 1, 256, 128>}, {transform_indices = @transform_4, window_bounds = array<i64: 1, 8, 128>}]} {
    %c0 = arith.constant 0 : index
    %c0_0 = arith.constant 0 : index
    %c0_1 = arith.constant 0 : index
    %0 = vector.load %arg2[%c0, %c0_0, %c0_1] : memref<1x8x256xf32, #tpu.memory_space<vmem>>, vector<1x8x256xf32>
    %1 = vector.shape_cast %0 : vector<1x8x256xf32> to vector<8x256xf32>
    %cst = arith.constant dense<0.000000e+00> : vector<256xf32>
    %2 = vector.multi_reduction <add>, %1, %cst [0] : vector<8x256xf32> to vector<256xf32>
    %3 = vector.shape_cast %2 : vector<256xf32> to vector<1x256xf32>
    %cst_2 = arith.constant 8.000000e+00 : f32
    %4 = vector.broadcast %cst_2 : f32 to vector<1x256xf32>
    %5 = arith.divf %3, %4 : vector<1x256xf32>
    %6 = vector.broadcast %5 : vector<1x256xf32> to vector<8x256xf32>
    %7 = arith.subf %1, %6 : vector<8x256xf32>
    %8 = arith.mulf %7, %7 : vector<8x256xf32>
    %cst_3 = arith.constant dense<0.000000e+00> : vector<256xf32>
    %9 = vector.multi_reduction <add>, %8, %cst_3 [0] : vector<8x256xf32> to vector<256xf32>
    %10 = vector.shape_cast %9 : vector<256xf32> to vector<1x256xf32>
    %cst_4 = arith.constant 8.000000e+00 : f32
    %11 = vector.broadcast %cst_4 : f32 to vector<1x256xf32>
    %12 = arith.divf %10, %11 : vector<1x256xf32>
    %13 = vector.broadcast %5 : vector<1x256xf32> to vector<8x256xf32>
    %14 = arith.subf %1, %13 : vector<8x256xf32>
    %cst_5 = arith.constant 9.99999974E-6 : f32
    %15 = vector.broadcast %cst_5 : f32 to vector<1x256xf32>
    %16 = arith.addf %12, %15 : vector<1x256xf32>
    %17 = math.rsqrt %16 : vector<1x256xf32>
    %18 = vector.broadcast %17 : vector<1x256xf32> to vector<8x256xf32>
    %19 = arith.mulf %14, %18 : vector<8x256xf32>
    %c0_6 = arith.constant 0 : index
    %c0_7 = arith.constant 0 : index
    %c0_8 = arith.constant 0 : index
    %20 = vector.load %arg3[%c0_6, %c0_7, %c0_8] : memref<1x1x256xf32, #tpu.memory_space<vmem>>, vector<1x1x256xf32>
    %21 = vector.shape_cast %20 : vector<1x1x256xf32> to vector<1x256xf32>
    %22 = vector.broadcast %21 : vector<1x256xf32> to vector<8x256xf32>
    %23 = arith.mulf %19, %22 : vector<8x256xf32>
    %c0_9 = arith.constant 0 : index
    %c0_10 = arith.constant 0 : index
    %c0_11 = arith.constant 0 : index
    %24 = vector.load %arg4[%c0_9, %c0_10, %c0_11] : memref<1x1x256xf32, #tpu.memory_space<vmem>>, vector<1x1x256xf32>
    %25 = vector.shape_cast %24 : vector<1x1x256xf32> to vector<1x256xf32>
    %26 = vector.broadcast %25 : vector<1x256xf32> to vector<8x256xf32>
    %27 = arith.addf %23, %26 : vector<8x256xf32>
    %28 = arith.truncf %27 : vector<8x256xf32> to vector<8x256xbf16>
    %c0_12 = arith.constant 0 : index
    %c0_13 = arith.constant 0 : index
    %c0_14 = arith.constant 0 : index
    %29 = vector.load %arg5[%c0_12, %c0_13, %c0_14] : memref<1x256x128xbf16, #tpu.memory_space<vmem>>, vector<1x256x128xbf16>
    %30 = vector.shape_cast %29 : vector<1x256x128xbf16> to vector<256x128xbf16>
    %cst_15 = arith.constant dense<0.000000e+00> : vector<8x128xf32>
    %31 = tpu.matmul %28, %30, %cst_15 {dimension_numbers = #tpu.dot_dimension_numbers<[1], [0], [0], [1], [0, 0, 1, 1], [], []>} : vector<8x256xbf16>, vector<256x128xbf16>, vector<8x128xf32> -> vector<8x128xf32>
    %c0_16 = arith.constant 0 : index
    %c0_17 = arith.constant 0 : index
    %c0_18 = arith.constant 0 : index
    %32 = vector.load %arg6[%c0_16, %c0_17, %c0_18] : memref<1x8x128xf32, #tpu.memory_space<vmem>>, vector<1x8x128xf32>
    %33 = vector.shape_cast %32 : vector<1x8x128xf32> to vector<8x128xf32>
    %34 = vector.shape_cast %31 : vector<8x128xf32> to vector<1x8x128xf32>
    tpu.vector_store %arg6[%c0_16, %c0_17, %c0_18], %34 {strides = array<i32>} : memref<1x8x128xf32, #tpu.memory_space<vmem>>, vector<1x8x128xf32>,
    return
  }
  func.func @transform_0(%arg0: i32, %arg1: i32) -> (i32, i32, i32) {
    %c0_i32 = arith.constant 0 : i32
    %c0_i32_0 = arith.constant 0 : i32
    %c0_i32_1 = arith.constant 0 : i32
    return %arg0, %c0_i32, %c0_i32_0 : i32, i32, i32
  }
  func.func @transform_1(%arg0: i32, %arg1: i32) -> (i32, i32, i32) {
    %c0_i32 = arith.constant 0 : i32
    %c0_i32_0 = arith.constant 0 : i32
    %c0_i32_1 = arith.constant 0 : i32
    return %arg0, %c0_i32, %c0_i32_0 : i32, i32, i32
  }
  func.func @transform_2(%arg0: i32, %arg1: i32) -> (i32, i32, i32) {
    %c0_i32 = arith.constant 0 : i32
    %c0_i32_0 = arith.constant 0 : i32
    %c0_i32_1 = arith.constant 0 : i32
    return %arg0, %c0_i32, %c0_i32_0 : i32, i32, i32
  }
  func.func @transform_3(%arg0: i32, %arg1: i32) -> (i32, i32, i32) {
    %c0_i32 = arith.constant 0 : i32
    %c0_i32_0 = arith.constant 0 : i32
    return %arg0, %c0_i32, %arg1 : i32, i32, i32
  }
  func.func @transform_4(%arg0: i32, %arg1: i32) -> (i32, i32, i32) {
    %c0_i32 = arith.constant 0 : i32
    %c0_i32_0 = arith.constant 0 : i32
    return %arg0, %c0_i32, %arg1 : i32, i32, i32
  }
}

</mosaic_0001>

<llo_original>
// kernel: agg_head_forward.4
$region0: #{agg_head_forward.4}
  #allocation0 [shape = 'u32[]', space=smem, size = 0x4, offset = 0x4, fixed_abs, tag = 'smem constant byte address 0x4 - core index']
  #allocation1 [shape = 'u32[144,128]{1,0:T(1,128)}', space=vmem, size = 0x12000, scoped, tag = 'internal scratch']
  %s0 = inlined_call_operand.vmem [shape: bf16[2,8,256], index: 0, kind: input, shape index: {}]
  %s1 = inlined_call_operand.vmem [shape: bf16[2,256,384], index: 1, kind: input, shape index: {}]
  %s2 = inlined_call_operand.vmem [shape: f32[2,8,384], index: 2, kind: output, shape index: {}]
  %s3 = sld [smem:[#allocation0]]
  $region82: #{agg_head_forward.4} parent=0
    _
  %s5 = ssub.s32 1, %s3
  %s6 = scalar_select 0, %s5, %s3
  $region1: #{agg_head_forward.4} parent=0
    #allocation2 [shape = 'u8[131072]{0}', space=vmem, size = 0x20000, scoped, tag = 'input window, operand 1']
    loop: start=0, step=1, limit=8
    $region2: #{agg_head_forward.4} parent=1 // loop_pre_header
      _
    $region3: #{agg_head_forward.4} parent=1 // loop_header
      %s8 = sphi 0, %s12
      %p9 = scmp.ge.s32.totalorder %s8, 8
      %s15 = sphi 0, %s27
      %s16 = sphi 0, %s23
      %s17 = sphi 0, %s15
      %s18 = sphi 0, %s16
      %s19 = sphi 0, %s17
      %s20 = sphi 0, %s18
      %s30 = sphi 0, %s32
      %s33 = sphi 0, %s30
      %s34 = sphi 0, %s33
      %s50 = sphi 0, %s34
      %s58 = sphi 0, %s60
      %s61 = sphi 0, %s58
      %s62 = sphi 0, %s61
      %s78 = sphi 0, %s62
      %s86 = sphi 0, %s88
      %s89 = sphi 0, %s86
      %s90 = sphi 0, %s89
      %s106 = sphi 0, %s90
    $region4: #{agg_head_forward.4} parent=1 // loop_header_branch
      %11 = sbr.rel (%p9) target = $region8
    $region5: #{agg_head_forward.4} parent=1 // loop_body
      %s13 = ssub.s32 %s8, 1
      %s14 = ssub.s32 %s8, 2
      %s21 = sadd.s32 1, %s16
      %p22 = scmp.ge.s32.totalorder %s21, 3
      %s23 = scalar_select %p22, 0, %s21
      %s24 = sadd.s32 1, %s15
      %s25 = scalar_select %p22, %s24, %s15
      %p26 = scmp.ge.s32.totalorder %s25, 2
      %s27 = scalar_select %p26, 0, %s25
      %s28 = ssub.s32 %s15, %s27
      %p29 = scmp.eq.s32.totalorder %s28, 0
      %s31 = sadd.s32 %s30, 1
      %s32 = scalar_select %p29, %s30, %s31
      %p35 = pneg %p29
      %p36 = scmp.eq.s32.totalorder %s8, 5
      %p37 = por %p35, %p36
      %p38 = scmp.ne.s32.totalorder %s30, %s33
      %p39 = scmp.eq.s32.totalorder %s8, 0
      %p40 = por %p38, %p39
      %p41 = scmp.ne.s32.totalorder %s30, %s33
      %p42 = scmp.eq.s32.totalorder %s13, 5
      %p43 = por %p41, %p42
      %p44 = scmp.ne.s32.totalorder %s33, %s34
      %p45 = scmp.eq.s32.totalorder %s13, 0
      %p46 = por %p44, %p45
      %p47 = scmp.ne.s32.totalorder %s33, %s34
      %p48 = scmp.eq.s32.totalorder %s14, 5
      %p49 = por %p47, %p48
      %p51 = scmp.ne.s32.totalorder %s34, %s50
      %p52 = scmp.eq.s32.totalorder %s14, 0
      %p53 = por %p51, %p52
      %s54 = ssub.s32 %s15, %s27
      %s55 = ssub.s32 %s16, %s23
      %s56 = sor.u32 %s54, %s55
      %p57 = scmp.eq.s32.totalorder %s56, 0
      %s59 = sadd.s32 %s58, 1
      %s60 = scalar_select %p57, %s58, %s59
      %p63 = pneg %p57
      %p64 = scmp.eq.s32.totalorder %s8, 5
      %p65 = por %p63, %p64
      %p66 = scmp.ne.s32.totalorder %s58, %s61
      %p67 = scmp.eq.s32.totalorder %s8, 0
      %p68 = por %p66, %p67
      %p69 = scmp.ne.s32.totalorder %s58, %s61
      %p70 = scmp.eq.s32.totalorder %s13, 5
      %p71 = por %p69, %p70
      %p72 = scmp.ne.s32.totalorder %s61, %s62
      %p73 = scmp.eq.s32.totalorder %s13, 0
      %p74 = por %p72, %p73
      %p75 = scmp.ne.s32.totalorder %s61, %s62
      %p76 = scmp.eq.s32.totalorder %s14, 5
      %p77 = por %p75, %p76
      %p79 = scmp.ne.s32.totalorder %s62, %s78
      %p80 = scmp.eq.s32.totalorder %s14, 0
      %p81 = por %p79, %p80
      %s82 = ssub.s32 %s15, %s27
      %s83 = ssub.s32 %s16, %s23
      %s84 = sor.u32 %s82, %s83
      %p85 = scmp.eq.s32.totalorder %s84, 0
      %s87 = sadd.s32 %s86, 1
      %s88 = scalar_select %p85, %s86, %s87
      %p91 = pneg %p85
      %p92 = scmp.eq.s32.totalorder %s8, 5
      %p93 = por %p91, %p92
      %p94 = scmp.ne.s32.totalorder %s86, %s89
      %p95 = scmp.eq.s32.totalorder %s8, 0
      %p96 = por %p94, %p95
      %p97 = scmp.ne.s32.totalorder %s86, %s89
      %p98 = scmp.eq.s32.totalorder %s13, 5
      %p99 = por %p97, %p98
      %p100 = scmp.ne.s32.totalorder %s89, %s90
      %p101 = scmp.eq.s32.totalorder %s13, 0
      %p102 = por %p100, %p101
      %p103 = scmp.ne.s32.totalorder %s89, %s90
      %p104 = scmp.eq.s32.totalorder %s14, 5
      %p105 = por %p103, %p104
      %p107 = scmp.ne.s32.totalorder %s90, %s106
      %p108 = scmp.eq.s32.totalorder %s14, 0
      %p109 = por %p107, %p108
      %p110 = scmp.le.s32.totalorder 1, %s8
      %p111 = scmp.lt.s32.totalorder %s8, 7
      %p112 = pnand %p110, %p111
      %p113 = pneg %p112
      // Predicated region
      $region9: #{agg_head_forward.4} parent=5 // pred_check
        _
      $region10: #{agg_head_forward.4} parent=5 // pred_check_branch
        %115 = sbr.rel (%p112) target = $region12
      $region11: #{agg_head_forward.4} parent=5 // pred_region
        %s116 = ssub.s32 %s8, 1
      $region12: #{agg_head_forward.4} parent=5 // pred_fallthru
        _
      %p117 = scmp.lt.s32.totalorder %s8, 6
      // Predicated region
      $region13: #{agg_head_forward.4} parent=5 // pred_check
        %p118 = pneg %p117
      $region14: #{agg_head_forward.4} parent=5 // pred_check_branch
        %120 = sbr.rel (%p118) target = $region16
      $region15: #{agg_head_forward.4} parent=5 // pred_region
        // Predicated region
        $region17: #{agg_head_forward.4} parent=15 // pred_check
          %p121 = pneg %p40
        $region18: #{agg_head_forward.4} parent=15 // pred_check_branch
          %123 = sbr.rel (%p121) target = $region20
        $region19: #{agg_head_forward.4} parent=15 // pred_region
          %p124 = scmp.lt.s32.totalorder %s15, 1
          %s125 = scalar_select %p124, %s15, 1
          %s126 = smul.addr %s125, 2
          %s127 = smul.addr %s126, 4
          %s128 = scalar_lea.vmem %s0, %s127
        $region20: #{agg_head_forward.4} parent=15 // pred_fallthru
          _
        // Predicated region
        $region21: #{agg_head_forward.4} parent=15 // pred_check
          %p129 = pneg %p68
        $region22: #{agg_head_forward.4} parent=15 // pred_check_branch
          %131 = sbr.rel (%p129) target = $region24
        $region23: #{agg_head_forward.4} parent=15 // pred_region
          %s132 = sand.u32 %s58, 1
          %s133 = sand.u32 %s58, 1
          %s134 = smul.addr %s133, 128
          %s135 = scalar_lea.vmem [#allocation2], %s134
          %s136 = smul.addr %s15, 96
          %s137 = sadd.s32 %s16, %s136
          %s138 = smul.addr %s137, 4
          %s139 = scalar_lea.vmem %s1, %s138
          // Predicated region
          $region25: #{agg_head_forward.4} parent=23 // pred_check
            _
          $region26: #{agg_head_forward.4} parent=23 // pred_check_branch
            %141 = sbr.rel (0) target = $region28
          $region27: #{agg_head_forward.4} parent=23 // pred_region
            // Predicated region
            $region29: #{agg_head_forward.4} parent=27 // pred_check
              _
            $region30: #{agg_head_forward.4} parent=27 // pred_check_branch
              %143 = sbr.rel target = $region32
            $region31: #{agg_head_forward.4} parent=27 // pred_region
              // Predicated region
              $region44: #{agg_head_forward.4} parent=31 // pred_check
                _
              $region45: #{agg_head_forward.4} parent=31 // pred_check_branch
                %220 = sbr.rel (0) target = $region47
              $region46: #{agg_head_forward.4} parent=31 // pred_region
                loop: start=0, step=1, limit=1
                $region48: #{agg_head_forward.4} parent=46 // loop_pre_header
                  _
                $region49: #{agg_head_forward.4} parent=46 // loop_header
                  %s222 = sphi 0, %s226
                  %p223 = scmp.ge.s32.totalorder %s222, 1
                  %s227 = sphi %s139, %s139
                  %s228 = sphi %s135, %s135
                $region50: #{agg_head_forward.4} parent=46 // loop_header_branch
                  %225 = sbr.rel (%p223) target = $region54
                $region51: #{agg_head_forward.4} parent=46 // loop_body
                  _
                $region52: #{agg_head_forward.4} parent=46 // loop_footer
                  %s226 = sadd.s32 1, %s222
                $region53: #{agg_head_forward.4} parent=46 // loop_footer_branch
                  %221 = sbr.rel target = $region49
                $region54: #{agg_head_forward.4} parent=46 // loop_exit
                  _
                loop: start=0, step=1, limit=1
                $region55: #{agg_head_forward.4} parent=46 // loop_pre_header
                  _
                $region56: #{agg_head_forward.4} parent=46 // loop_header
                  %s231 = sphi 0, %s235
                  %p232 = scmp.ge.s32.totalorder %s231, 1
                  %s236 = sphi %s139, %s139
                  %s237 = sphi %s135, %s135
                $region57: #{agg_head_forward.4} parent=46 // loop_header_branch
                  %234 = sbr.rel (%p232) target = $region61
                $region58: #{agg_head_forward.4} parent=46 // loop_body
                  %v238 = vld [vmem:[%s236] sm:$0xf]
                  %239 = vst [vmem:[%s237] sm:$0xf] %v238
                  %v240 = vld [vmem:[%s236 + $0xc] sm:$0xf]
                  %241 = vst [vmem:[%s237 + $0x4] sm:$0xf] %v240
                  %v242 = vld [vmem:[%s236 + $0x18] sm:$0xf]
                  %243 = vst [vmem:[%s237 + $0x8] sm:$0xf] %v242
                  %v244 = vld [vmem:[%s236 + $0x24] sm:$0xf]
                  %245 = vst [vmem:[%s237 + $0xc] sm:$0xf] %v244
                  %v246 = vld [vmem:[%s236 + $0x30] sm:$0xf]
                  %247 = vst [vmem:[%s237 + $0x10] sm:$0xf] %v246
                  %v248 = vld [vmem:[%s236 + $0x3c] sm:$0xf]
                  %249 = vst [vmem:[%s237 + $0x14] sm:$0xf] %v248
                  %v250 = vld [vmem:[%s236 + $0x48] sm:$0xf]
                  %251 = vst [vmem:[%s237 + $0x18] sm:$0xf] %v250
                  %v252 = vld [vmem:[%s236 + $0x54] sm:$0xf]
                  %253 = vst [vmem:[%s237 + $0x1c] sm:$0xf] %v252
                  %v254 = vld [vmem:[%s236 + $0x60] sm:$0xf]
                  %255 = vst [vmem:[%s237 + $0x20] sm:$0xf] %v254
                  %v256 = vld [vmem:[%s236 + $0x6c] sm:$0xf]
                  %257 = vst [vmem:[%s237 + $0x24] sm:$0xf] %v256
                  %v258 = vld [vmem:[%s236 + $0x78] sm:$0xf]
                  %259 = vst [vmem:[%s237 + $0x28] sm:$0xf] %v258
                  %v260 = vld [vmem:[%s236 + $0x84] sm:$0xf]
                  %261 = vst [vmem:[%s237 + $0x2c] sm:$0xf] %v260
                  %v262 = vld [vmem:[%s236 + $0x90] sm:$0xf]
                  %263 = vst [vmem:[%s237 + $0x30] sm:$0xf] %v262
                  %v264 = vld [vmem:[%s236 + $0x9c] sm:$0xf]
                  %265 = vst [vmem:[%s237 + $0x34] sm:$0xf] %v264
                  %v266 = vld [vmem:[%s236 + $0xa8] sm:$0xf]
                  %267 = vst [vmem:[%s237 + $0x38] sm:$0xf] %v266
                  %v268 = vld [vmem:[%s236 + $0xb4] sm:$0xf]
                  %269 = vst [vmem:[%s237 + $0x3c] sm:$0xf] %v268
                  %v270 = vld [vmem:[%s236 + $0xc0] sm:$0xf]
                  %271 = vst [vmem:[%s237 + $0x40] sm:$0xf] %v270
                  %v272 = vld [vmem:[%s236 + $0xcc] sm:$0xf]
                  %273 = vst [vmem:[%s237 + $0x44] sm:$0xf] %v272
                  %v274 = vld [vmem:[%s236 + $0xd8] sm:$0xf]
                  %275 = vst [vmem:[%s237 + $0x48] sm:$0xf] %v274
                  %v276 = vld [vmem:[%s236 + $0xe4] sm:$0xf]
                  %277 = vst [vmem:[%s237 + $0x4c] sm:$0xf] %v276
                  %v278 = vld [vmem:[%s236 + $0xf0] sm:$0xf]
                  %279 = vst [vmem:[%s237 + $0x50] sm:$0xf] %v278
                  %v280 = vld [vmem:[%s236 + $0xfc] sm:$0xf]
                  %281 = vst [vmem:[%s237 + $0x54] sm:$0xf] %v280
                  %v282 = vld [vmem:[%s236 + $0x108] sm:$0xf]
                  %283 = vst [vmem:[%s237 + $0x58] sm:$0xf] %v282
                  %v284 = vld [vmem:[%s236 + $0x114] sm:$0xf]
                  %285 = vst [vmem:[%s237 + $0x5c] sm:$0xf] %v284
                  %v286 = vld [vmem:[%s236 + $0x120] sm:$0xf]
                  %287 = vst [vmem:[%s237 + $0x60] sm:$0xf] %v286
                  %v288 = vld [vmem:[%s236 + $0x12c] sm:$0xf]
                  %289 = vst [vmem:[%s237 + $0x64] sm:$0xf] %v288
                  %v290 = vld [vmem:[%s236 + $0x138] sm:$0xf]
                  %291 = vst [vmem:[%s237 + $0x68] sm:$0xf] %v290
                  %v292 = vld [vmem:[%s236 + $0x144] sm:$0xf]
                  %293 = vst [vmem:[%s237 + $0x6c] sm:$0xf] %v292
                  %v294 = vld [vmem:[%s236 + $0x150] sm:$0xf]
                  %295 = vst [vmem:[%s237 + $0x70] sm:$0xf] %v294
                  %v296 = vld [vmem:[%s236 + $0x15c] sm:$0xf]
                  %297 = vst [vmem:[%s237 + $0x74] sm:$0xf] %v296
                  %v298 = vld [vmem:[%s236 + $0x168] sm:$0xf]
                  %299 = vst [vmem:[%s237 + $0x78] sm:$0xf] %v298
                  %v300 = vld [vmem:[%s236 + $0x174] sm:$0xf]
                  %301 = vst [vmem:[%s237 + $0x7c] sm:$0xf] %v300
                $region59: #{agg_head_forward.4} parent=46 // loop_footer
                  %s235 = sadd.s32 1, %s231
                $region60: #{agg_head_forward.4} parent=46 // loop_footer_branch
                  %230 = sbr.rel target = $region56
                $region61: #{agg_head_forward.4} parent=46 // loop_exit
                  _
              $region47: #{agg_head_forward.4} parent=31 // pred_fallthru
                _
            $region32: #{agg_head_forward.4} parent=27 // pred_fallthru
              _
            // Predicated region
            $region33: #{agg_head_forward.4} parent=27 // pred_check
              _
            $region34: #{agg_head_forward.4} parent=27 // pred_check_branch
              %145 = sbr.rel (0) target = $region36
            $region35: #{agg_head_forward.4} parent=27 // pred_region
              loop: start=0, step=1, limit=1
              $region37: #{agg_head_forward.4} parent=35 // loop_pre_header
                _
              $region38: #{agg_head_forward.4} parent=35 // loop_header
                %s148 = sphi 0, %s152
                %p149 = scmp.ge.s32.totalorder %s148, 1
                %s153 = sphi %s139, %s139
                %s154 = sphi %s135, %s135
              $region39: #{agg_head_forward.4} parent=35 // loop_header_branch
                %151 = sbr.rel (%p149) target = $region43
              $region40: #{agg_head_forward.4} parent=35 // loop_body
                %v155 = vld [vmem:[%s153] sm:$0xf]
                %156 = vst [vmem:[%s154] sm:$0xf] %v155
                %v157 = vld [vmem:[%s153 + $0xc] sm:$0xf]
                %158 = vst [vmem:[%s154 + $0x4] sm:$0xf] %v157
                %v159 = vld [vmem:[%s153 + $0x18] sm:$0xf]
                %160 = vst [vmem:[%s154 + $0x8] sm:$0xf] %v159
                %v161 = vld [vmem:[%s153 + $0x24] sm:$0xf]
                %162 = vst [vmem:[%s154 + $0xc] sm:$0xf] %v161
                %v163 = vld [vmem:[%s153 + $0x30] sm:$0xf]
                %164 = vst [vmem:[%s154 + $0x10] sm:$0xf] %v163
                %v165 = vld [vmem:[%s153 + $0x3c] sm:$0xf]
                %166 = vst [vmem:[%s154 + $0x14] sm:$0xf] %v165
                %v167 = vld [vmem:[%s153 + $0x48] sm:$0xf]
                %168 = vst [vmem:[%s154 + $0x18] sm:$0xf] %v167
                %v169 = vld [vmem:[%s153 + $0x54] sm:$0xf]
                %170 = vst [vmem:[%s154 + $0x1c] sm:$0xf] %v169
                %v171 = vld [vmem:[%s153 + $0x60] sm:$0xf]
                %172 = vst [vmem:[%s154 + $0x20] sm:$0xf] %v171
                %v173 = vld [vmem:[%s153 + $0x6c] sm:$0xf]
                %174 = vst [vmem:[%s154 + $0x24] sm:$0xf] %v173
                %v175 = vld [vmem:[%s153 + $0x78] sm:$0xf]
                %176 = vst [vmem:[%s154 + $0x28] sm:$0xf] %v175
                %v177 = vld [vmem:[%s153 + $0x84] sm:$0xf]
                %178 = vst [vmem:[%s154 + $0x2c] sm:$0xf] %v177
                %v179 = vld [vmem:[%s153 + $0x90] sm:$0xf]
                %180 = vst [vmem:[%s154 + $0x30] sm:$0xf] %v179
                %v181 = vld [vmem:[%s153 + $0x9c] sm:$0xf]
                %182 = vst [vmem:[%s154 + $0x34] sm:$0xf] %v181
                %v183 = vld [vmem:[%s153 + $0xa8] sm:$0xf]
                %184 = vst [vmem:[%s154 + $0x38] sm:$0xf] %v183
                %v185 = vld [vmem:[%s153 + $0xb4] sm:$0xf]
                %186 = vst [vmem:[%s154 + $0x3c] sm:$0xf] %v185
                %v187 = vld [vmem:[%s153 + $0xc0] sm:$0xf]
                %188 = vst [vmem:[%s154 + $0x40] sm:$0xf] %v187
                %v189 = vld [vmem:[%s153 + $0xcc] sm:$0xf]
                %190 = vst [vmem:[%s154 + $0x44] sm:$0xf] %v189
                %v191 = vld [vmem:[%s153 + $0xd8] sm:$0xf]
                %192 = vst [vmem:[%s154 + $0x48] sm:$0xf] %v191
                %v193 = vld [vmem:[%s153 + $0xe4] sm:$0xf]
                %194 = vst [vmem:[%s154 + $0x4c] sm:$0xf] %v193
                %v195 = vld [vmem:[%s153 + $0xf0] sm:$0xf]
                %196 = vst [vmem:[%s154 + $0x50] sm:$0xf] %v195
                %v197 = vld [vmem:[%s153 + $0xfc] sm:$0xf]
                %198 = vst [vmem:[%s154 + $0x54] sm:$0xf] %v197
                %v199 = vld [vmem:[%s153 + $0x108] sm:$0xf]
                %200 = vst [vmem:[%s154 + $0x58] sm:$0xf] %v199
                %v201 = vld [vmem:[%s153 + $0x114] sm:$0xf]
                %202 = vst [vmem:[%s154 + $0x5c] sm:$0xf] %v201
                %v203 = vld [vmem:[%s153 + $0x120] sm:$0xf]
                %204 = vst [vmem:[%s154 + $0x60] sm:$0xf] %v203
                %v205 = vld [vmem:[%s153 + $0x12c] sm:$0xf]
                %206 = vst [vmem:[%s154 + $0x64] sm:$0xf] %v205
                %v207 = vld [vmem:[%s153 + $0x138] sm:$0xf]
                %208 = vst [vmem:[%s154 + $0x68] sm:$0xf] %v207
                %v209 = vld [vmem:[%s153 + $0x144] sm:$0xf]
                %210 = vst [vmem:[%s154 + $0x6c] sm:$0xf] %v209
                %v211 = vld [vmem:[%s153 + $0x150] sm:$0xf]
                %212 = vst [vmem:[%s154 + $0x70] sm:$0xf] %v211
                %v213 = vld [vmem:[%s153 + $0x15c] sm:$0xf]
                %214 = vst [vmem:[%s154 + $0x74] sm:$0xf] %v213
                %v215 = vld [vmem:[%s153 + $0x168] sm:$0xf]
                %216 = vst [vmem:[%s154 + $0x78] sm:$0xf] %v215
                %v217 = vld [vmem:[%s153 + $0x174] sm:$0xf]
                %218 = vst [vmem:[%s154 + $0x7c] sm:$0xf] %v217
              $region41: #{agg_head_forward.4} parent=35 // loop_footer
                %s152 = sadd.s32 1, %s148
              $region42: #{agg_head_forward.4} parent=35 // loop_footer_branch
                %147 = sbr.rel target = $region38
              $region43: #{agg_head_forward.4} parent=35 // loop_exit
                _
            $region36: #{agg_head_forward.4} parent=27 // pred_fallthru
              _
          $region28: #{agg_head_forward.4} parent=23 // pred_fallthru
            _
          %302 = vnop
        $region24: #{agg_head_forward.4} parent=15 // pred_fallthru
          _
      $region16: #{agg_head_forward.4} parent=5 // pred_fallthru
        _
      %p303 = scmp.le.s32.totalorder 1, %s8
      %p304 = scmp.lt.s32.totalorder %s8, 7
      %p305 = pnand %p303, %p304
      %p306 = pneg %p305
      // Predicated region
      $region62: #{agg_head_forward.4} parent=5 // pred_check
        _
      $region63: #{agg_head_forward.4} parent=5 // pred_check_branch
        %308 = sbr.rel (%p305) target = $region65
      $region64: #{agg_head_forward.4} parent=5 // pred_region
        %s309 = ssub.s32 %s8, 1
        %s310 = sand.u32 %s61, 1
        %s311 = sand.u32 %s61, 1
        %s312 = smul.addr %s311, 128
        %s313 = scalar_lea.vmem [#allocation2], %s312
        // Predicated region
        $region66: #{agg_head_forward.4} parent=64 // pred_check
          %p314 = pneg %p74
        $region67: #{agg_head_forward.4} parent=64 // pred_check_branch
          %316 = sbr.rel (%p314) target = $region69
        $region68: #{agg_head_forward.4} parent=64 // pred_region
          _
        $region69: #{agg_head_forward.4} parent=64 // pred_fallthru
          _
        %p317 = scmp.lt.s32.totalorder %s17, 1
        %s318 = scalar_select %p317, %s17, 1
        %s319 = smul.addr %s318, 2
        %s320 = smul.addr %s319, 4
        %s321 = scalar_lea.vmem %s0, %s320
        %p322 = pneg %p46
        %p323 = pneg %p43
        %s324 = sand.u32 %s61, 1
        %s325 = sand.u32 %s61, 1
        %s326 = smul.addr %s325, 128
        %s327 = scalar_lea.vmem [#allocation2], %s326
        %p328 = pneg %p74
        %p329 = pneg %p71
        %p330 = pneg %p102
        %p331 = pneg %p99
        %p332 = scmp.lt.s32.totalorder %s17, 1
        %s333 = scalar_select %p332, %s17, 1
        %p334 = scmp.lt.s32.totalorder %s18, 2
        %s335 = scalar_select %p334, %s18, 2
        %s336 = smul.addr %s333, 3
        %s337 = sadd.s32 %s335, %s336
        %s338 = smul.addr %s337, 8
        %s339 = scalar_lea.vmem %s2, %s338
        %p340 = scmp.lt.s32.totalorder %s17, 1
        %s341 = scalar_select %p340, %s17, 1
        %s342 = smul.addr %s341, 2
        %s343 = smul.addr %s342, 4
        %s344 = scalar_lea.vmem %s0, %s343
        %p345 = scmp.lt.s32.totalorder %s17, 1
        %s346 = scalar_select %p345, %s17, 1
        %p347 = scmp.lt.s32.totalorder %s18, 2
        %s348 = scalar_select %p347, %s18, 2
        %s349 = smul.addr %s346, 3
        %s350 = sadd.s32 %s348, %s349
        %s351 = smul.addr %s350, 8
        %s352 = scalar_lea.vmem %s2, %s351
        %v354 = vld [vmem:[%s344] sm:$0xff]
        %v355 = vld [vmem:[%s313] sm:$0xf]
        %v356 = vld [vmem:[%s313 + $0x4] sm:$0xf]
        %v357 = vld [vmem:[%s313 + $0x8] sm:$0xf]
        %v358 = vld [vmem:[%s313 + $0xc] sm:$0xf]
        %v359 = vld [vmem:[%s313 + $0x10] sm:$0xf]
        %v360 = vld [vmem:[%s313 + $0x14] sm:$0xf]
        %v361 = vld [vmem:[%s313 + $0x18] sm:$0xf]
        %v362 = vld [vmem:[%s313 + $0x1c] sm:$0xf]
        %v363 = vld [vmem:[%s313 + $0x20] sm:$0xf]
        %v364 = vld [vmem:[%s313 + $0x24] sm:$0xf]
        %v365 = vld [vmem:[%s313 + $0x28] sm:$0xf]
        %v366 = vld [vmem:[%s313 + $0x2c] sm:$0xf]
        %v367 = vld [vmem:[%s313 + $0x30] sm:$0xf]
        %v368 = vld [vmem:[%s313 + $0x34] sm:$0xf]
        %v369 = vld [vmem:[%s313 + $0x38] sm:$0xf]
        %v370 = vld [vmem:[%s313 + $0x3c] sm:$0xf]
        %v371 = vld [vmem:[%s313 + $0x40] sm:$0xf]
        %v372 = vld [vmem:[%s313 + $0x44] sm:$0xf]
        %v373 = vld [vmem:[%s313 + $0x48] sm:$0xf]
        %v374 = vld [vmem:[%s313 + $0x4c] sm:$0xf]
        %v375 = vld [vmem:[%s313 + $0x50] sm:$0xf]
        %v376 = vld [vmem:[%s313 + $0x54] sm:$0xf]
        %v377 = vld [vmem:[%s313 + $0x58] sm:$0xf]
        %v378 = vld [vmem:[%s313 + $0x5c] sm:$0xf]
        %v379 = vld [vmem:[%s313 + $0x60] sm:$0xf]
        %v380 = vld [vmem:[%s313 + $0x64] sm:$0xf]
        %v381 = vld [vmem:[%s313 + $0x68] sm:$0xf]
        %v382 = vld [vmem:[%s313 + $0x6c] sm:$0xf]
        %v383 = vld [vmem:[%s313 + $0x70] sm:$0xf]
        %v384 = vld [vmem:[%s313 + $0x74] sm:$0xf]
        %v385 = vld [vmem:[%s313 + $0x78] sm:$0xf]
        %v386 = vld [vmem:[%s313 + $0x7c] sm:$0xf]
        %v388 = vunpack.c.l.b16 %v354
        %v389 = vunpack.c.h.b16 %v354
        %v390 = vpack.c.b16 %v388, %v388
        %v391 = vpack.c.b16 %v389, %v389
        %v426 = vunpack.c.l.b16 %v355
        %v427 = vunpack.c.l.b16 %v356
        %v428 = vunpack.c.l.b16 %v357
        %v429 = vunpack.c.l.b16 %v358
        %v430 = vunpack.c.l.b16 %v359
        %v431 = vunpack.c.l.b16 %v360
        %v432 = vunpack.c.l.b16 %v361
        %v433 = vunpack.c.l.b16 %v362
        %v434 = vunpack.c.l.b16 %v363
        %v435 = vunpack.c.l.b16 %v364
        %v436 = vunpack.c.l.b16 %v365
        %v437 = vunpack.c.l.b16 %v366
        %v438 = vunpack.c.l.b16 %v367
        %v439 = vunpack.c.l.b16 %v368
        %v440 = vunpack.c.l.b16 %v369
        %v441 = vunpack.c.l.b16 %v370
        %v442 = vunpack.c.l.b16 %v371
        %v443 = vunpack.c.l.b16 %v372
        %v444 = vunpack.c.l.b16 %v373
        %v445 = vunpack.c.l.b16 %v374
        %v446 = vunpack.c.l.b16 %v375
        %v447 = vunpack.c.l.b16 %v376
        %v448 = vunpack.c.l.b16 %v377
        %v449 = vunpack.c.l.b16 %v378
        %v450 = vunpack.c.l.b16 %v379
        %v451 = vunpack.c.l.b16 %v380
        %v452 = vunpack.c.l.b16 %v381
        %v453 = vunpack.c.l.b16 %v382
        %v454 = vunpack.c.l.b16 %v383
        %v455 = vunpack.c.l.b16 %v384
        %v456 = vunpack.c.l.b16 %v385
        %v457 = vunpack.c.l.b16 %v386
        %v458 = vpack.c.b16 %v427, %v426
        %v459 = vpack.c.b16 %v429, %v428
        %v460 = vpack.c.b16 %v431, %v430
        %v461 = vpack.c.b16 %v433, %v432
        %v462 = vpack.c.b16 %v435, %v434
        %v463 = vpack.c.b16 %v437, %v436
        %v464 = vpack.c.b16 %v439, %v438
        %v465 = vpack.c.b16 %v441, %v440
        %v466 = vpack.c.b16 %v443, %v442
        %v467 = vpack.c.b16 %v445, %v444
        %v468 = vpack.c.b16 %v447, %v446
        %v469 = vpack.c.b16 %v449, %v448
        %v470 = vpack.c.b16 %v451, %v450
        %v471 = vpack.c.b16 %v453, %v452
        %v472 = vpack.c.b16 %v455, %v454
        %v473 = vpack.c.b16 %v457, %v456
        %490 = vmatprep.subr.bf16.mxu0 0
        %491 = vmatpush1.bf16.msra.mxu0 %v458
        %492 = vmatprep.subr.bf16.mxu0 0
        %493 = vmatpush1.bf16.msra.mxu0 %v459
        %494 = vmatprep.subr.bf16.mxu0 0
        %495 = vmatpush1.bf16.msra.mxu0 %v460
        %496 = vmatprep.subr.bf16.mxu0 0
        %497 = vmatpush1.bf16.msra.mxu0 %v461
        %498 = vmatprep.subr.bf16.mxu0 0
        %499 = vmatpush1.bf16.msra.mxu0 %v462
        %500 = vmatprep.subr.bf16.mxu0 0
        %501 = vmatpush1.bf16.msra.mxu0 %v463
        %502 = vmatprep.subr.bf16.mxu0 0
        %503 = vmatpush1.bf16.msra.mxu0 %v464
        %504 = vmatprep.subr.bf16.mxu0 0
        %505 = vmatpush1.bf16.msra.mxu0 %v465
        %506 = vmatprep.subr.bf16.mxu0 0
        %507 = vmatpush1.bf16.msra.mxu0 %v466
        %508 = vmatprep.subr.bf16.mxu0 0
        %509 = vmatpush1.bf16.msra.mxu0 %v467
        %510 = vmatprep.subr.bf16.mxu0 0
        %511 = vmatpush1.bf16.msra.mxu0 %v468
        %512 = vmatprep.subr.bf16.mxu0 0
        %513 = vmatpush1.bf16.msra.mxu0 %v469
        %514 = vmatprep.subr.bf16.mxu0 0
        %515 = vmatpush1.bf16.msra.mxu0 %v470
        %516 = vmatprep.subr.bf16.mxu0 0
        %517 = vmatpush1.bf16.msra.mxu0 %v471
        %518 = vmatprep.subr.bf16.mxu0 0
        %519 = vmatpush1.bf16.msra.mxu0 %v472
        %520 = vmatprep.subr.bf16.mxu0 0
        %521 = vmatpush1.bf16.msra.mxu0 %v473
        %522 = vmatprep.mubr.bf16.mxu0 %v391
        %523 = vmatmul.mubr.bf16.gmra.mrb[0].mxu0 %v390
        %v524 = vpop.f32.mrb[0].mxu0
        %v525 = vadd.f32 0.0, %v524
        %v526 = vpop.f32.mrb[0].mxu0
        %v527 = vpop.f32.mrb[0].mxu0
        %v528 = vpop.f32.mrb[0].mxu0
        %529 = vdwg.mxu0
        %530 = vst [vmem:[%s352] sm:$0xff] %v525
        %p531 = scmp.lt.s32.totalorder %s17, 1
        %s532 = scalar_select %p531, %s17, 1
        %p533 = scmp.lt.s32.totalorder %s18, 2
        %s534 = scalar_select %p533, %s18, 2
        %s535 = smul.addr %s532, 3
        %s536 = sadd.s32 %s534, %s535
        %s537 = smul.addr %s536, 8
        %s538 = scalar_lea.vmem %s2, %s537
        // Predicated region
        $region70: #{agg_head_forward.4} parent=64 // pred_check
          %p539 = pneg %p99
        $region71: #{agg_head_forward.4} parent=64 // pred_check_branch
          %541 = sbr.rel (%p539) target = $region73
        $region72: #{agg_head_forward.4} parent=64 // pred_region
          _
        $region73: #{agg_head_forward.4} parent=64 // pred_fallthru
          _
      $region65: #{agg_head_forward.4} parent=5 // pred_fallthru
        _
      %p542 = scmp.le.s32.totalorder 2, %s8
      // Predicated region
      $region74: #{agg_head_forward.4} parent=5 // pred_check
        %p543 = pneg %p542
      $region75: #{agg_head_forward.4} parent=5 // pred_check_branch
        %545 = sbr.rel (%p543) target = $region77
      $region76: #{agg_head_forward.4} parent=5 // pred_region
        %s546 = ssub.s32 %s8, 2
        // Predicated region
        $region78: #{agg_head_forward.4} parent=76 // pred_check
          %p547 = pneg %p105
        $region79: #{agg_head_forward.4} parent=76 // pred_check_branch
          %549 = sbr.rel (%p547) target = $region81
        $region80: #{agg_head_forward.4} parent=76 // pred_region
          %p550 = scmp.lt.s32.totalorder %s19, 1
          %s551 = scalar_select %p550, %s19, 1
          %p552 = scmp.lt.s32.totalorder %s20, 2
          %s553 = scalar_select %p552, %s20, 2
          %s554 = smul.addr %s551, 3
          %s555 = sadd.s32 %s553, %s554
          %s556 = smul.addr %s555, 8
          %s557 = scalar_lea.vmem %s2, %s556
        $region81: #{agg_head_forward.4} parent=76 // pred_fallthru
          _
      $region77: #{agg_head_forward.4} parent=5 // pred_fallthru
        _
    $region6: #{agg_head_forward.4} parent=1 // loop_footer
      %s12 = sadd.s32 1, %s8
    $region7: #{agg_head_forward.4} parent=1 // loop_footer_branch
      %7 = sbr.rel target = $region3
    $region8: #{agg_head_forward.4} parent=1 // loop_exit
      _

// kernel: agg_head_forward.3
$region0: #{agg_head_forward.3}
  #allocation0 [shape = 'u32[]', space=smem, size = 0x4, offset = 0x4, fixed_abs, tag = 'smem constant byte address 0x4 - core index']
  #allocation1 [shape = 'u32[144,128]{1,0:T(1,128)}', space=vmem, size = 0x12000, scoped, tag = 'internal scratch']
  #allocation2 [shape = 'f32[8,128]{1,0:T(8,128)}', space=vmem, size = 0x1000, scoped, tag = 'scratch operand']
  #allocation3 [shape = 'f32[8,128]{1,0:T(8,128)}', space=vmem, size = 0x1000, scoped, tag = 'scratch operand']
  %s0 = inlined_call_operand.vmem [shape: f32[8,256,256], index: 0, kind: input, shape index: {}]
  %s1 = inlined_call_operand.vmem [shape: f32[8,256,256], index: 1, kind: input, shape index: {}]
  %s2 = inlined_call_operand.vmem [shape: f32[1,256], index: 2, kind: input, shape index: {}]
  %s3 = inlined_call_operand.vmem [shape: f32[1,256], index: 3, kind: input, shape index: {}]
  %s4 = inlined_call_operand.vmem [shape: f32[1,256], index: 4, kind: input, shape index: {}]
  %s5 = inlined_call_operand.vmem [shape: f32[1,256], index: 5, kind: input, shape index: {}]
  %s6 = inlined_call_operand.hbm [shape: f32[8,256], index: 6, kind: output, shape index: {0}]
  %s7 = inlined_call_operand.vmem [shape: bf16[2,8,256], index: 7, kind: output, shape index: {1}]
  %8 = xla_tuple %s6, %s7
  %s9 = sld [smem:[#allocation0]]
  $region186: #{agg_head_forward.3} parent=0
    _
  %s11 = ssub.s32 1, %s9
  %s12 = scalar_select 0, %s11, %s9
  $region1: #{agg_head_forward.3} parent=0
    #allocation4 [shape = 'u8[1048576]{0}', space=vmem, size = 0x100000, scoped, tag = 'input window, operand 0']
    #allocation5 [shape = 'u8[1048576]{0}', space=vmem, size = 0x100000, scoped, tag = 'input window, operand 1']
    #allocation6 [shape = 'u8[8192]{0}', space=vmem, size = 0x2000, scoped, tag = 'output window, operand 0']
    #allocation7 [shape = 's32[2]{0}', space=sflag, size = 0x8, scoped, tag = 'scoped memory for agg_head_forward.3']
    #allocation8 [shape = 'u8[8192]{0}', space=vmem, size = 0x2000, scoped, tag = 'output window, operand 1']
    %13 = vsyncpa [#allocation7], 0
    %s14 = scalar_lea.sflag [#allocation7], 1
    %15 = vsyncpa %s14, 0
    loop: start=0, step=1, limit=6
    $region2: #{agg_head_forward.3} parent=1 // loop_pre_header
      _
    $region3: #{agg_head_forward.3} parent=1 // loop_header
      %s17 = sphi 0, %s21
      %p18 = scmp.ge.s32.totalorder %s17, 6
      %s24 = sphi 0, %s36
      %s25 = sphi 0, %s32
      %s26 = sphi 0, %s24
      %s27 = sphi 0, %s25
      %s28 = sphi 0, %s26
      %s29 = sphi 0, %s27
      %s41 = sphi 0, %s43
      %s44 = sphi 0, %s41
      %s45 = sphi 0, %s44
      %s61 = sphi 0, %s45
      %s69 = sphi 0, %s71
      %s72 = sphi 0, %s69
      %s73 = sphi 0, %s72
      %s89 = sphi 0, %s73
      %s95 = sphi 0, %s97
      %s98 = sphi 0, %s95
      %s99 = sphi 0, %s98
      %s115 = sphi 0, %s99
      %s121 = sphi 0, %s123
      %s124 = sphi 0, %s121
      %s125 = sphi 0, %s124
      %s141 = sphi 0, %s125
      %s147 = sphi 0, %s149
      %s150 = sphi 0, %s147
      %s151 = sphi 0, %s150
      %s167 = sphi 0, %s151
      %s173 = sphi 0, %s175
      %s176 = sphi 0, %s173
      %s177 = sphi 0, %s176
      %s193 = sphi 0, %s177
      %s199 = sphi 0, %s201
      %s202 = sphi 0, %s199
      %s203 = sphi 0, %s202
      %s219 = sphi 0, %s203
      %s225 = sphi 0, %s227
      %s228 = sphi 0, %s225
      %s229 = sphi 0, %s228
      %s245 = sphi 0, %s229
    $region4: #{agg_head_forward.3} parent=1 // loop_header_branch
      %20 = sbr.rel (%p18) target = $region8
    $region5: #{agg_head_forward.3} parent=1 // loop_body
      %s22 = ssub.s32 %s17, 1
      %s23 = ssub.s32 %s17, 2
      %s30 = sadd.s32 1, %s25
      %p31 = scmp.ge.s32.totalorder %s30, 2
      %s32 = scalar_select %p31, 0, %s30
      %s33 = sadd.s32 1, %s24
      %s34 = scalar_select %p31, %s33, %s24
      %p35 = scmp.ge.s32.totalorder %s34, 2
      %s36 = scalar_select %p35, 0, %s34
      %s37 = ssub.s32 %s24, %s36
      %s38 = ssub.s32 %s25, %s32
      %s39 = sor.u32 %s37, %s38
      %p40 = scmp.eq.s32.totalorder %s39, 0
      %s42 = sadd.s32 %s41, 1
      %s43 = scalar_select %p40, %s41, %s42
      %p46 = pneg %p40
      %p47 = scmp.eq.s32.totalorder %s17, 3
      %p48 = por %p46, %p47
      %p49 = scmp.ne.s32.totalorder %s41, %s44
      %p50 = scmp.eq.s32.totalorder %s17, 0
      %p51 = por %p49, %p50
      %p52 = scmp.ne.s32.totalorder %s41, %s44
      %p53 = scmp.eq.s32.totalorder %s22, 3
      %p54 = por %p52, %p53
      %p55 = scmp.ne.s32.totalorder %s44, %s45
      %p56 = scmp.eq.s32.totalorder %s22, 0
      %p57 = por %p55, %p56
      %p58 = scmp.ne.s32.totalorder %s44, %s45
      %p59 = scmp.eq.s32.totalorder %s23, 3
      %p60 = por %p58, %p59
      %p62 = scmp.ne.s32.totalorder %s45, %s61
      %p63 = scmp.eq.s32.totalorder %s23, 0
      %p64 = por %p62, %p63
      %s65 = ssub.s32 %s24, %s36
      %s66 = ssub.s32 %s25, %s32
      %s67 = sor.u32 %s65, %s66
      %p68 = scmp.eq.s32.totalorder %s67, 0
      %s70 = sadd.s32 %s69, 1
      %s71 = scalar_select %p68, %s69, %s70
      %p74 = pneg %p68
      %p75 = scmp.eq.s32.totalorder %s17, 3
      %p76 = por %p74, %p75
      %p77 = scmp.ne.s32.totalorder %s69, %s72
      %p78 = scmp.eq.s32.totalorder %s17, 0
      %p79 = por %p77, %p78
      %p80 = scmp.ne.s32.totalorder %s69, %s72
      %p81 = scmp.eq.s32.totalorder %s22, 3
      %p82 = por %p80, %p81
      %p83 = scmp.ne.s32.totalorder %s72, %s73
      %p84 = scmp.eq.s32.totalorder %s22, 0
      %p85 = por %p83, %p84
      %p86 = scmp.ne.s32.totalorder %s72, %s73
      %p87 = scmp.eq.s32.totalorder %s23, 3
      %p88 = por %p86, %p87
      %p90 = scmp.ne.s32.totalorder %s73, %s89
      %p91 = scmp.eq.s32.totalorder %s23, 0
      %p92 = por %p90, %p91
      %s93 = ssub.s32 %s24, %s36
      %p94 = scmp.eq.s32.totalorder %s93, 0
      %s96 = sadd.s32 %s95, 1
      %s97 = scalar_select %p94, %s95, %s96
      %p100 = pneg %p94
      %p101 = scmp.eq.s32.totalorder %s17, 3
      %p102 = por %p100, %p101
      %p103 = scmp.ne.s32.totalorder %s95, %s98
      %p104 = scmp.eq.s32.totalorder %s17, 0
      %p105 = por %p103, %p104
      %p106 = scmp.ne.s32.totalorder %s95, %s98
      %p107 = scmp.eq.s32.totalorder %s22, 3
      %p108 = por %p106, %p107
      %p109 = scmp.ne.s32.totalorder %s98, %s99
      %p110 = scmp.eq.s32.totalorder %s22, 0
      %p111 = por %p109, %p110
      %p112 = scmp.ne.s32.totalorder %s98, %s99
      %p113 = scmp.eq.s32.totalorder %s23, 3
      %p114 = por %p112, %p113
      %p116 = scmp.ne.s32.totalorder %s99, %s115
      %p117 = scmp.eq.s32.totalorder %s23, 0
      %p118 = por %p116, %p117
      %s119 = ssub.s32 %s24, %s36
      %p120 = scmp.eq.s32.totalorder %s119, 0
      %s122 = sadd.s32 %s121, 1
      %s123 = scalar_select %p120, %s121, %s122
      %p126 = pneg %p120
      %p127 = scmp.eq.s32.totalorder %s17, 3
      %p128 = por %p126, %p127
      %p129 = scmp.ne.s32.totalorder %s121, %s124
      %p130 = scmp.eq.s32.totalorder %s17, 0
      %p131 = por %p129, %p130
      %p132 = scmp.ne.s32.totalorder %s121, %s124
      %p133 = scmp.eq.s32.totalorder %s22, 3
      %p134 = por %p132, %p133
      %p135 = scmp.ne.s32.totalorder %s124, %s125
      %p136 = scmp.eq.s32.totalorder %s22, 0
      %p137 = por %p135, %p136
      %p138 = scmp.ne.s32.totalorder %s124, %s125
      %p139 = scmp.eq.s32.totalorder %s23, 3
      %p140 = por %p138, %p139
      %p142 = scmp.ne.s32.totalorder %s125, %s141
      %p143 = scmp.eq.s32.totalorder %s23, 0
      %p144 = por %p142, %p143
      %s145 = ssub.s32 %s24, %s36
      %p146 = scmp.eq.s32.totalorder %s145, 0
      %s148 = sadd.s32 %s147, 1
      %s149 = scalar_select %p146, %s147, %s148
      %p152 = pneg %p146
      %p153 = scmp.eq.s32.totalorder %s17, 3
      %p154 = por %p152, %p153
      %p155 = scmp.ne.s32.totalorder %s147, %s150
      %p156 = scmp.eq.s32.totalorder %s17, 0
      %p157 = por %p155, %p156
      %p158 = scmp.ne.s32.totalorder %s147, %s150
      %p159 = scmp.eq.s32.totalorder %s22, 3
      %p160 = por %p158, %p159
      %p161 = scmp.ne.s32.totalorder %s150, %s151
      %p162 = scmp.eq.s32.totalorder %s22, 0
      %p163 = por %p161, %p162
      %p164 = scmp.ne.s32.totalorder %s150, %s151
      %p165 = scmp.eq.s32.totalorder %s23, 3
      %p166 = por %p164, %p165
      %p168 = scmp.ne.s32.totalorder %s151, %s167
      %p169 = scmp.eq.s32.totalorder %s23, 0
      %p170 = por %p168, %p169
      %s171 = ssub.s32 %s24, %s36
      %p172 = scmp.eq.s32.totalorder %s171, 0
      %s174 = sadd.s32 %s173, 1
      %s175 = scalar_select %p172, %s173, %s174
      %p178 = pneg %p172
      %p179 = scmp.eq.s32.totalorder %s17, 3
      %p180 = por %p178, %p179
      %p181 = scmp.ne.s32.totalorder %s173, %s176
      %p182 = scmp.eq.s32.totalorder %s17, 0
      %p183 = por %p181, %p182
      %p184 = scmp.ne.s32.totalorder %s173, %s176
      %p185 = scmp.eq.s32.totalorder %s22, 3
      %p186 = por %p184, %p185
      %p187 = scmp.ne.s32.totalorder %s176, %s177
      %p188 = scmp.eq.s32.totalorder %s22, 0
      %p189 = por %p187, %p188
      %p190 = scmp.ne.s32.totalorder %s176, %s177
      %p191 = scmp.eq.s32.totalorder %s23, 3
      %p192 = por %p190, %p191
      %p194 = scmp.ne.s32.totalorder %s177, %s193
      %p195 = scmp.eq.s32.totalorder %s23, 0
      %p196 = por %p194, %p195
      %s197 = ssub.s32 %s24, %s36
      %p198 = scmp.eq.s32.totalorder %s197, 0
      %s200 = sadd.s32 %s199, 1
      %s201 = scalar_select %p198, %s199, %s200
      %p204 = pneg %p198
      %p205 = scmp.eq.s32.totalorder %s17, 3
      %p206 = por %p204, %p205
      %p207 = scmp.ne.s32.totalorder %s199, %s202
      %p208 = scmp.eq.s32.totalorder %s17, 0
      %p209 = por %p207, %p208
      %p210 = scmp.ne.s32.totalorder %s199, %s202
      %p211 = scmp.eq.s32.totalorder %s22, 3
      %p212 = por %p210, %p211
      %p213 = scmp.ne.s32.totalorder %s202, %s203
      %p214 = scmp.eq.s32.totalorder %s22, 0
      %p215 = por %p213, %p214
      %p216 = scmp.ne.s32.totalorder %s202, %s203
      %p217 = scmp.eq.s32.totalorder %s23, 3
      %p218 = por %p216, %p217
      %p220 = scmp.ne.s32.totalorder %s203, %s219
      %p221 = scmp.eq.s32.totalorder %s23, 0
      %p222 = por %p220, %p221
      %s223 = ssub.s32 %s24, %s36
      %p224 = scmp.eq.s32.totalorder %s223, 0
      %s226 = sadd.s32 %s225, 1
      %s227 = scalar_select %p224, %s225, %s226
      %p230 = pneg %p224
      %p231 = scmp.eq.s32.totalorder %s17, 3
      %p232 = por %p230, %p231
      %p233 = scmp.ne.s32.totalorder %s225, %s228
      %p234 = scmp.eq.s32.totalorder %s17, 0
      %p235 = por %p233, %p234
      %p236 = scmp.ne.s32.totalorder %s225, %s228
      %p237 = scmp.eq.s32.totalorder %s22, 3
      %p238 = por %p236, %p237
      %p239 = scmp.ne.s32.totalorder %s228, %s229
      %p240 = scmp.eq.s32.totalorder %s22, 0
      %p241 = por %p239, %p240
      %p242 = scmp.ne.s32.totalorder %s228, %s229
      %p243 = scmp.eq.s32.totalorder %s23, 3
      %p244 = por %p242, %p243
      %p246 = scmp.ne.s32.totalorder %s229, %s245
      %p247 = scmp.eq.s32.totalorder %s23, 0
      %p248 = por %p246, %p247
      %p249 = scmp.le.s32.totalorder 1, %s17
      %p250 = scmp.lt.s32.totalorder %s17, 5
      %p251 = pnand %p249, %p250
      %p252 = pneg %p251
      // Predicated region
      $region9: #{agg_head_forward.3} parent=5 // pred_check
        _
      $region10: #{agg_head_forward.3} parent=5 // pred_check_branch
        %254 = sbr.rel (%p251) target = $region12
      $region11: #{agg_head_forward.3} parent=5 // pred_region
        %s255 = ssub.s32 %s17, 1
      $region12: #{agg_head_forward.3} parent=5 // pred_fallthru
        _
      %p256 = scmp.lt.s32.totalorder %s17, 4
      // Predicated region
      $region13: #{agg_head_forward.3} parent=5 // pred_check
        %p257 = pneg %p256
      $region14: #{agg_head_forward.3} parent=5 // pred_check_branch
        %259 = sbr.rel (%p257) target = $region16
      $region15: #{agg_head_forward.3} parent=5 // pred_region
        // Predicated region
        $region17: #{agg_head_forward.3} parent=15 // pred_check
          %p260 = pneg %p51
        $region18: #{agg_head_forward.3} parent=15 // pred_check_branch
          %262 = sbr.rel (%p260) target = $region20
        $region19: #{agg_head_forward.3} parent=15 // pred_region
          %s263 = sand.u32 %s41, 1
          %s264 = sand.u32 %s41, 1
          %s265 = smul.addr %s264, 1024
          %s266 = scalar_lea.vmem [#allocation4], %s265
          %s267 = smul.u32 16, %s24
          %s268 = smul.addr %s267, 2
          %s269 = sadd.s32 %s25, %s268
          %s270 = smul.addr %s269, 8
          %s271 = scalar_lea.vmem %s0, %s270
          // Predicated region
          $region21: #{agg_head_forward.3} parent=19 // pred_check
            _
          $region22: #{agg_head_forward.3} parent=19 // pred_check_branch
            %273 = sbr.rel (0) target = $region24
          $region23: #{agg_head_forward.3} parent=19 // pred_region
            // Predicated region
            $region25: #{agg_head_forward.3} parent=23 // pred_check
              _
            $region26: #{agg_head_forward.3} parent=23 // pred_check_branch
              %275 = sbr.rel (0) target = $region28
            $region27: #{agg_head_forward.3} parent=23 // pred_region
              // Predicated region
              $region40: #{agg_head_forward.3} parent=27 // pred_check
                _
              $region41: #{agg_head_forward.3} parent=27 // pred_check_branch
                %544 = sbr.rel (0) target = $region43
              $region42: #{agg_head_forward.3} parent=27 // pred_region
                loop: start=0, step=1, limit=1
                $region44: #{agg_head_forward.3} parent=42 // loop_pre_header
                  _
                $region45: #{agg_head_forward.3} parent=42 // loop_header
                  %s546 = sphi 0, %s550
                  %p547 = scmp.ge.s32.totalorder %s546, 1
                  %s551 = sphi %s271, %s271
                  %s552 = sphi %s266, %s266
                $region46: #{agg_head_forward.3} parent=42 // loop_header_branch
                  %549 = sbr.rel (%p547) target = $region50
                $region47: #{agg_head_forward.3} parent=42 // loop_body
                  %v553 = vld [vmem:[%s551] sm:$0xff]
                  %554 = vst [vmem:[%s552] sm:$0xff] %v553
                  %v555 = vld [vmem:[%s551 + $0x10] sm:$0xff]
                  %556 = vst [vmem:[%s552 + $0x8] sm:$0xff] %v555
                  %v557 = vld [vmem:[%s551 + $0x20] sm:$0xff]
                  %558 = vst [vmem:[%s552 + $0x10] sm:$0xff] %v557
                  %v559 = vld [vmem:[%s551 + $0x30] sm:$0xff]
                  %560 = vst [vmem:[%s552 + $0x18] sm:$0xff] %v559
                  %v561 = vld [vmem:[%s551 + $0x40] sm:$0xff]
                  %562 = vst [vmem:[%s552 + $0x20] sm:$0xff] %v561
                  %v563 = vld [vmem:[%s551 + $0x50] sm:$0xff]
                  %564 = vst [vmem:[%s552 + $0x28] sm:$0xff] %v563
                  %v565 = vld [vmem:[%s551 + $0x60] sm:$0xff]
                  %566 = vst [vmem:[%s552 + $0x30] sm:$0xff] %v565
                  %v567 = vld [vmem:[%s551 + $0x70] sm:$0xff]
                  %568 = vst [vmem:[%s552 + $0x38] sm:$0xff] %v567
                  %v569 = vld [vmem:[%s551 + $0x80] sm:$0xff]
                  %570 = vst [vmem:[%s552 + $0x40] sm:$0xff] %v569
                  %v571 = vld [vmem:[%s551 + $0x90] sm:$0xff]
                  %572 = vst [vmem:[%s552 + $0x48] sm:$0xff] %v571
                  %v573 = vld [vmem:[%s551 + $0xa0] sm:$0xff]
                  %574 = vst [vmem:[%s552 + $0x50] sm:$0xff] %v573
                  %v575 = vld [vmem:[%s551 + $0xb0] sm:$0xff]
                  %576 = vst [vmem:[%s552 + $0x58] sm:$0xff] %v575
                  %v577 = vld [vmem:[%s551 + $0xc0] sm:$0xff]
                  %578 = vst [vmem:[%s552 + $0x60] sm:$0xff] %v577
                  %v579 = vld [vmem:[%s551 + $0xd0] sm:$0xff]
                  %580 = vst [vmem:[%s552 + $0x68] sm:$0xff] %v579
                  %v581 = vld [vmem:[%s551 + $0xe0] sm:$0xff]
                  %582 = vst [vmem:[%s552 + $0x70] sm:$0xff] %v581
                  %v583 = vld [vmem:[%s551 + $0xf0] sm:$0xff]
                  %584 = vst [vmem:[%s552 + $0x78] sm:$0xff] %v583
                  %v585 = vld [vmem:[%s551 + $0x200] sm:$0xff]
                  %586 = vst [vmem:[%s552 + $0x80] sm:$0xff] %v585
                  %v587 = vld [vmem:[%s551 + $0x210] sm:$0xff]
                  %588 = vst [vmem:[%s552 + $0x88] sm:$0xff] %v587
                  %v589 = vld [vmem:[%s551 + $0x220] sm:$0xff]
                  %590 = vst [vmem:[%s552 + $0x90] sm:$0xff] %v589
                  %v591 = vld [vmem:[%s551 + $0x230] sm:$0xff]
                  %592 = vst [vmem:[%s552 + $0x98] sm:$0xff] %v591
                  %v593 = vld [vmem:[%s551 + $0x240] sm:$0xff]
                  %594 = vst [vmem:[%s552 + $0xa0] sm:$0xff] %v593
                  %v595 = vld [vmem:[%s551 + $0x250] sm:$0xff]
                  %596 = vst [vmem:[%s552 + $0xa8] sm:$0xff] %v595
                  %v597 = vld [vmem:[%s551 + $0x260] sm:$0xff]
                  %598 = vst [vmem:[%s552 + $0xb0] sm:$0xff] %v597
                  %v599 = vld [vmem:[%s551 + $0x270] sm:$0xff]
                  %600 = vst [vmem:[%s552 + $0xb8] sm:$0xff] %v599
                  %v601 = vld [vmem:[%s551 + $0x280] sm:$0xff]
                  %602 = vst [vmem:[%s552 + $0xc0] sm:$0xff] %v601
                  %v603 = vld [vmem:[%s551 + $0x290] sm:$0xff]
                  %604 = vst [vmem:[%s552 + $0xc8] sm:$0xff] %v603
                  %v605 = vld [vmem:[%s551 + $0x2a0] sm:$0xff]
                  %606 = vst [vmem:[%s552 + $0xd0] sm:$0xff] %v605
                  %v607 = vld [vmem:[%s551 + $0x2b0] sm:$0xff]
                  %608 = vst [vmem:[%s552 + $0xd8] sm:$0xff] %v607
                  %v609 = vld [vmem:[%s551 + $0x2c0] sm:$0xff]
                  %610 = vst [vmem:[%s552 + $0xe0] sm:$0xff] %v609
                  %v611 = vld [vmem:[%s551 + $0x2d0] sm:$0xff]
                  %612 = vst [vmem:[%s552 + $0xe8] sm:$0xff] %v611
                  %v613 = vld [vmem:[%s551 + $0x2e0] sm:$0xff]
                  %614 = vst [vmem:[%s552 + $0xf0] sm:$0xff] %v613
                  %v615 = vld [vmem:[%s551 + $0x2f0] sm:$0xff]
                  %616 = vst [vmem:[%s552 + $0xf8] sm:$0xff] %v615
                  %v617 = vld [vmem:[%s551 + $0x400] sm:$0xff]
                  %618 = vst [vmem:[%s552 + $0x100] sm:$0xff] %v617
                  %v619 = vld [vmem:[%s551 + $0x410] sm:$0xff]
                  %620 = vst [vmem:[%s552 + $0x108] sm:$0xff] %v619
                  %v621 = vld [vmem:[%s551 + $0x420] sm:$0xff]
                  %622 = vst [vmem:[%s552 + $0x110] sm:$0xff] %v621
                  %v623 = vld [vmem:[%s551 + $0x430] sm:$0xff]
                  %624 = vst [vmem:[%s552 + $0x118] sm:$0xff] %v623
                  %v625 = vld [vmem:[%s551 + $0x440] sm:$0xff]
                  %626 = vst [vmem:[%s552 + $0x120] sm:$0xff] %v625
                  %v627 = vld [vmem:[%s551 + $0x450] sm:$0xff]
                  %628 = vst [vmem:[%s552 + $0x128] sm:$0xff] %v627
                  %v629 = vld [vmem:[%s551 + $0x460] sm:$0xff]
                  %630 = vst [vmem:[%s552 + $0x130] sm:$0xff] %v629
                  %v631 = vld [vmem:[%s551 + $0x470] sm:$0xff]
                  %632 = vst [vmem:[%s552 + $0x138] sm:$0xff] %v631
                  %v633 = vld [vmem:[%s551 + $0x480] sm:$0xff]
                  %634 = vst [vmem:[%s552 + $0x140] sm:$0xff] %v633
                  %v635 = vld [vmem:[%s551 + $0x490] sm:$0xff]
                  %636 = vst [vmem:[%s552 + $0x148] sm:$0xff] %v635
                  %v637 = vld [vmem:[%s551 + $0x4a0] sm:$0xff]
                  %638 = vst [vmem:[%s552 + $0x150] sm:$0xff] %v637
                  %v639 = vld [vmem:[%s551 + $0x4b0] sm:$0xff]
                  %640 = vst [vmem:[%s552 + $0x158] sm:$0xff] %v639
                  %v641 = vld [vmem:[%s551 + $0x4c0] sm:$0xff]
                  %642 = vst [vmem:[%s552 + $0x160] sm:$0xff] %v641
                  %v643 = vld [vmem:[%s551 + $0x4d0] sm:$0xff]
                  %644 = vst [vmem:[%s552 + $0x168] sm:$0xff] %v643
                  %v645 = vld [vmem:[%s551 + $0x4e0] sm:$0xff]
                  %646 = vst [vmem:[%s552 + $0x170] sm:$0xff] %v645
                  %v647 = vld [vmem:[%s551 + $0x4f0] sm:$0xff]
                  %648 = vst [vmem:[%s552 + $0x178] sm:$0xff] %v647
                  %v649 = vld [vmem:[%s551 + $0x600] sm:$0xff]
                  %650 = vst [vmem:[%s552 + $0x180] sm:$0xff] %v649
                  %v651 = vld [vmem:[%s551 + $0x610] sm:$0xff]
                  %652 = vst [vmem:[%s552 + $0x188] sm:$0xff] %v651
                  %v653 = vld [vmem:[%s551 + $0x620] sm:$0xff]
                  %654 = vst [vmem:[%s552 + $0x190] sm:$0xff] %v653
                  %v655 = vld [vmem:[%s551 + $0x630] sm:$0xff]
                  %656 = vst [vmem:[%s552 + $0x198] sm:$0xff] %v655
                  %v657 = vld [vmem:[%s551 + $0x640] sm:$0xff]
                  %658 = vst [vmem:[%s552 + $0x1a0] sm:$0xff] %v657
                  %v659 = vld [vmem:[%s551 + $0x650] sm:$0xff]
                  %660 = vst [vmem:[%s552 + $0x1a8] sm:$0xff] %v659
                  %v661 = vld [vmem:[%s551 + $0x660] sm:$0xff]
                  %662 = vst [vmem:[%s552 + $0x1b0] sm:$0xff] %v661
                  %v663 = vld [vmem:[%s551 + $0x670] sm:$0xff]
                  %664 = vst [vmem:[%s552 + $0x1b8] sm:$0xff] %v663
                  %v665 = vld [vmem:[%s551 + $0x680] sm:$0xff]
                  %666 = vst [vmem:[%s552 + $0x1c0] sm:$0xff] %v665
                  %v667 = vld [vmem:[%s551 + $0x690] sm:$0xff]
                  %668 = vst [vmem:[%s552 + $0x1c8] sm:$0xff] %v667
                  %v669 = vld [vmem:[%s551 + $0x6a0] sm:$0xff]
                  %670 = vst [vmem:[%s552 + $0x1d0] sm:$0xff] %v669
                  %v671 = vld [vmem:[%s551 + $0x6b0] sm:$0xff]
                  %672 = vst [vmem:[%s552 + $0x1d8] sm:$0xff] %v671
                  %v673 = vld [vmem:[%s551 + $0x6c0] sm:$0xff]
                  %674 = vst [vmem:[%s552 + $0x1e0] sm:$0xff] %v673
                  %v675 = vld [vmem:[%s551 + $0x6d0] sm:$0xff]
                  %676 = vst [vmem:[%s552 + $0x1e8] sm:$0xff] %v675
                  %v677 = vld [vmem:[%s551 + $0x6e0] sm:$0xff]
                  %678 = vst [vmem:[%s552 + $0x1f0] sm:$0xff] %v677
                  %v679 = vld [vmem:[%s551 + $0x6f0] sm:$0xff]
                  %680 = vst [vmem:[%s552 + $0x1f8] sm:$0xff] %v679
                  %v681 = vld [vmem:[%s551 + $0x800] sm:$0xff]
                  %682 = vst [vmem:[%s552 + $0x200] sm:$0xff] %v681
                  %v683 = vld [vmem:[%s551 + $0x810] sm:$0xff]
                  %684 = vst [vmem:[%s552 + $0x208] sm:$0xff] %v683
                  %v685 = vld [vmem:[%s551 + $0x820] sm:$0xff]
                  %686 = vst [vmem:[%s552 + $0x210] sm:$0xff] %v685
                  %v687 = vld [vmem:[%s551 + $0x830] sm:$0xff]
                  %688 = vst [vmem:[%s552 + $0x218] sm:$0xff] %v687
                  %v689 = vld [vmem:[%s551 + $0x840] sm:$0xff]
                  %690 = vst [vmem:[%s552 + $0x220] sm:$0xff] %v689
                  %v691 = vld [vmem:[%s551 + $0x850] sm:$0xff]
                  %692 = vst [vmem:[%s552 + $0x228] sm:$0xff] %v691
                  %v693 = vld [vmem:[%s551 + $0x860] sm:$0xff]
                  %694 = vst [vmem:[%s552 + $0x230] sm:$0xff] %v693
                  %v695 = vld [vmem:[%s551 + $0x870] sm:$0xff]
                  %696 = vst [vmem:[%s552 + $0x238] sm:$0xff] %v695
                  %v697 = vld [vmem:[%s551 + $0x880] sm:$0xff]
                  %698 = vst [vmem:[%s552 + $0x240] sm:$0xff] %v697
                  %v699 = vld [vmem:[%s551 + $0x890] sm:$0xff]
                  %700 = vst [vmem:[%s552 + $0x248] sm:$0xff] %v699
                  %v701 = vld [vmem:[%s551 + $0x8a0] sm:$0xff]
                  %702 = vst [vmem:[%s552 + $0x250] sm:$0xff] %v701
                  %v703 = vld [vmem:[%s551 + $0x8b0] sm:$0xff]
                  %704 = vst [vmem:[%s552 + $0x258] sm:$0xff] %v703
                  %v705 = vld [vmem:[%s551 + $0x8c0] sm:$0xff]
                  %706 = vst [vmem:[%s552 + $0x260] sm:$0xff] %v705
                  %v707 = vld [vmem:[%s551 + $0x8d0] sm:$0xff]
                  %708 = vst [vmem:[%s552 + $0x268] sm:$0xff] %v707
                  %v709 = vld [vmem:[%s551 + $0x8e0] sm:$0xff]
                  %710 = vst [vmem:[%s552 + $0x270] sm:$0xff] %v709
                  %v711 = vld [vmem:[%s551 + $0x8f0] sm:$0xff]
                  %712 = vst [vmem:[%s552 + $0x278] sm:$0xff] %v711
                  %v713 = vld [vmem:[%s551 + $0xa00] sm:$0xff]
                  %714 = vst [vmem:[%s552 + $0x280] sm:$0xff] %v713
                  %v715 = vld [vmem:[%s551 + $0xa10] sm:$0xff]
                  %716 = vst [vmem:[%s552 + $0x288] sm:$0xff] %v715
                  %v717 = vld [vmem:[%s551 + $0xa20] sm:$0xff]
                  %718 = vst [vmem:[%s552 + $0x290] sm:$0xff] %v717
                  %v719 = vld [vmem:[%s551 + $0xa30] sm:$0xff]
                  %720 = vst [vmem:[%s552 + $0x298] sm:$0xff] %v719
                  %v721 = vld [vmem:[%s551 + $0xa40] sm:$0xff]
                  %722 = vst [vmem:[%s552 + $0x2a0] sm:$0xff] %v721
                  %v723 = vld [vmem:[%s551 + $0xa50] sm:$0xff]
                  %724 = vst [vmem:[%s552 + $0x2a8] sm:$0xff] %v723
                  %v725 = vld [vmem:[%s551 + $0xa60] sm:$0xff]
                  %726 = vst [vmem:[%s552 + $0x2b0] sm:$0xff] %v725
                  %v727 = vld [vmem:[%s551 + $0xa70] sm:$0xff]
                  %728 = vst [vmem:[%s552 + $0x2b8] sm:$0xff] %v727
                  %v729 = vld [vmem:[%s551 + $0xa80] sm:$0xff]
                  %730 = vst [vmem:[%s552 + $0x2c0] sm:$0xff] %v729
                  %v731 = vld [vmem:[%s551 + $0xa90] sm:$0xff]
                  %732 = vst [vmem:[%s552 + $0x2c8] sm:$0xff] %v731
                  %v733 = vld [vmem:[%s551 + $0xaa0] sm:$0xff]
                  %734 = vst [vmem:[%s552 + $0x2d0] sm:$0xff] %v733
                  %v735 = vld [vmem:[%s551 + $0xab0] sm:$0xff]
                  %736 = vst [vmem:[%s552 + $0x2d8] sm:$0xff] %v735
                  %v737 = vld [vmem:[%s551 + $0xac0] sm:$0xff]
                  %738 = vst [vmem:[%s552 + $0x2e0] sm:$0xff] %v737
                  %v739 = vld [vmem:[%s551 + $0xad0] sm:$0xff]
                  %740 = vst [vmem:[%s552 + $0x2e8] sm:$0xff] %v739
                  %v741 = vld [vmem:[%s551 + $0xae0] sm:$0xff]
                  %742 = vst [vmem:[%s552 + $0x2f0] sm:$0xff] %v741
                  %v743 = vld [vmem:[%s551 + $0xaf0] sm:$0xff]
                  %744 = vst [vmem:[%s552 + $0x2f8] sm:$0xff] %v743
                  %v745 = vld [vmem:[%s551 + $0xc00] sm:$0xff]
                  %746 = vst [vmem:[%s552 + $0x300] sm:$0xff] %v745
                  %v747 = vld [vmem:[%s551 + $0xc10] sm:$0xff]
                  %748 = vst [vmem:[%s552 + $0x308] sm:$0xff] %v747
                  %v749 = vld [vmem:[%s551 + $0xc20] sm:$0xff]
                  %750 = vst [vmem:[%s552 + $0x310] sm:$0xff] %v749
                  %v751 = vld [vmem:[%s551 + $0xc30] sm:$0xff]
                  %752 = vst [vmem:[%s552 + $0x318] sm:$0xff] %v751
                  %v753 = vld [vmem:[%s551 + $0xc40] sm:$0xff]
                  %754 = vst [vmem:[%s552 + $0x320] sm:$0xff] %v753
                  %v755 = vld [vmem:[%s551 + $0xc50] sm:$0xff]
                  %756 = vst [vmem:[%s552 + $0x328] sm:$0xff] %v755
                  %v757 = vld [vmem:[%s551 + $0xc60] sm:$0xff]
                  %758 = vst [vmem:[%s552 + $0x330] sm:$0xff] %v757
                  %v759 = vld [vmem:[%s551 + $0xc70] sm:$0xff]
                  %760 = vst [vmem:[%s552 + $0x338] sm:$0xff] %v759
                  %v761 = vld [vmem:[%s551 + $0xc80] sm:$0xff]
                  %762 = vst [vmem:[%s552 + $0x340] sm:$0xff] %v761
                  %v763 = vld [vmem:[%s551 + $0xc90] sm:$0xff]
                  %764 = vst [vmem:[%s552 + $0x348] sm:$0xff] %v763
                  %v765 = vld [vmem:[%s551 + $0xca0] sm:$0xff]
                  %766 = vst [vmem:[%s552 + $0x350] sm:$0xff] %v765
                  %v767 = vld [vmem:[%s551 + $0xcb0] sm:$0xff]
                  %768 = vst [vmem:[%s552 + $0x358] sm:$0xff] %v767
                  %v769 = vld [vmem:[%s551 + $0xcc0] sm:$0xff]
                  %770 = vst [vmem:[%s552 + $0x360] sm:$0xff] %v769
                  %v771 = vld [vmem:[%s551 + $0xcd0] sm:$0xff]
                  %772 = vst [vmem:[%s552 + $0x368] sm:$0xff] %v771
                  %v773 = vld [vmem:[%s551 + $0xce0] sm:$0xff]
                  %774 = vst [vmem:[%s552 + $0x370] sm:$0xff] %v773
                  %v775 = vld [vmem:[%s551 + $0xcf0] sm:$0xff]
                  %776 = vst [vmem:[%s552 + $0x378] sm:$0xff] %v775
                  %v777 = vld [vmem:[%s551 + $0xe00] sm:$0xff]
                  %778 = vst [vmem:[%s552 + $0x380] sm:$0xff] %v777
                  %v779 = vld [vmem:[%s551 + $0xe10] sm:$0xff]
                  %780 = vst [vmem:[%s552 + $0x388] sm:$0xff] %v779
                  %v781 = vld [vmem:[%s551 + $0xe20] sm:$0xff]
                  %782 = vst [vmem:[%s552 + $0x390] sm:$0xff] %v781
                  %v783 = vld [vmem:[%s551 + $0xe30] sm:$0xff]
                  %784 = vst [vmem:[%s552 + $0x398] sm:$0xff] %v783
                  %v785 = vld [vmem:[%s551 + $0xe40] sm:$0xff]
                  %786 = vst [vmem:[%s552 + $0x3a0] sm:$0xff] %v785
                  %v787 = vld [vmem:[%s551 + $0xe50] sm:$0xff]
                  %788 = vst [vmem:[%s552 + $0x3a8] sm:$0xff] %v787
                  %v789 = vld [vmem:[%s551 + $0xe60] sm:$0xff]
                  %790 = vst [vmem:[%s552 + $0x3b0] sm:$0xff] %v789
                  %v791 = vld [vmem:[%s551 + $0xe70] sm:$0xff]
                  %792 = vst [vmem:[%s552 + $0x3b8] sm:$0xff] %v791
                  %v793 = vld [vmem:[%s551 + $0xe80] sm:$0xff]
                  %794 = vst [vmem:[%s552 + $0x3c0] sm:$0xff] %v793
                  %v795 = vld [vmem:[%s551 + $0xe90] sm:$0xff]
                  %796 = vst [vmem:[%s552 + $0x3c8] sm:$0xff] %v795
                  %v797 = vld [vmem:[%s551 + $0xea0] sm:$0xff]
                  %798 = vst [vmem:[%s552 + $0x3d0] sm:$0xff] %v797
                  %v799 = vld [vmem:[%s551 + $0xeb0] sm:$0xff]
                  %800 = vst [vmem:[%s552 + $0x3d8] sm:$0xff] %v799
                  %v801 = vld [vmem:[%s551 + $0xec0] sm:$0xff]
                  %802 = vst [vmem:[%s552 + $0x3e0] sm:$0xff] %v801
                  %v803 = vld [vmem:[%s551 + $0xed0] sm:$0xff]
                  %804 = vst [vmem:[%s552 + $0x3e8] sm:$0xff] %v803
                  %v805 = vld [vmem:[%s551 + $0xee0] sm:$0xff]
                  %806 = vst [vmem:[%s552 + $0x3f0] sm:$0xff] %v805
                  %v807 = vld [vmem:[%s551 + $0xef0] sm:$0xff]
                  %808 = vst [vmem:[%s552 + $0x3f8] sm:$0xff] %v807
                $region48: #{agg_head_forward.3} parent=42 // loop_footer
                  %s550 = sadd.s32 1, %s546
                $region49: #{agg_head_forward.3} parent=42 // loop_footer_branch
                  %545 = sbr.rel target = $region45
                $region50: #{agg_head_forward.3} parent=42 // loop_exit
                  _
              $region43: #{agg_head_forward.3} parent=27 // pred_fallthru
                _
              // Predicated region
              $region51: #{agg_head_forward.3} parent=27 // pred_check
                _
              $region52: #{agg_head_forward.3} parent=27 // pred_check_branch
                %810 = sbr.rel target = $region54
              $region53: #{agg_head_forward.3} parent=27 // pred_region
                _
              $region54: #{agg_head_forward.3} parent=27 // pred_fallthru
                _
            $region28: #{agg_head_forward.3} parent=23 // pred_fallthru
              _
            // Predicated region
            $region29: #{agg_head_forward.3} parent=23 // pred_check
              _
            $region30: #{agg_head_forward.3} parent=23 // pred_check_branch
              %277 = sbr.rel target = $region32
            $region31: #{agg_head_forward.3} parent=23 // pred_region
              loop: start=0, step=1, limit=1
              $region33: #{agg_head_forward.3} parent=31 // loop_pre_header
                _
              $region34: #{agg_head_forward.3} parent=31 // loop_header
                %s280 = sphi 0, %s284
                %p281 = scmp.ge.s32.totalorder %s280, 1
                %s285 = sphi %s271, %s271
                %s286 = sphi %s266, %s266
              $region35: #{agg_head_forward.3} parent=31 // loop_header_branch
                %283 = sbr.rel (%p281) target = $region39
              $region36: #{agg_head_forward.3} parent=31 // loop_body
                %v287 = vld [vmem:[%s285] sm:$0xff]
                %288 = vst [vmem:[%s286] sm:$0xff] %v287
                %v289 = vld [vmem:[%s285 + $0x10] sm:$0xff]
                %290 = vst [vmem:[%s286 + $0x8] sm:$0xff] %v289
                %v291 = vld [vmem:[%s285 + $0x20] sm:$0xff]
                %292 = vst [vmem:[%s286 + $0x10] sm:$0xff] %v291
                %v293 = vld [vmem:[%s285 + $0x30] sm:$0xff]
                %294 = vst [vmem:[%s286 + $0x18] sm:$0xff] %v293
                %v295 = vld [vmem:[%s285 + $0x40] sm:$0xff]
                %296 = vst [vmem:[%s286 + $0x20] sm:$0xff] %v295
                %v297 = vld [vmem:[%s285 + $0x50] sm:$0xff]
                %298 = vst [vmem:[%s286 + $0x28] sm:$0xff] %v297
                %v299 = vld [vmem:[%s285 + $0x60] sm:$0xff]
                %300 = vst [vmem:[%s286 + $0x30] sm:$0xff] %v299
                %v301 = vld [vmem:[%s285 + $0x70] sm:$0xff]
                %302 = vst [vmem:[%s286 + $0x38] sm:$0xff] %v301
                %v303 = vld [vmem:[%s285 + $0x80] sm:$0xff]
                %304 = vst [vmem:[%s286 + $0x40] sm:$0xff] %v303
                %v305 = vld [vmem:[%s285 + $0x90] sm:$0xff]
                %306 = vst [vmem:[%s286 + $0x48] sm:$0xff] %v305
                %v307 = vld [vmem:[%s285 + $0xa0] sm:$0xff]
                %308 = vst [vmem:[%s286 + $0x50] sm:$0xff] %v307
                %v309 = vld [vmem:[%s285 + $0xb0] sm:$0xff]
                %310 = vst [vmem:[%s286 + $0x58] sm:$0xff] %v309
                %v311 = vld [vmem:[%s285 + $0xc0] sm:$0xff]
                %312 = vst [vmem:[%s286 + $0x60] sm:$0xff] %v311
                %v313 = vld [vmem:[%s285 + $0xd0] sm:$0xff]
                %314 = vst [vmem:[%s286 + $0x68] sm:$0xff] %v313
                %v315 = vld [vmem:[%s285 + $0xe0] sm:$0xff]
                %316 = vst [vmem:[%s286 + $0x70] sm:$0xff] %v315
                %v317 = vld [vmem:[%s285 + $0xf0] sm:$0xff]
                %318 = vst [vmem:[%s286 + $0x78] sm:$0xff] %v317
                %v319 = vld [vmem:[%s285 + $0x200] sm:$0xff]
                %320 = vst [vmem:[%s286 + $0x80] sm:$0xff] %v319
                %v321 = vld [vmem:[%s285 + $0x210] sm:$0xff]
                %322 = vst [vmem:[%s286 + $0x88] sm:$0xff] %v321
                %v323 = vld [vmem:[%s285 + $0x220] sm:$0xff]
                %324 = vst [vmem:[%s286 + $0x90] sm:$0xff] %v323
                %v325 = vld [vmem:[%s285 + $0x230] sm:$0xff]
                %326 = vst [vmem:[%s286 + $0x98] sm:$0xff] %v325
                %v327 = vld [vmem:[%s285 + $0x240] sm:$0xff]
                %328 = vst [vmem:[%s286 + $0xa0] sm:$0xff] %v327
                %v329 = vld [vmem:[%s285 + $0x250] sm:$0xff]
                %330 = vst [vmem:[%s286 + $0xa8] sm:$0xff] %v329
                %v331 = vld [vmem:[%s285 + $0x260] sm:$0xff]
                %332 = vst [vmem:[%s286 + $0xb0] sm:$0xff] %v331
                %v333 = vld [vmem:[%s285 + $0x270] sm:$0xff]
                %334 = vst [vmem:[%s286 + $0xb8] sm:$0xff] %v333
                %v335 = vld [vmem:[%s285 + $0x280] sm:$0xff]
                %336 = vst [vmem:[%s286 + $0xc0] sm:$0xff] %v335
                %v337 = vld [vmem:[%s285 + $0x290] sm:$0xff]
                %338 = vst [vmem:[%s286 + $0xc8] sm:$0xff] %v337
                %v339 = vld [vmem:[%s285 + $0x2a0] sm:$0xff]
                %340 = vst [vmem:[%s286 + $0xd0] sm:$0xff] %v339
                %v341 = vld [vmem:[%s285 + $0x2b0] sm:$0xff]
                %342 = vst [vmem:[%s286 + $0xd8] sm:$0xff] %v341
                %v343 = vld [vmem:[%s285 + $0x2c0] sm:$0xff]
                %344 = vst [vmem:[%s286 + $0xe0] sm:$0xff] %v343
                %v345 = vld [vmem:[%s285 + $0x2d0] sm:$0xff]
                %346 = vst [vmem:[%s286 + $0xe8] sm:$0xff] %v345
                %v347 = vld [vmem:[%s285 + $0x2e0] sm:$0xff]
                %348 = vst [vmem:[%s286 + $0xf0] sm:$0xff] %v347
                %v349 = vld [vmem:[%s285 + $0x2f0] sm:$0xff]
                %350 = vst [vmem:[%s286 + $0xf8] sm:$0xff] %v349
                %v351 = vld [vmem:[%s285 + $0x400] sm:$0xff]
                %352 = vst [vmem:[%s286 + $0x100] sm:$0xff] %v351
                %v353 = vld [vmem:[%s285 + $0x410] sm:$0xff]
                %354 = vst [vmem:[%s286 + $0x108] sm:$0xff] %v353
                %v355 = vld [vmem:[%s285 + $0x420] sm:$0xff]
                %356 = vst [vmem:[%s286 + $0x110] sm:$0xff] %v355
                %v357 = vld [vmem:[%s285 + $0x430] sm:$0xff]
                %358 = vst [vmem:[%s286 + $0x118] sm:$0xff] %v357
                %v359 = vld [vmem:[%s285 + $0x440] sm:$0xff]
                %360 = vst [vmem:[%s286 + $0x120] sm:$0xff] %v359
                %v361 = vld [vmem:[%s285 + $0x450] sm:$0xff]
                %362 = vst [vmem:[%s286 + $0x128] sm:$0xff] %v361
                %v363 = vld [vmem:[%s285 + $0x460] sm:$0xff]
                %364 = vst [vmem:[%s286 + $0x130] sm:$0xff] %v363
                %v365 = vld [vmem:[%s285 + $0x470] sm:$0xff]
                %366 = vst [vmem:[%s286 + $0x138] sm:$0xff] %v365
                %v367 = vld [vmem:[%s285 + $0x480] sm:$0xff]
                %368 = vst [vmem:[%s286 + $0x140] sm:$0xff] %v367
                %v369 = vld [vmem:[%s285 + $0x490] sm:$0xff]
                %370 = vst [vmem:[%s286 + $0x148] sm:$0xff] %v369
                %v371 = vld [vmem:[%s285 + $0x4a0] sm:$0xff]
                %372 = vst [vmem:[%s286 + $0x150] sm:$0xff] %v371
                %v373 = vld [vmem:[%s285 + $0x4b0] sm:$0xff]
                %374 = vst [vmem:[%s286 + $0x158] sm:$0xff] %v373
                %v375 = vld [vmem:[%s285 + $0x4c0] sm:$0xff]
                %376 = vst [vmem:[%s286 + $0x160] sm:$0xff] %v375
                %v377 = vld [vmem:[%s285 + $0x4d0] sm:$0xff]
                %378 = vst [vmem:[%s286 + $0x168] sm:$0xff] %v377
                %v379 = vld [vmem:[%s285 + $0x4e0] sm:$0xff]
                %380 = vst [vmem:[%s286 + $0x170] sm:$0xff] %v379
                %v381 = vld [vmem:[%s285 + $0x4f0] sm:$0xff]
                %382 = vst [vmem:[%s286 + $0x178] sm:$0xff] %v381
                %v383 = vld [vmem:[%s285 + $0x600] sm:$0xff]
                %384 = vst [vmem:[%s286 + $0x180] sm:$0xff] %v383
                %v385 = vld [vmem:[%s285 + $0x610] sm:$0xff]
                %386 = vst [vmem:[%s286 + $0x188] sm:$0xff] %v385
                %v387 = vld [vmem:[%s285 + $0x620] sm:$0xff]
                %388 = vst [vmem:[%s286 + $0x190] sm:$0xff] %v387
                %v389 = vld [vmem:[%s285 + $0x630] sm:$0xff]
                %390 = vst [vmem:[%s286 + $0x198] sm:$0xff] %v389
                %v391 = vld [vmem:[%s285 + $0x640] sm:$0xff]
                %392 = vst [vmem:[%s286 + $0x1a0] sm:$0xff] %v391
                %v393 = vld [vmem:[%s285 + $0x650] sm:$0xff]
                %394 = vst [vmem:[%s286 + $0x1a8] sm:$0xff] %v393
                %v395 = vld [vmem:[%s285 + $0x660] sm:$0xff]
                %396 = vst [vmem:[%s286 + $0x1b0] sm:$0xff] %v395
                %v397 = vld [vmem:[%s285 + $0x670] sm:$0xff]
                %398 = vst [vmem:[%s286 + $0x1b8] sm:$0xff] %v397
                %v399 = vld [vmem:[%s285 + $0x680] sm:$0xff]
                %400 = vst [vmem:[%s286 + $0x1c0] sm:$0xff] %v399
                %v401 = vld [vmem:[%s285 + $0x690] sm:$0xff]
                %402 = vst [vmem:[%s286 + $0x1c8] sm:$0xff] %v401
                %v403 = vld [vmem:[%s285 + $0x6a0] sm:$0xff]
                %404 = vst [vmem:[%s286 + $0x1d0] sm:$0xff] %v403
                %v405 = vld [vmem:[%s285 + $0x6b0] sm:$0xff]
                %406 = vst [vmem:[%s286 + $0x1d8] sm:$0xff] %v405
                %v407 = vld [vmem:[%s285 + $0x6c0] sm:$0xff]
                %408 = vst [vmem:[%s286 + $0x1e0] sm:$0xff] %v407
                %v409 = vld [vmem:[%s285 + $0x6d0] sm:$0xff]
                %410 = vst [vmem:[%s286 + $0x1e8] sm:$0xff] %v409
                %v411 = vld [vmem:[%s285 + $0x6e0] sm:$0xff]
                %412 = vst [vmem:[%s286 + $0x1f0] sm:$0xff] %v411
                %v413 = vld [vmem:[%s285 + $0x6f0] sm:$0xff]
                %414 = vst [vmem:[%s286 + $0x1f8] sm:$0xff] %v413
                %v415 = vld [vmem:[%s285 + $0x800] sm:$0xff]
                %416 = vst [vmem:[%s286 + $0x200] sm:$0xff] %v415
                %v417 = vld [vmem:[%s285 + $0x810] sm:$0xff]
                %418 = vst [vmem:[%s286 + $0x208] sm:$0xff] %v417
                %v419 = vld [vmem:[%s285 + $0x820] sm:$0xff]
                %420 = vst [vmem:[%s286 + $0x210] sm:$0xff] %v419
                %v421 = vld [vmem:[%s285 + $0x830] sm:$0xff]
                %422 = vst [vmem:[%s286 + $0x218] sm:$0xff] %v421
                %v423 = vld [vmem:[%s285 + $0x840] sm:$0xff]
                %424 = vst [vmem:[%s286 + $0x220] sm:$0xff] %v423
                %v425 = vld [vmem:[%s285 + $0x850] sm:$0xff]
                %426 = vst [vmem:[%s286 + $0x228] sm:$0xff] %v425
                %v427 = vld [vmem:[%s285 + $0x860] sm:$0xff]
                %428 = vst [vmem:[%s286 + $0x230] sm:$0xff] %v427
                %v429 = vld [vmem:[%s285 + $0x870] sm:$0xff]
                %430 = vst [vmem:[%s286 + $0x238] sm:$0xff] %v429
                %v431 = vld [vmem:[%s285 + $0x880] sm:$0xff]
                %432 = vst [vmem:[%s286 + $0x240] sm:$0xff] %v431
                %v433 = vld [vmem:[%s285 + $0x890] sm:$0xff]
                %434 = vst [vmem:[%s286 + $0x248] sm:$0xff] %v433
                %v435 = vld [vmem:[%s285 + $0x8a0] sm:$0xff]
                %436 = vst [vmem:[%s286 + $0x250] sm:$0xff] %v435
                %v437 = vld [vmem:[%s285 + $0x8b0] sm:$0xff]
                %438 = vst [vmem:[%s286 + $0x258] sm:$0xff] %v437
                %v439 = vld [vmem:[%s285 + $0x8c0] sm:$0xff]
                %440 = vst [vmem:[%s286 + $0x260] sm:$0xff] %v439
                %v441 = vld [vmem:[%s285 + $0x8d0] sm:$0xff]
                %442 = vst [vmem:[%s286 + $0x268] sm:$0xff] %v441
                %v443 = vld [vmem:[%s285 + $0x8e0] sm:$0xff]
                %444 = vst [vmem:[%s286 + $0x270] sm:$0xff] %v443
                %v445 = vld [vmem:[%s285 + $0x8f0] sm:$0xff]
                %446 = vst [vmem:[%s286 + $0x278] sm:$0xff] %v445
                %v447 = vld [vmem:[%s285 + $0xa00] sm:$0xff]
                %448 = vst [vmem:[%s286 + $0x280] sm:$0xff] %v447
                %v449 = vld [vmem:[%s285 + $0xa10] sm:$0xff]
                %450 = vst [vmem:[%s286 + $0x288] sm:$0xff] %v449
                %v451 = vld [vmem:[%s285 + $0xa20] sm:$0xff]
                %452 = vst [vmem:[%s286 + $0x290] sm:$0xff] %v451
                %v453 = vld [vmem:[%s285 + $0xa30] sm:$0xff]
                %454 = vst [vmem:[%s286 + $0x298] sm:$0xff] %v453
                %v455 = vld [vmem:[%s285 + $0xa40] sm:$0xff]
                %456 = vst [vmem:[%s286 + $0x2a0] sm:$0xff] %v455
                %v457 = vld [vmem:[%s285 + $0xa50] sm:$0xff]
                %458 = vst [vmem:[%s286 + $0x2a8] sm:$0xff] %v457
                %v459 = vld [vmem:[%s285 + $0xa60] sm:$0xff]
                %460 = vst [vmem:[%s286 + $0x2b0] sm:$0xff] %v459
                %v461 = vld [vmem:[%s285 + $0xa70] sm:$0xff]
                %462 = vst [vmem:[%s286 + $0x2b8] sm:$0xff] %v461
                %v463 = vld [vmem:[%s285 + $0xa80] sm:$0xff]
                %464 = vst [vmem:[%s286 + $0x2c0] sm:$0xff] %v463
                %v465 = vld [vmem:[%s285 + $0xa90] sm:$0xff]
                %466 = vst [vmem:[%s286 + $0x2c8] sm:$0xff] %v465
                %v467 = vld [vmem:[%s285 + $0xaa0] sm:$0xff]
                %468 = vst [vmem:[%s286 + $0x2d0] sm:$0xff] %v467
                %v469 = vld [vmem:[%s285 + $0xab0] sm:$0xff]
                %470 = vst [vmem:[%s286 + $0x2d8] sm:$0xff] %v469
                %v471 = vld [vmem:[%s285 + $0xac0] sm:$0xff]
                %472 = vst [vmem:[%s286 + $0x2e0] sm:$0xff] %v471
                %v473 = vld [vmem:[%s285 + $0xad0] sm:$0xff]
                %474 = vst [vmem:[%s286 + $0x2e8] sm:$0xff] %v473
                %v475 = vld [vmem:[%s285 + $0xae0] sm:$0xff]
                %476 = vst [vmem:[%s286 + $0x2f0] sm:$0xff] %v475
                %v477 = vld [vmem:[%s285 + $0xaf0] sm:$0xff]
                %478 = vst [vmem:[%s286 + $0x2f8] sm:$0xff] %v477
                %v479 = vld [vmem:[%s285 + $0xc00] sm:$0xff]
                %480 = vst [vmem:[%s286 + $0x300] sm:$0xff] %v479
                %v481 = vld [vmem:[%s285 + $0xc10] sm:$0xff]
                %482 = vst [vmem:[%s286 + $0x308] sm:$0xff] %v481
                %v483 = vld [vmem:[%s285 + $0xc20] sm:$0xff]
                %484 = vst [vmem:[%s286 + $0x310] sm:$0xff] %v483
                %v485 = vld [vmem:[%s285 + $0xc30] sm:$0xff]
                %486 = vst [vmem:[%s286 + $0x318] sm:$0xff] %v485
                %v487 = vld [vmem:[%s285 + $0xc40] sm:$0xff]
                %488 = vst [vmem:[%s286 + $0x320] sm:$0xff] %v487
                %v489 = vld [vmem:[%s285 + $0xc50] sm:$0xff]
                %490 = vst [vmem:[%s286 + $0x328] sm:$0xff] %v489
                %v491 = vld [vmem:[%s285 + $0xc60] sm:$0xff]
                %492 = vst [vmem:[%s286 + $0x330] sm:$0xff] %v491
                %v493 = vld [vmem:[%s285 + $0xc70] sm:$0xff]
                %494 = vst [vmem:[%s286 + $0x338] sm:$0xff] %v493
                %v495 = vld [vmem:[%s285 + $0xc80] sm:$0xff]
                %496 = vst [vmem:[%s286 + $0x340] sm:$0xff] %v495
                %v497 = vld [vmem:[%s285 + $0xc90] sm:$0xff]
                %498 = vst [vmem:[%s286 + $0x348] sm:$0xff] %v497
                %v499 = vld [vmem:[%s285 + $0xca0] sm:$0xff]
                %500 = vst [vmem:[%s286 + $0x350] sm:$0xff] %v499
                %v501 = vld [vmem:[%s285 + $0xcb0] sm:$0xff]
                %502 = vst [vmem:[%s286 + $0x358] sm:$0xff] %v501
                %v503 = vld [vmem:[%s285 + $0xcc0] sm:$0xff]
                %504 = vst [vmem:[%s286 + $0x360] sm:$0xff] %v503
                %v505 = vld [vmem:[%s285 + $0xcd0] sm:$0xff]
                %506 = vst [vmem:[%s286 + $0x368] sm:$0xff] %v505
                %v507 = vld [vmem:[%s285 + $0xce0] sm:$0xff]
                %508 = vst [vmem:[%s286 + $0x370] sm:$0xff] %v507
                %v509 = vld [vmem:[%s285 + $0xcf0] sm:$0xff]
                %510 = vst [vmem:[%s286 + $0x378] sm:$0xff] %v509
                %v511 = vld [vmem:[%s285 + $0xe00] sm:$0xff]
                %512 = vst [vmem:[%s286 + $0x380] sm:$0xff] %v511
                %v513 = vld [vmem:[%s285 + $0xe10] sm:$0xff]
                %514 = vst [vmem:[%s286 + $0x388] sm:$0xff] %v513
                %v515 = vld [vmem:[%s285 + $0xe20] sm:$0xff]
                %516 = vst [vmem:[%s286 + $0x390] sm:$0xff] %v515
                %v517 = vld [vmem:[%s285 + $0xe30] sm:$0xff]
                %518 = vst [vmem:[%s286 + $0x398] sm:$0xff] %v517
                %v519 = vld [vmem:[%s285 + $0xe40] sm:$0xff]
                %520 = vst [vmem:[%s286 + $0x3a0] sm:$0xff] %v519
                %v521 = vld [vmem:[%s285 + $0xe50] sm:$0xff]
                %522 = vst [vmem:[%s286 + $0x3a8] sm:$0xff] %v521
                %v523 = vld [vmem:[%s285 + $0xe60] sm:$0xff]
                %524 = vst [vmem:[%s286 + $0x3b0] sm:$0xff] %v523
                %v525 = vld [vmem:[%s285 + $0xe70] sm:$0xff]
                %526 = vst [vmem:[%s286 + $0x3b8] sm:$0xff] %v525
                %v527 = vld [vmem:[%s285 + $0xe80] sm:$0xff]
                %528 = vst [vmem:[%s286 + $0x3c0] sm:$0xff] %v527
                %v529 = vld [vmem:[%s285 + $0xe90] sm:$0xff]
                %530 = vst [vmem:[%s286 + $0x3c8] sm:$0xff] %v529
                %v531 = vld [vmem:[%s285 + $0xea0] sm:$0xff]
                %532 = vst [vmem:[%s286 + $0x3d0] sm:$0xff] %v531
                %v533 = vld [vmem:[%s285 + $0xeb0] sm:$0xff]
                %534 = vst [vmem:[%s286 + $0x3d8] sm:$0xff] %v533
                %v535 = vld [vmem:[%s285 + $0xec0] sm:$0xff]
                %536 = vst [vmem:[%s286 + $0x3e0] sm:$0xff] %v535
                %v537 = vld [vmem:[%s285 + $0xed0] sm:$0xff]
                %538 = vst [vmem:[%s286 + $0x3e8] sm:$0xff] %v537
                %v539 = vld [vmem:[%s285 + $0xee0] sm:$0xff]
                %540 = vst [vmem:[%s286 + $0x3f0] sm:$0xff] %v539
                %v541 = vld [vmem:[%s285 + $0xef0] sm:$0xff]
                %542 = vst [vmem:[%s286 + $0x3f8] sm:$0xff] %v541
              $region37: #{agg_head_forward.3} parent=31 // loop_footer
                %s284 = sadd.s32 1, %s280
              $region38: #{agg_head_forward.3} parent=31 // loop_footer_branch
                %279 = sbr.rel target = $region34
              $region39: #{agg_head_forward.3} parent=31 // loop_exit
                _
            $region32: #{agg_head_forward.3} parent=23 // pred_fallthru
              _
          $region24: #{agg_head_forward.3} parent=19 // pred_fallthru
            _
          %811 = vnop
        $region20: #{agg_head_forward.3} parent=15 // pred_fallthru
          _
        // Predicated region
        $region55: #{agg_head_forward.3} parent=15 // pred_check
          %p812 = pneg %p79
        $region56: #{agg_head_forward.3} parent=15 // pred_check_branch
          %814 = sbr.rel (%p812) target = $region58
        $region57: #{agg_head_forward.3} parent=15 // pred_region
          %s815 = sand.u32 %s69, 1
          %s816 = sand.u32 %s69, 1
          %s817 = smul.addr %s816, 1024
          %s818 = scalar_lea.vmem [#allocation5], %s817
          %s819 = smul.u32 16, %s24
          %s820 = smul.addr %s819, 2
          %s821 = sadd.s32 %s25, %s820
          %s822 = smul.addr %s821, 8
          %s823 = scalar_lea.vmem %s1, %s822
          // Predicated region
          $region59: #{agg_head_forward.3} parent=57 // pred_check
            _
          $region60: #{agg_head_forward.3} parent=57 // pred_check_branch
            %825 = sbr.rel (0) target = $region62
          $region61: #{agg_head_forward.3} parent=57 // pred_region
            // Predicated region
            $region63: #{agg_head_forward.3} parent=61 // pred_check
              _
            $region64: #{agg_head_forward.3} parent=61 // pred_check_branch
              %827 = sbr.rel (0) target = $region66
            $region65: #{agg_head_forward.3} parent=61 // pred_region
              // Predicated region
              $region78: #{agg_head_forward.3} parent=65 // pred_check
                _
              $region79: #{agg_head_forward.3} parent=65 // pred_check_branch
                %1096 = sbr.rel (0) target = $region81
              $region80: #{agg_head_forward.3} parent=65 // pred_region
                loop: start=0, step=1, limit=1
                $region82: #{agg_head_forward.3} parent=80 // loop_pre_header
                  _
                $region83: #{agg_head_forward.3} parent=80 // loop_header
                  %s1098 = sphi 0, %s1102
                  %p1099 = scmp.ge.s32.totalorder %s1098, 1
                  %s1103 = sphi %s823, %s823
                  %s1104 = sphi %s818, %s818
                $region84: #{agg_head_forward.3} parent=80 // loop_header_branch
                  %1101 = sbr.rel (%p1099) target = $region88
                $region85: #{agg_head_forward.3} parent=80 // loop_body
                  %v1105 = vld [vmem:[%s1103] sm:$0xff]
                  %1106 = vst [vmem:[%s1104] sm:$0xff] %v1105
                  %v1107 = vld [vmem:[%s1103 + $0x10] sm:$0xff]
                  %1108 = vst [vmem:[%s1104 + $0x8] sm:$0xff] %v1107
                  %v1109 = vld [vmem:[%s1103 + $0x20] sm:$0xff]
                  %1110 = vst [vmem:[%s1104 + $0x10] sm:$0xff] %v1109
                  %v1111 = vld [vmem:[%s1103 + $0x30] sm:$0xff]
                  %1112 = vst [vmem:[%s1104 + $0x18] sm:$0xff] %v1111
                  %v1113 = vld [vmem:[%s1103 + $0x40] sm:$0xff]
                  %1114 = vst [vmem:[%s1104 + $0x20] sm:$0xff] %v1113
                  %v1115 = vld [vmem:[%s1103 + $0x50] sm:$0xff]
                  %1116 = vst [vmem:[%s1104 + $0x28] sm:$0xff] %v1115
                  %v1117 = vld [vmem:[%s1103 + $0x60] sm:$0xff]
                  %1118 = vst [vmem:[%s1104 + $0x30] sm:$0xff] %v1117
                  %v1119 = vld [vmem:[%s1103 + $0x70] sm:$0xff]
                  %1120 = vst [vmem:[%s1104 + $0x38] sm:$0xff] %v1119
                  %v1121 = vld [vmem:[%s1103 + $0x80] sm:$0xff]
                  %1122 = vst [vmem:[%s1104 + $0x40] sm:$0xff] %v1121
                  %v1123 = vld [vmem:[%s1103 + $0x90] sm:$0xff]
                  %1124 = vst [vmem:[%s1104 + $0x48] sm:$0xff] %v1123
                  %v1125 = vld [vmem:[%s1103 + $0xa0] sm:$0xff]
                  %1126 = vst [vmem:[%s1104 + $0x50] sm:$0xff] %v1125
                  %v1127 = vld [vmem:[%s1103 + $0xb0] sm:$0xff]
                  %1128 = vst [vmem:[%s1104 + $0x58] sm:$0xff] %v1127
                  %v1129 = vld [vmem:[%s1103 + $0xc0] sm:$0xff]
                  %1130 = vst [vmem:[%s1104 + $0x60] sm:$0xff] %v1129
                  %v1131 = vld [vmem:[%s1103 + $0xd0] sm:$0xff]
                  %1132 = vst [vmem:[%s1104 + $0x68] sm:$0xff] %v1131
                  %v1133 = vld [vmem:[%s1103 + $0xe0] sm:$0xff]
                  %1134 = vst [vmem:[%s1104 + $0x70] sm:$0xff] %v1133
                  %v1135 = vld [vmem:[%s1103 + $0xf0] sm:$0xff]
                  %1136 = vst [vmem:[%s1104 + $0x78] sm:$0xff] %v1135
                  %v1137 = vld [vmem:[%s1103 + $0x200] sm:$0xff]
                  %1138 = vst [vmem:[%s1104 + $0x80] sm:$0xff] %v1137
                  %v1139 = vld [vmem:[%s1103 + $0x210] sm:$0xff]
                  %1140 = vst [vmem:[%s1104 + $0x88] sm:$0xff] %v1139
                  %v1141 = vld [vmem:[%s1103 + $0x220] sm:$0xff]
                  %1142 = vst [vmem:[%s1104 + $0x90] sm:$0xff] %v1141
                  %v1143 = vld [vmem:[%s1103 + $0x230] sm:$0xff]
                  %1144 = vst [vmem:[%s1104 + $0x98] sm:$0xff] %v1143
                  %v1145 = vld [vmem:[%s1103 + $0x240] sm:$0xff]
                  %1146 = vst [vmem:[%s1104 + $0xa0] sm:$0xff] %v1145
                  %v1147 = vld [vmem:[%s1103 + $0x250] sm:$0xff]
                  %1148 = vst [vmem:[%s1104 + $0xa8] sm:$0xff] %v1147
                  %v1149 = vld [vmem:[%s1103 + $0x260] sm:$0xff]
                  %1150 = vst [vmem:[%s1104 + $0xb0] sm:$0xff] %v1149
                  %v1151 = vld [vmem:[%s1103 + $0x270] sm:$0xff]
                  %1152 = vst [vmem:[%s1104 + $0xb8] sm:$0xff] %v1151
                  %v1153 = vld [vmem:[%s1103 + $0x280] sm:$0xff]
                  %1154 = vst [vmem:[%s1104 + $0xc0] sm:$0xff] %v1153
                  %v1155 = vld [vmem:[%s1103 + $0x290] sm:$0xff]
                  %1156 = vst [vmem:[%s1104 + $0xc8] sm:$0xff] %v1155
                  %v1157 = vld [vmem:[%s1103 + $0x2a0] sm:$0xff]
                  %1158 = vst [vmem:[%s1104 + $0xd0] sm:$0xff] %v1157
                  %v1159 = vld [vmem:[%s1103 + $0x2b0] sm:$0xff]
                  %1160 = vst [vmem:[%s1104 + $0xd8] sm:$0xff] %v1159
                  %v1161 = vld [vmem:[%s1103 + $0x2c0] sm:$0xff]
                  %1162 = vst [vmem:[%s1104 + $0xe0] sm:$0xff] %v1161
                  %v1163 = vld [vmem:[%s1103 + $0x2d0] sm:$0xff]
                  %1164 = vst [vmem:[%s1104 + $0xe8] sm:$0xff] %v1163
                  %v1165 = vld [vmem:[%s1103 + $0x2e0] sm:$0xff]
                  %1166 = vst [vmem:[%s1104 + $0xf0] sm:$0xff] %v1165
                  %v1167 = vld [vmem:[%s1103 + $0x2f0] sm:$0xff]
                  %1168 = vst [vmem:[%s1104 + $0xf8] sm:$0xff] %v1167
                  %v1169 = vld [vmem:[%s1103 + $0x400] sm:$0xff]
                  %1170 = vst [vmem:[%s1104 + $0x100] sm:$0xff] %v1169
                  %v1171 = vld [vmem:[%s1103 + $0x410] sm:$0xff]
                  %1172 = vst [vmem:[%s1104 + $0x108] sm:$0xff] %v1171
                  %v1173 = vld [vmem:[%s1103 + $0x420] sm:$0xff]
                  %1174 = vst [vmem:[%s1104 + $0x110] sm:$0xff] %v1173
                  %v1175 = vld [vmem:[%s1103 + $0x430] sm:$0xff]
                  %1176 = vst [vmem:[%s1104 + $0x118] sm:$0xff] %v1175
                  %v1177 = vld [vmem:[%s1103 + $0x440] sm:$0xff]
                  %1178 = vst [vmem:[%s1104 + $0x120] sm:$0xff] %v1177
                  %v1179 = vld [vmem:[%s1103 + $0x450] sm:$0xff]
                  %1180 = vst [vmem:[%s1104 + $0x128] sm:$0xff] %v1179
                  %v1181 = vld [vmem:[%s1103 + $0x460] sm:$0xff]
                  %1182 = vst [vmem:[%s1104 + $0x130] sm:$0xff] %v1181
                  %v1183 = vld [vmem:[%s1103 + $0x470] sm:$0xff]
                  %1184 = vst [vmem:[%s1104 + $0x138] sm:$0xff] %v1183
                  %v1185 = vld [vmem:[%s1103 + $0x480] sm:$0xff]
                  %1186 = vst [vmem:[%s1104 + $0x140] sm:$0xff] %v1185
                  %v1187 = vld [vmem:[%s1103 + $0x490] sm:$0xff]
                  %1188 = vst [vmem:[%s1104 + $0x148] sm:$0xff] %v1187
                  %v1189 = vld [vmem:[%s1103 + $0x4a0] sm:$0xff]
                  %1190 = vst [vmem:[%s1104 + $0x150] sm:$0xff] %v1189
                  %v1191 = vld [vmem:[%s1103 + $0x4b0] sm:$0xff]
                  %1192 = vst [vmem:[%s1104 + $0x158] sm:$0xff] %v1191
                  %v1193 = vld [vmem:[%s1103 + $0x4c0] sm:$0xff]
                  %1194 = vst [vmem:[%s1104 + $0x160] sm:$0xff] %v1193
                  %v1195 = vld [vmem:[%s1103 + $0x4d0] sm:$0xff]
                  %1196 = vst [vmem:[%s1104 + $0x168] sm:$0xff] %v1195
                  %v1197 = vld [vmem:[%s1103 + $0x4e0] sm:$0xff]
                  %1198 = vst [vmem:[%s1104 + $0x170] sm:$0xff] %v1197
                  %v1199 = vld [vmem:[%s1103 + $0x4f0] sm:$0xff]
                  %1200 = vst [vmem:[%s1104 + $0x178] sm:$0xff] %v1199
                  %v1201 = vld [vmem:[%s1103 + $0x600] sm:$0xff]
                  %1202 = vst [vmem:[%s1104 + $0x180] sm:$0xff] %v1201
                  %v1203 = vld [vmem:[%s1103 + $0x610] sm:$0xff]
                  %1204 = vst [vmem:[%s1104 + $0x188] sm:$0xff] %v1203
                  %v1205 = vld [vmem:[%s1103 + $0x620] sm:$0xff]
                  %1206 = vst [vmem:[%s1104 + $0x190] sm:$0xff] %v1205
                  %v1207 = vld [vmem:[%s1103 + $0x630] sm:$0xff]
                  %1208 = vst [vmem:[%s1104 + $0x198] sm:$0xff] %v1207
                  %v1209 = vld [vmem:[%s1103 + $0x640] sm:$0xff]
                  %1210 = vst [vmem:[%s1104 + $0x1a0] sm:$0xff] %v1209
                  %v1211 = vld [vmem:[%s1103 + $0x650] sm:$0xff]
                  %1212 = vst [vmem:[%s1104 + $0x1a8] sm:$0xff] %v1211
                  %v1213 = vld [vmem:[%s1103 + $0x660] sm:$0xff]
                  %1214 = vst [vmem:[%s1104 + $0x1b0] sm:$0xff] %v1213
                  %v1215 = vld [vmem:[%s1103 + $0x670] sm:$0xff]
                  %1216 = vst [vmem:[%s1104 + $0x1b8] sm:$0xff] %v1215
                  %v1217 = vld [vmem:[%s1103 + $0x680] sm:$0xff]
                  %1218 = vst [vmem:[%s1104 + $0x1c0] sm:$0xff] %v1217
                  %v1219 = vld [vmem:[%s1103 + $0x690] sm:$0xff]
                  %1220 = vst [vmem:[%s1104 + $0x1c8] sm:$0xff] %v1219
                  %v1221 = vld [vmem:[%s1103 + $0x6a0] sm:$0xff]
                  %1222 = vst [vmem:[%s1104 + $0x1d0] sm:$0xff] %v1221
                  %v1223 = vld [vmem:[%s1103 + $0x6b0] sm:$0xff]
                  %1224 = vst [vmem:[%s1104 + $0x1d8] sm:$0xff] %v1223
                  %v1225 = vld [vmem:[%s1103 + $0x6c0] sm:$0xff]
                  %1226 = vst [vmem:[%s1104 + $0x1e0] sm:$0xff] %v1225
                  %v1227 = vld [vmem:[%s1103 + $0x6d0] sm:$0xff]
                  %1228 = vst [vmem:[%s1104 + $0x1e8] sm:$0xff] %v1227
                  %v1229 = vld [vmem:[%s1103 + $0x6e0] sm:$0xff]
                  %1230 = vst [vmem:[%s1104 + $0x1f0] sm:$0xff] %v1229
                  %v1231 = vld [vmem:[%s1103 + $0x6f0] sm:$0xff]
                  %1232 = vst [vmem:[%s1104 + $0x1f8] sm:$0xff] %v1231
                  %v1233 = vld [vmem:[%s1103 + $0x800] sm:$0xff]
                  %1234 = vst [vmem:[%s1104 + $0x200] sm:$0xff] %v1233
                  %v1235 = vld [vmem:[%s1103 + $0x810] sm:$0xff]
                  %1236 = vst [vmem:[%s1104 + $0x208] sm:$0xff] %v1235
                  %v1237 = vld [vmem:[%s1103 + $0x820] sm:$0xff]
                  %1238 = vst [vmem:[%s1104 + $0x210] sm:$0xff] %v1237
                  %v1239 = vld [vmem:[%s1103 + $0x830] sm:$0xff]
                  %1240 = vst [vmem:[%s1104 + $0x218] sm:$0xff] %v1239
                  %v1241 = vld [vmem:[%s1103 + $0x840] sm:$0xff]
                  %1242 = vst [vmem:[%s1104 + $0x220] sm:$0xff] %v1241
                  %v1243 = vld [vmem:[%s1103 + $0x850] sm:$0xff]
                  %1244 = vst [vmem:[%s1104 + $0x228] sm:$0xff] %v1243
                  %v1245 = vld [vmem:[%s1103 + $0x860] sm:$0xff]
                  %1246 = vst [vmem:[%s1104 + $0x230] sm:$0xff] %v1245
                  %v1247 = vld [vmem:[%s1103 + $0x870] sm:$0xff]
                  %1248 = vst [vmem:[%s1104 + $0x238] sm:$0xff] %v1247
                  %v1249 = vld [vmem:[%s1103 + $0x880] sm:$0xff]
                  %1250 = vst [vmem:[%s1104 + $0x240] sm:$0xff] %v1249
                  %v1251 = vld [vmem:[%s1103 + $0x890] sm:$0xff]
                  %1252 = vst [vmem:[%s1104 + $0x248] sm:$0xff] %v1251
                  %v1253 = vld [vmem:[%s1103 + $0x8a0] sm:$0xff]
                  %1254 = vst [vmem:[%s1104 + $0x250] sm:$0xff] %v1253
                  %v1255 = vld [vmem:[%s1103 + $0x8b0] sm:$0xff]
                  %1256 = vst [vmem:[%s1104 + $0x258] sm:$0xff] %v1255
                  %v1257 = vld [vmem:[%s1103 + $0x8c0] sm:$0xff]
                  %1258 = vst [vmem:[%s1104 + $0x260] sm:$0xff] %v1257
                  %v1259 = vld [vmem:[%s1103 + $0x8d0] sm:$0xff]
                  %1260 = vst [vmem:[%s1104 + $0x268] sm:$0xff] %v1259
                  %v1261 = vld [vmem:[%s1103 + $0x8e0] sm:$0xff]
                  %1262 = vst [vmem:[%s1104 + $0x270] sm:$0xff] %v1261
                  %v1263 = vld [vmem:[%s1103 + $0x8f0] sm:$0xff]
                  %1264 = vst [vmem:[%s1104 + $0x278] sm:$0xff] %v1263
                  %v1265 = vld [vmem:[%s1103 + $0xa00] sm:$0xff]
                  %1266 = vst [vmem:[%s1104 + $0x280] sm:$0xff] %v1265
                  %v1267 = vld [vmem:[%s1103 + $0xa10] sm:$0xff]
                  %1268 = vst [vmem:[%s1104 + $0x288] sm:$0xff] %v1267
                  %v1269 = vld [vmem:[%s1103 + $0xa20] sm:$0xff]
                  %1270 = vst [vmem:[%s1104 + $0x290] sm:$0xff] %v1269
                  %v1271 = vld [vmem:[%s1103 + $0xa30] sm:$0xff]
                  %1272 = vst [vmem:[%s1104 + $0x298] sm:$0xff] %v1271
                  %v1273 = vld [vmem:[%s1103 + $0xa40] sm:$0xff]
                  %1274 = vst [vmem:[%s1104 + $0x2a0] sm:$0xff] %v1273
                  %v1275 = vld [vmem:[%s1103 + $0xa50] sm:$0xff]
                  %1276 = vst [vmem:[%s1104 + $0x2a8] sm:$0xff] %v1275
                  %v1277 = vld [vmem:[%s1103 + $0xa60] sm:$0xff]
                  %1278 = vst [vmem:[%s1104 + $0x2b0] sm:$0xff] %v1277
                  %v1279 = vld [vmem:[%s1103 + $0xa70] sm:$0xff]
                  %1280 = vst [vmem:[%s1104 + $0x2b8] sm:$0xff] %v1279
                  %v1281 = vld [vmem:[%s1103 + $0xa80] sm:$0xff]
                  %1282 = vst [vmem:[%s1104 + $0x2c0] sm:$0xff] %v1281
                  %v1283 = vld [vmem:[%s1103 + $0xa90] sm:$0xff]
                  %1284 = vst [vmem:[%s1104 + $0x2c8] sm:$0xff] %v1283
                  %v1285 = vld [vmem:[%s1103 + $0xaa0] sm:$0xff]
                  %1286 = vst [vmem:[%s1104 + $0x2d0] sm:$0xff] %v1285
                  %v1287 = vld [vmem:[%s1103 + $0xab0] sm:$0xff]
                  %1288 = vst [vmem:[%s1104 + $0x2d8] sm:$0xff] %v1287
                  %v1289 = vld [vmem:[%s1103 + $0xac0] sm:$0xff]
                  %1290 = vst [vmem:[%s1104 + $0x2e0] sm:$0xff] %v1289
                  %v1291 = vld [vmem:[%s1103 + $0xad0] sm:$0xff]
                  %1292 = vst [vmem:[%s1104 + $0x2e8] sm:$0xff] %v1291
                  %v1293 = vld [vmem:[%s1103 + $0xae0] sm:$0xff]
                  %1294 = vst [vmem:[%s1104 + $0x2f0] sm:$0xff] %v1293
                  %v1295 = vld [vmem:[%s1103 + $0xaf0] sm:$0xff]
                  %1296 = vst [vmem:[%s1104 + $0x2f8] sm:$0xff] %v1295
                  %v1297 = vld [vmem:[%s1103 + $0xc00] sm:$0xff]
                  %1298 = vst [vmem:[%s1104 + $0x300] sm:$0xff] %v1297
                  %v1299 = vld [vmem:[%s1103 + $0xc10] sm:$0xff]
                  %1300 = vst [vmem:[%s1104 + $0x308] sm:$0xff] %v1299
                  %v1301 = vld [vmem:[%s1103 + $0xc20] sm:$0xff]
                  %1302 = vst [vmem:[%s1104 + $0x310] sm:$0xff] %v1301
                  %v1303 = vld [vmem:[%s1103 + $0xc30] sm:$0xff]
                  %1304 = vst [vmem:[%s1104 + $0x318] sm:$0xff] %v1303
                  %v1305 = vld [vmem:[%s1103 + $0xc40] sm:$0xff]
                  %1306 = vst [vmem:[%s1104 + $0x320] sm:$0xff] %v1305
                  %v1307 = vld [vmem:[%s1103 + $0xc50] sm:$0xff]
                  %1308 = vst [vmem:[%s1104 + $0x328] sm:$0xff] %v1307
                  %v1309 = vld [vmem:[%s1103 + $0xc60] sm:$0xff]
                  %1310 = vst [vmem:[%s1104 + $0x330] sm:$0xff] %v1309
                  %v1311 = vld [vmem:[%s1103 + $0xc70] sm:$0xff]
                  %1312 = vst [vmem:[%s1104 + $0x338] sm:$0xff] %v1311
                  %v1313 = vld [vmem:[%s1103 + $0xc80] sm:$0xff]
                  %1314 = vst [vmem:[%s1104 + $0x340] sm:$0xff] %v1313
                  %v1315 = vld [vmem:[%s1103 + $0xc90] sm:$0xff]
                  %1316 = vst [vmem:[%s1104 + $0x348] sm:$0xff] %v1315
                  %v1317 = vld [vmem:[%s1103 + $0xca0] sm:$0xff]
                  %1318 = vst [vmem:[%s1104 + $0x350] sm:$0xff] %v1317
                  %v1319 = vld [vmem:[%s1103 + $0xcb0] sm:$0xff]
                  %1320 = vst [vmem:[%s1104 + $0x358] sm:$0xff] %v1319
                  %v1321 = vld [vmem:[%s1103 + $0xcc0] sm:$0xff]
                  %1322 = vst [vmem:[%s1104 + $0x360] sm:$0xff] %v1321
                  %v1323 = vld [vmem:[%s1103 + $0xcd0] sm:$0xff]
                  %1324 = vst [vmem:[%s1104 + $0x368] sm:$0xff] %v1323
                  %v1325 = vld [vmem:[%s1103 + $0xce0] sm:$0xff]
                  %1326 = vst [vmem:[%s1104 + $0x370] sm:$0xff] %v1325
                  %v1327 = vld [vmem:[%s1103 + $0xcf0] sm:$0xff]
                  %1328 = vst [vmem:[%s1104 + $0x378] sm:$0xff] %v1327
                  %v1329 = vld [vmem:[%s1103 + $0xe00] sm:$0xff]
                  %1330 = vst [vmem:[%s1104 + $0x380] sm:$0xff] %v1329
                  %v1331 = vld [vmem:[%s1103 + $0xe10] sm:$0xff]
                  %1332 = vst [vmem:[%s1104 + $0x388] sm:$0xff] %v1331
                  %v1333 = vld [vmem:[%s1103 + $0xe20] sm:$0xff]
                  %1334 = vst [vmem:[%s1104 + $0x390] sm:$0xff] %v1333
                  %v1335 = vld [vmem:[%s1103 + $0xe30] sm:$0xff]
                  %1336 = vst [vmem:[%s1104 + $0x398] sm:$0xff] %v1335
                  %v1337 = vld [vmem:[%s1103 + $0xe40] sm:$0xff]
                  %1338 = vst [vmem:[%s1104 + $0x3a0] sm:$0xff] %v1337
                  %v1339 = vld [vmem:[%s1103 + $0xe50] sm:$0xff]
                  %1340 = vst [vmem:[%s1104 + $0x3a8] sm:$0xff] %v1339
                  %v1341 = vld [vmem:[%s1103 + $0xe60] sm:$0xff]
                  %1342 = vst [vmem:[%s1104 + $0x3b0] sm:$0xff] %v1341
                  %v1343 = vld [vmem:[%s1103 + $0xe70] sm:$0xff]
                  %1344 = vst [vmem:[%s1104 + $0x3b8] sm:$0xff] %v1343
                  %v1345 = vld [vmem:[%s1103 + $0xe80] sm:$0xff]
                  %1346 = vst [vmem:[%s1104 + $0x3c0] sm:$0xff] %v1345
                  %v1347 = vld [vmem:[%s1103 + $0xe90] sm:$0xff]
                  %1348 = vst [vmem:[%s1104 + $0x3c8] sm:$0xff] %v1347
                  %v1349 = vld [vmem:[%s1103 + $0xea0] sm:$0xff]
                  %1350 = vst [vmem:[%s1104 + $0x3d0] sm:$0xff] %v1349
                  %v1351 = vld [vmem:[%s1103 + $0xeb0] sm:$0xff]
                  %1352 = vst [vmem:[%s1104 + $0x3d8] sm:$0xff] %v1351
                  %v1353 = vld [vmem:[%s1103 + $0xec0] sm:$0xff]
                  %1354 = vst [vmem:[%s1104 + $0x3e0] sm:$0xff] %v1353
                  %v1355 = vld [vmem:[%s1103 + $0xed0] sm:$0xff]
                  %1356 = vst [vmem:[%s1104 + $0x3e8] sm:$0xff] %v1355
                  %v1357 = vld [vmem:[%s1103 + $0xee0] sm:$0xff]
                  %1358 = vst [vmem:[%s1104 + $0x3f0] sm:$0xff] %v1357
                  %v1359 = vld [vmem:[%s1103 + $0xef0] sm:$0xff]
                  %1360 = vst [vmem:[%s1104 + $0x3f8] sm:$0xff] %v1359
                $region86: #{agg_head_forward.3} parent=80 // loop_footer
                  %s1102 = sadd.s32 1, %s1098
                $region87: #{agg_head_forward.3} parent=80 // loop_footer_branch
                  %1097 = sbr.rel target = $region83
                $region88: #{agg_head_forward.3} parent=80 // loop_exit
                  _
              $region81: #{agg_head_forward.3} parent=65 // pred_fallthru
                _
              // Predicated region
              $region89: #{agg_head_forward.3} parent=65 // pred_check
                _
              $region90: #{agg_head_forward.3} parent=65 // pred_check_branch
                %1362 = sbr.rel target = $region92
              $region91: #{agg_head_forward.3} parent=65 // pred_region
                _
              $region92: #{agg_head_forward.3} parent=65 // pred_fallthru
                _
            $region66: #{agg_head_forward.3} parent=61 // pred_fallthru
              _
            // Predicated region
            $region67: #{agg_head_forward.3} parent=61 // pred_check
              _
            $region68: #{agg_head_forward.3} parent=61 // pred_check_branch
              %829 = sbr.rel target = $region70
            $region69: #{agg_head_forward.3} parent=61 // pred_region
              loop: start=0, step=1, limit=1
              $region71: #{agg_head_forward.3} parent=69 // loop_pre_header
                _
              $region72: #{agg_head_forward.3} parent=69 // loop_header
                %s832 = sphi 0, %s836
                %p833 = scmp.ge.s32.totalorder %s832, 1
                %s837 = sphi %s823, %s823
                %s838 = sphi %s818, %s818
              $region73: #{agg_head_forward.3} parent=69 // loop_header_branch
                %835 = sbr.rel (%p833) target = $region77
              $region74: #{agg_head_forward.3} parent=69 // loop_body
                %v839 = vld [vmem:[%s837] sm:$0xff]
                %840 = vst [vmem:[%s838] sm:$0xff] %v839
                %v841 = vld [vmem:[%s837 + $0x10] sm:$0xff]
                %842 = vst [vmem:[%s838 + $0x8] sm:$0xff] %v841
                %v843 = vld [vmem:[%s837 + $0x20] sm:$0xff]
                %844 = vst [vmem:[%s838 + $0x10] sm:$0xff] %v843
                %v845 = vld [vmem:[%s837 + $0x30] sm:$0xff]
                %846 = vst [vmem:[%s838 + $0x18] sm:$0xff] %v845
                %v847 = vld [vmem:[%s837 + $0x40] sm:$0xff]
                %848 = vst [vmem:[%s838 + $0x20] sm:$0xff] %v847
                %v849 = vld [vmem:[%s837 + $0x50] sm:$0xff]
                %850 = vst [vmem:[%s838 + $0x28] sm:$0xff] %v849
                %v851 = vld [vmem:[%s837 + $0x60] sm:$0xff]
                %852 = vst [vmem:[%s838 + $0x30] sm:$0xff] %v851
                %v853 = vld [vmem:[%s837 + $0x70] sm:$0xff]
                %854 = vst [vmem:[%s838 + $0x38] sm:$0xff] %v853
                %v855 = vld [vmem:[%s837 + $0x80] sm:$0xff]
                %856 = vst [vmem:[%s838 + $0x40] sm:$0xff] %v855
                %v857 = vld [vmem:[%s837 + $0x90] sm:$0xff]
                %858 = vst [vmem:[%s838 + $0x48] sm:$0xff] %v857
                %v859 = vld [vmem:[%s837 + $0xa0] sm:$0xff]
                %860 = vst [vmem:[%s838 + $0x50] sm:$0xff] %v859
                %v861 = vld [vmem:[%s837 + $0xb0] sm:$0xff]
                %862 = vst [vmem:[%s838 + $0x58] sm:$0xff] %v861
                %v863 = vld [vmem:[%s837 + $0xc0] sm:$0xff]
                %864 = vst [vmem:[%s838 + $0x60] sm:$0xff] %v863
                %v865 = vld [vmem:[%s837 + $0xd0] sm:$0xff]
                %866 = vst [vmem:[%s838 + $0x68] sm:$0xff] %v865
                %v867 = vld [vmem:[%s837 + $0xe0] sm:$0xff]
                %868 = vst [vmem:[%s838 + $0x70] sm:$0xff] %v867
                %v869 = vld [vmem:[%s837 + $0xf0] sm:$0xff]
                %870 = vst [vmem:[%s838 + $0x78] sm:$0xff] %v869
                %v871 = vld [vmem:[%s837 + $0x200] sm:$0xff]
                %872 = vst [vmem:[%s838 + $0x80] sm:$0xff] %v871
                %v873 = vld [vmem:[%s837 + $0x210] sm:$0xff]
                %874 = vst [vmem:[%s838 + $0x88] sm:$0xff] %v873
                %v875 = vld [vmem:[%s837 + $0x220] sm:$0xff]
                %876 = vst [vmem:[%s838 + $0x90] sm:$0xff] %v875
                %v877 = vld [vmem:[%s837 + $0x230] sm:$0xff]
                %878 = vst [vmem:[%s838 + $0x98] sm:$0xff] %v877
                %v879 = vld [vmem:[%s837 + $0x240] sm:$0xff]
                %880 = vst [vmem:[%s838 + $0xa0] sm:$0xff] %v879
                %v881 = vld [vmem:[%s837 + $0x250] sm:$0xff]
                %882 = vst [vmem:[%s838 + $0xa8] sm:$0xff] %v881
                %v883 = vld [vmem:[%s837 + $0x260] sm:$0xff]
                %884 = vst [vmem:[%s838 + $0xb0] sm:$0xff] %v883
                %v885 = vld [vmem:[%s837 + $0x270] sm:$0xff]
                %886 = vst [vmem:[%s838 + $0xb8] sm:$0xff] %v885
                %v887 = vld [vmem:[%s837 + $0x280] sm:$0xff]
                %888 = vst [vmem:[%s838 + $0xc0] sm:$0xff] %v887
                %v889 = vld [vmem:[%s837 + $0x290] sm:$0xff]
                %890 = vst [vmem:[%s838 + $0xc8] sm:$0xff] %v889
                %v891 = vld [vmem:[%s837 + $0x2a0] sm:$0xff]
                %892 = vst [vmem:[%s838 + $0xd0] sm:$0xff] %v891
                %v893 = vld [vmem:[%s837 + $0x2b0] sm:$0xff]
                %894 = vst [vmem:[%s838 + $0xd8] sm:$0xff] %v893
                %v895 = vld [vmem:[%s837 + $0x2c0] sm:$0xff]
                %896 = vst [vmem:[%s838 + $0xe0] sm:$0xff] %v895
                %v897 = vld [vmem:[%s837 + $0x2d0] sm:$0xff]
                %898 = vst [vmem:[%s838 + $0xe8] sm:$0xff] %v897
                %v899 = vld [vmem:[%s837 + $0x2e0] sm:$0xff]
                %900 = vst [vmem:[%s838 + $0xf0] sm:$0xff] %v899
                %v901 = vld [vmem:[%s837 + $0x2f0] sm:$0xff]
                %902 = vst [vmem:[%s838 + $0xf8] sm:$0xff] %v901
                %v903 = vld [vmem:[%s837 + $0x400] sm:$0xff]
                %904 = vst [vmem:[%s838 + $0x100] sm:$0xff] %v903
                %v905 = vld [vmem:[%s837 + $0x410] sm:$0xff]
                %906 = vst [vmem:[%s838 + $0x108] sm:$0xff] %v905
                %v907 = vld [vmem:[%s837 + $0x420] sm:$0xff]
                %908 = vst [vmem:[%s838 + $0x110] sm:$0xff] %v907
                %v909 = vld [vmem:[%s837 + $0x430] sm:$0xff]
                %910 = vst [vmem:[%s838 + $0x118] sm:$0xff] %v909
                %v911 = vld [vmem:[%s837 + $0x440] sm:$0xff]
                %912 = vst [vmem:[%s838 + $0x120] sm:$0xff] %v911
                %v913 = vld [vmem:[%s837 + $0x450] sm:$0xff]
                %914 = vst [vmem:[%s838 + $0x128] sm:$0xff] %v913
                %v915 = vld [vmem:[%s837 + $0x460] sm:$0xff]
                %916 = vst [vmem:[%s838 + $0x130] sm:$0xff] %v915
                %v917 = vld [vmem:[%s837 + $0x470] sm:$0xff]
                %918 = vst [vmem:[%s838 + $0x138] sm:$0xff] %v917
                %v919 = vld [vmem:[%s837 + $0x480] sm:$0xff]
                %920 = vst [vmem:[%s838 + $0x140] sm:$0xff] %v919
                %v921 = vld [vmem:[%s837 + $0x490] sm:$0xff]
                %922 = vst [vmem:[%s838 + $0x148] sm:$0xff] %v921
                %v923 = vld [vmem:[%s837 + $0x4a0] sm:$0xff]
                %924 = vst [vmem:[%s838 + $0x150] sm:$0xff] %v923
                %v925 = vld [vmem:[%s837 + $0x4b0] sm:$0xff]
                %926 = vst [vmem:[%s838 + $0x158] sm:$0xff] %v925
                %v927 = vld [vmem:[%s837 + $0x4c0] sm:$0xff]
                %928 = vst [vmem:[%s838 + $0x160] sm:$0xff] %v927
                %v929 = vld [vmem:[%s837 + $0x4d0] sm:$0xff]
                %930 = vst [vmem:[%s838 + $0x168] sm:$0xff] %v929
                %v931 = vld [vmem:[%s837 + $0x4e0] sm:$0xff]
                %932 = vst [vmem:[%s838 + $0x170] sm:$0xff] %v931
                %v933 = vld [vmem:[%s837 + $0x4f0] sm:$0xff]
                %934 = vst [vmem:[%s838 + $0x178] sm:$0xff] %v933
                %v935 = vld [vmem:[%s837 + $0x600] sm:$0xff]
                %936 = vst [vmem:[%s838 + $0x180] sm:$0xff] %v935
                %v937 = vld [vmem:[%s837 + $0x610] sm:$0xff]
                %938 = vst [vmem:[%s838 + $0x188] sm:$0xff] %v937
                %v939 = vld [vmem:[%s837 + $0x620] sm:$0xff]
                %940 = vst [vmem:[%s838 + $0x190] sm:$0xff] %v939
                %v941 = vld [vmem:[%s837 + $0x630] sm:$0xff]
                %942 = vst [vmem:[%s838 + $0x198] sm:$0xff] %v941
                %v943 = vld [vmem:[%s837 + $0x640] sm:$0xff]
                %944 = vst [vmem:[%s838 + $0x1a0] sm:$0xff] %v943
                %v945 = vld [vmem:[%s837 + $0x650] sm:$0xff]
                %946 = vst [vmem:[%s838 + $0x1a8] sm:$0xff] %v945
                %v947 = vld [vmem:[%s837 + $0x660] sm:$0xff]
                %948 = vst [vmem:[%s838 + $0x1b0] sm:$0xff] %v947
                %v949 = vld [vmem:[%s837 + $0x670] sm:$0xff]
                %950 = vst [vmem:[%s838 + $0x1b8] sm:$0xff] %v949
                %v951 = vld [vmem:[%s837 + $0x680] sm:$0xff]
                %952 = vst [vmem:[%s838 + $0x1c0] sm:$0xff] %v951
                %v953 = vld [vmem:[%s837 + $0x690] sm:$0xff]
                %954 = vst [vmem:[%s838 + $0x1c8] sm:$0xff] %v953
                %v955 = vld [vmem:[%s837 + $0x6a0] sm:$0xff]
                %956 = vst [vmem:[%s838 + $0x1d0] sm:$0xff] %v955
                %v957 = vld [vmem:[%s837 + $0x6b0] sm:$0xff]
                %958 = vst [vmem:[%s838 + $0x1d8] sm:$0xff] %v957
                %v959 = vld [vmem:[%s837 + $0x6c0] sm:$0xff]
                %960 = vst [vmem:[%s838 + $0x1e0] sm:$0xff] %v959
                %v961 = vld [vmem:[%s837 + $0x6d0] sm:$0xff]
                %962 = vst [vmem:[%s838 + $0x1e8] sm:$0xff] %v961
                %v963 = vld [vmem:[%s837 + $0x6e0] sm:$0xff]
                %964 = vst [vmem:[%s838 + $0x1f0] sm:$0xff] %v963
                %v965 = vld [vmem:[%s837 + $0x6f0] sm:$0xff]
                %966 = vst [vmem:[%s838 + $0x1f8] sm:$0xff] %v965
                %v967 = vld [vmem:[%s837 + $0x800] sm:$0xff]
                %968 = vst [vmem:[%s838 + $0x200] sm:$0xff] %v967
                %v969 = vld [vmem:[%s837 + $0x810] sm:$0xff]
                %970 = vst [vmem:[%s838 + $0x208] sm:$0xff] %v969
                %v971 = vld [vmem:[%s837 + $0x820] sm:$0xff]
                %972 = vst [vmem:[%s838 + $0x210] sm:$0xff] %v971
                %v973 = vld [vmem:[%s837 + $0x830] sm:$0xff]
                %974 = vst [vmem:[%s838 + $0x218] sm:$0xff] %v973
                %v975 = vld [vmem:[%s837 + $0x840] sm:$0xff]
                %976 = vst [vmem:[%s838 + $0x220] sm:$0xff] %v975
                %v977 = vld [vmem:[%s837 + $0x850] sm:$0xff]
                %978 = vst [vmem:[%s838 + $0x228] sm:$0xff] %v977
                %v979 = vld [vmem:[%s837 + $0x860] sm:$0xff]
                %980 = vst [vmem:[%s838 + $0x230] sm:$0xff] %v979
                %v981 = vld [vmem:[%s837 + $0x870] sm:$0xff]
                %982 = vst [vmem:[%s838 + $0x238] sm:$0xff] %v981
                %v983 = vld [vmem:[%s837 + $0x880] sm:$0xff]
                %984 = vst [vmem:[%s838 + $0x240] sm:$0xff] %v983
                %v985 = vld [vmem:[%s837 + $0x890] sm:$0xff]
                %986 = vst [vmem:[%s838 + $0x248] sm:$0xff] %v985
                %v987 = vld [vmem:[%s837 + $0x8a0] sm:$0xff]
                %988 = vst [vmem:[%s838 + $0x250] sm:$0xff] %v987
                %v989 = vld [vmem:[%s837 + $0x8b0] sm:$0xff]
                %990 = vst [vmem:[%s838 + $0x258] sm:$0xff] %v989
                %v991 = vld [vmem:[%s837 + $0x8c0] sm:$0xff]
                %992 = vst [vmem:[%s838 + $0x260] sm:$0xff] %v991
                %v993 = vld [vmem:[%s837 + $0x8d0] sm:$0xff]
                %994 = vst [vmem:[%s838 + $0x268] sm:$0xff] %v993
                %v995 = vld [vmem:[%s837 + $0x8e0] sm:$0xff]
                %996 = vst [vmem:[%s838 + $0x270] sm:$0xff] %v995
                %v997 = vld [vmem:[%s837 + $0x8f0] sm:$0xff]
                %998 = vst [vmem:[%s838 + $0x278] sm:$0xff] %v997
                %v999 = vld [vmem:[%s837 + $0xa00] sm:$0xff]
                %1000 = vst [vmem:[%s838 + $0x280] sm:$0xff] %v999
                %v1001 = vld [vmem:[%s837 + $0xa10] sm:$0xff]
                %1002 = vst [vmem:[%s838 + $0x288] sm:$0xff] %v1001
                %v1003 = vld [vmem:[%s837 + $0xa20] sm:$0xff]
                %1004 = vst [vmem:[%s838 + $0x290] sm:$0xff] %v1003
                %v1005 = vld [vmem:[%s837 + $0xa30] sm:$0xff]
                %1006 = vst [vmem:[%s838 + $0x298] sm:$0xff] %v1005
                %v1007 = vld [vmem:[%s837 + $0xa40] sm:$0xff]
                %1008 = vst [vmem:[%s838 + $0x2a0] sm:$0xff] %v1007
                %v1009 = vld [vmem:[%s837 + $0xa50] sm:$0xff]
                %1010 = vst [vmem:[%s838 + $0x2a8] sm:$0xff] %v1009
                %v1011 = vld [vmem:[%s837 + $0xa60] sm:$0xff]
                %1012 = vst [vmem:[%s838 + $0x2b0] sm:$0xff] %v1011
                %v1013 = vld [vmem:[%s837 + $0xa70] sm:$0xff]
                %1014 = vst [vmem:[%s838 + $0x2b8] sm:$0xff] %v1013
                %v1015 = vld [vmem:[%s837 + $0xa80] sm:$0xff]
                %1016 = vst [vmem:[%s838 + $0x2c0] sm:$0xff] %v1015
                %v1017 = vld [vmem:[%s837 + $0xa90] sm:$0xff]
                %1018 = vst [vmem:[%s838 + $0x2c8] sm:$0xff] %v1017
                %v1019 = vld [vmem:[%s837 + $0xaa0] sm:$0xff]
                %1020 = vst [vmem:[%s838 + $0x2d0] sm:$0xff] %v1019
                %v1021 = vld [vmem:[%s837 + $0xab0] sm:$0xff]
                %1022 = vst [vmem:[%s838 + $0x2d8] sm:$0xff] %v1021
                %v1023 = vld [vmem:[%s837 + $0xac0] sm:$0xff]
                %1024 = vst [vmem:[%s838 + $0x2e0] sm:$0xff] %v1023
                %v1025 = vld [vmem:[%s837 + $0xad0] sm:$0xff]
                %1026 = vst [vmem:[%s838 + $0x2e8] sm:$0xff] %v1025
                %v1027 = vld [vmem:[%s837 + $0xae0] sm:$0xff]
                %1028 = vst [vmem:[%s838 + $0x2f0] sm:$0xff] %v1027
                %v1029 = vld [vmem:[%s837 + $0xaf0] sm:$0xff]
                %1030 = vst [vmem:[%s838 + $0x2f8] sm:$0xff] %v1029
                %v1031 = vld [vmem:[%s837 + $0xc00] sm:$0xff]
                %1032 = vst [vmem:[%s838 + $0x300] sm:$0xff] %v1031
                %v1033 = vld [vmem:[%s837 + $0xc10] sm:$0xff]
                %1034 = vst [vmem:[%s838 + $0x308] sm:$0xff] %v1033
                %v1035 = vld [vmem:[%s837 + $0xc20] sm:$0xff]
                %1036 = vst [vmem:[%s838 + $0x310] sm:$0xff] %v1035
                %v1037 = vld [vmem:[%s837 + $0xc30] sm:$0xff]
                %1038 = vst [vmem:[%s838 + $0x318] sm:$0xff] %v1037
                %v1039 = vld [vmem:[%s837 + $0xc40] sm:$0xff]
                %1040 = vst [vmem:[%s838 + $0x320] sm:$0xff] %v1039
                %v1041 = vld [vmem:[%s837 + $0xc50] sm:$0xff]
                %1042 = vst [vmem:[%s838 + $0x328] sm:$0xff] %v1041
                %v1043 = vld [vmem:[%s837 + $0xc60] sm:$0xff]
                %1044 = vst [vmem:[%s838 + $0x330] sm:$0xff] %v1043
                %v1045 = vld [vmem:[%s837 + $0xc70] sm:$0xff]
                %1046 = vst [vmem:[%s838 + $0x338] sm:$0xff] %v1045
                %v1047 = vld [vmem:[%s837 + $0xc80] sm:$0xff]
                %1048 = vst [vmem:[%s838 + $0x340] sm:$0xff] %v1047
                %v1049 = vld [vmem:[%s837 + $0xc90] sm:$0xff]
                %1050 = vst [vmem:[%s838 + $0x348] sm:$0xff] %v1049
                %v1051 = vld [vmem:[%s837 + $0xca0] sm:$0xff]
                %1052 = vst [vmem:[%s838 + $0x350] sm:$0xff] %v1051
                %v1053 = vld [vmem:[%s837 + $0xcb0] sm:$0xff]
                %1054 = vst [vmem:[%s838 + $0x358] sm:$0xff] %v1053
                %v1055 = vld [vmem:[%s837 + $0xcc0] sm:$0xff]
                %1056 = vst [vmem:[%s838 + $0x360] sm:$0xff] %v1055
                %v1057 = vld [vmem:[%s837 + $0xcd0] sm:$0xff]
                %1058 = vst [vmem:[%s838 + $0x368] sm:$0xff] %v1057
                %v1059 = vld [vmem:[%s837 + $0xce0] sm:$0xff]
                %1060 = vst [vmem:[%s838 + $0x370] sm:$0xff] %v1059
                %v1061 = vld [vmem:[%s837 + $0xcf0] sm:$0xff]
                %1062 = vst [vmem:[%s838 + $0x378] sm:$0xff] %v1061
                %v1063 = vld [vmem:[%s837 + $0xe00] sm:$0xff]
                %1064 = vst [vmem:[%s838 + $0x380] sm:$0xff] %v1063
                %v1065 = vld [vmem:[%s837 + $0xe10] sm:$0xff]
                %1066 = vst [vmem:[%s838 + $0x388] sm:$0xff] %v1065
                %v1067 = vld [vmem:[%s837 + $0xe20] sm:$0xff]
                %1068 = vst [vmem:[%s838 + $0x390] sm:$0xff] %v1067
                %v1069 = vld [vmem:[%s837 + $0xe30] sm:$0xff]
                %1070 = vst [vmem:[%s838 + $0x398] sm:$0xff] %v1069
                %v1071 = vld [vmem:[%s837 + $0xe40] sm:$0xff]
                %1072 = vst [vmem:[%s838 + $0x3a0] sm:$0xff] %v1071
                %v1073 = vld [vmem:[%s837 + $0xe50] sm:$0xff]
                %1074 = vst [vmem:[%s838 + $0x3a8] sm:$0xff] %v1073
                %v1075 = vld [vmem:[%s837 + $0xe60] sm:$0xff]
                %1076 = vst [vmem:[%s838 + $0x3b0] sm:$0xff] %v1075
                %v1077 = vld [vmem:[%s837 + $0xe70] sm:$0xff]
                %1078 = vst [vmem:[%s838 + $0x3b8] sm:$0xff] %v1077
                %v1079 = vld [vmem:[%s837 + $0xe80] sm:$0xff]
                %1080 = vst [vmem:[%s838 + $0x3c0] sm:$0xff] %v1079
                %v1081 = vld [vmem:[%s837 + $0xe90] sm:$0xff]
                %1082 = vst [vmem:[%s838 + $0x3c8] sm:$0xff] %v1081
                %v1083 = vld [vmem:[%s837 + $0xea0] sm:$0xff]
                %1084 = vst [vmem:[%s838 + $0x3d0] sm:$0xff] %v1083
                %v1085 = vld [vmem:[%s837 + $0xeb0] sm:$0xff]
                %1086 = vst [vmem:[%s838 + $0x3d8] sm:$0xff] %v1085
                %v1087 = vld [vmem:[%s837 + $0xec0] sm:$0xff]
                %1088 = vst [vmem:[%s838 + $0x3e0] sm:$0xff] %v1087
                %v1089 = vld [vmem:[%s837 + $0xed0] sm:$0xff]
                %1090 = vst [vmem:[%s838 + $0x3e8] sm:$0xff] %v1089
                %v1091 = vld [vmem:[%s837 + $0xee0] sm:$0xff]
                %1092 = vst [vmem:[%s838 + $0x3f0] sm:$0xff] %v1091
                %v1093 = vld [vmem:[%s837 + $0xef0] sm:$0xff]
                %1094 = vst [vmem:[%s838 + $0x3f8] sm:$0xff] %v1093
              $region75: #{agg_head_forward.3} parent=69 // loop_footer
                %s836 = sadd.s32 1, %s832
              $region76: #{agg_head_forward.3} parent=69 // loop_footer_branch
                %831 = sbr.rel target = $region72
              $region77: #{agg_head_forward.3} parent=69 // loop_exit
                _
            $region70: #{agg_head_forward.3} parent=61 // pred_fallthru
              _
          $region62: #{agg_head_forward.3} parent=57 // pred_fallthru
            _
          %1363 = vnop
        $region58: #{agg_head_forward.3} parent=15 // pred_fallthru
          _
        // Predicated region
        $region93: #{agg_head_forward.3} parent=15 // pred_check
          %p1364 = pneg %p105
        $region94: #{agg_head_forward.3} parent=15 // pred_check_branch
          %1366 = sbr.rel (%p1364) target = $region96
        $region95: #{agg_head_forward.3} parent=15 // pred_region
          %p1367 = scmp.lt.s32.totalorder %s24, 1
          %s1368 = scalar_select %p1367, %s24, 1
          %s1369 = scalar_lea.vmem %s2, %s1368
        $region96: #{agg_head_forward.3} parent=15 // pred_fallthru
          _
        // Predicated region
        $region97: #{agg_head_forward.3} parent=15 // pred_check
          %p1370 = pneg %p131
        $region98: #{agg_head_forward.3} parent=15 // pred_check_branch
          %1372 = sbr.rel (%p1370) target = $region100
        $region99: #{agg_head_forward.3} parent=15 // pred_region
          %p1373 = scmp.lt.s32.totalorder %s24, 1
          %s1374 = scalar_select %p1373, %s24, 1
          %s1375 = scalar_lea.vmem %s3, %s1374
        $region100: #{agg_head_forward.3} parent=15 // pred_fallthru
          _
        // Predicated region
        $region101: #{agg_head_forward.3} parent=15 // pred_check
          %p1376 = pneg %p157
        $region102: #{agg_head_forward.3} parent=15 // pred_check_branch
          %1378 = sbr.rel (%p1376) target = $region104
        $region103: #{agg_head_forward.3} parent=15 // pred_region
          %p1379 = scmp.lt.s32.totalorder %s24, 1
          %s1380 = scalar_select %p1379, %s24, 1
          %s1381 = scalar_lea.vmem %s4, %s1380
        $region104: #{agg_head_forward.3} parent=15 // pred_fallthru
          _
        // Predicated region
        $region105: #{agg_head_forward.3} parent=15 // pred_check
          %p1382 = pneg %p183
        $region106: #{agg_head_forward.3} parent=15 // pred_check_branch
          %1384 = sbr.rel (%p1382) target = $region108
        $region107: #{agg_head_forward.3} parent=15 // pred_region
          %p1385 = scmp.lt.s32.totalorder %s24, 1
          %s1386 = scalar_select %p1385, %s24, 1
          %s1387 = scalar_lea.vmem %s5, %s1386
        $region108: #{agg_head_forward.3} parent=15 // pred_fallthru
          _
      $region16: #{agg_head_forward.3} parent=5 // pred_fallthru
        _
      %p1388 = scmp.le.s32.totalorder 1, %s17
      %p1389 = scmp.lt.s32.totalorder %s17, 5
      %p1390 = pnand %p1388, %p1389
      %p1391 = pneg %p1390
      // Predicated region
      $region109: #{agg_head_forward.3} parent=5 // pred_check
        _
      $region110: #{agg_head_forward.3} parent=5 // pred_check_branch
        %1393 = sbr.rel (%p1390) target = $region112
      $region111: #{agg_head_forward.3} parent=5 // pred_region
        %s1394 = ssub.s32 %s17, 1
        %s1395 = sand.u32 %s44, 1
        %s1396 = sand.u32 %s44, 1
        %s1397 = smul.addr %s1396, 1024
        %s1398 = scalar_lea.vmem [#allocation4], %s1397
        // Predicated region
        $region113: #{agg_head_forward.3} parent=111 // pred_check
          %p1399 = pneg %p57
        $region114: #{agg_head_forward.3} parent=111 // pred_check_branch
          %1401 = sbr.rel (%p1399) target = $region116
        $region115: #{agg_head_forward.3} parent=111 // pred_region
          _
        $region116: #{agg_head_forward.3} parent=111 // pred_fallthru
          _
        %s1402 = sand.u32 %s72, 1
        %s1403 = sand.u32 %s72, 1
        %s1404 = smul.addr %s1403, 1024
        %s1405 = scalar_lea.vmem [#allocation5], %s1404
        // Predicated region
        $region117: #{agg_head_forward.3} parent=111 // pred_check
          %p1406 = pneg %p85
        $region118: #{agg_head_forward.3} parent=111 // pred_check_branch
          %1408 = sbr.rel (%p1406) target = $region120
        $region119: #{agg_head_forward.3} parent=111 // pred_region
          _
        $region120: #{agg_head_forward.3} parent=111 // pred_fallthru
          _
        %s1409 = sand.u32 %s44, 1
        %s1410 = sand.u32 %s44, 1
        %s1411 = smul.addr %s1410, 1024
        %s1412 = scalar_lea.vmem [#allocation4], %s1411
        %p1413 = pneg %p57
        %p1414 = pneg %p54
        %s1415 = sand.u32 %s72, 1
        %s1416 = sand.u32 %s72, 1
        %s1417 = smul.addr %s1416, 1024
        %s1418 = scalar_lea.vmem [#allocation5], %s1417
        %p1419 = pneg %p85
        %p1420 = pneg %p82
        %p1421 = scmp.lt.s32.totalorder %s26, 1
        %s1422 = scalar_select %p1421, %s26, 1
        %s1423 = scalar_lea.vmem %s2, %s1422
        %p1424 = pneg %p111
        %p1425 = pneg %p108
        %p1426 = scmp.lt.s32.totalorder %s26, 1
        %s1427 = scalar_select %p1426, %s26, 1
        %s1428 = scalar_lea.vmem %s3, %s1427
        %p1429 = pneg %p137
        %p1430 = pneg %p134
        %p1431 = scmp.lt.s32.totalorder %s26, 1
        %s1432 = scalar_select %p1431, %s26, 1
        %s1433 = scalar_lea.vmem %s4, %s1432
        %p1434 = pneg %p163
        %p1435 = pneg %p160
        %p1436 = scmp.lt.s32.totalorder %s26, 1
        %s1437 = scalar_select %p1436, %s26, 1
        %s1438 = scalar_lea.vmem %s5, %s1437
        %p1439 = pneg %p189
        %p1440 = pneg %p186
        %p1441 = pneg %p215
        %p1442 = pneg %p212
        %s1443 = sand.u32 %s202, 1
        %s1444 = scalar_lea.sflag [#allocation7], %s1443
        %s1445 = sand.u32 %s202, 1
        %s1446 = smul.addr %s1445, 8
        %s1447 = scalar_lea.vmem [#allocation6], %s1446
        %p1448 = pneg %p241
        %p1449 = pneg %p238
        %s1450 = sand.u32 %s228, 1
        %s1451 = sand.u32 %s228, 1
        %s1452 = smul.addr %s1451, 8
        %s1453 = scalar_lea.vmem [#allocation8], %s1452
        %s1454 = smul.u32 16, %s26
        %s1455 = smul.u32 16, %s26
        %p1456 = scmp.lt.s32.totalorder %s26, 1
        %s1457 = scalar_select %p1456, %s26, 1
        %s1458 = scalar_lea.vmem %s2, %s1457
        %p1459 = scmp.lt.s32.totalorder %s26, 1
        %s1460 = scalar_select %p1459, %s26, 1
        %s1461 = scalar_lea.vmem %s3, %s1460
        %p1462 = scmp.lt.s32.totalorder %s26, 1
        %s1463 = scalar_select %p1462, %s26, 1
        %s1464 = scalar_lea.vmem %s4, %s1463
        %p1465 = scmp.lt.s32.totalorder %s26, 1
        %s1466 = scalar_select %p1465, %s26, 1
        %s1467 = scalar_lea.vmem %s5, %s1466
        %p1468 = scmp.eq.s32.totalorder %s27, 0
        // Predicated region
        $region121: #{agg_head_forward.3} parent=111 // pred_check
          %p1469 = pneg %p1468
        $region122: #{agg_head_forward.3} parent=111 // pred_check_branch
          %1471 = sbr.rel (%p1469) target = $region124
        $region123: #{agg_head_forward.3} parent=111 // pred_region
          %1472 = vst [vmem:[#allocation2] sm:$0xff] 0.0
          %1473 = vst [vmem:[#allocation3] sm:$0xff] 0.0
        $region124: #{agg_head_forward.3} parent=111 // pred_fallthru
          _
        %v1474 = vld [vmem:[#allocation2] sm:$0xff]
        %v1475 = vld [vmem:[%s1398] sm:$0xff]
        %v1476 = vld [vmem:[%s1398 + $0x8] sm:$0xff]
        %v1477 = vld [vmem:[%s1398 + $0x10] sm:$0xff]
        %v1478 = vld [vmem:[%s1398 + $0x18] sm:$0xff]
        %v1479 = vld [vmem:[%s1398 + $0x20] sm:$0xff]
        %v1480 = vld [vmem:[%s1398 + $0x28] sm:$0xff]
        %v1481 = vld [vmem:[%s1398 + $0x30] sm:$0xff]
        %v1482 = vld [vmem:[%s1398 + $0x38] sm:$0xff]
        %v1483 = vld [vmem:[%s1398 + $0x40] sm:$0xff]
        %v1484 = vld [vmem:[%s1398 + $0x48] sm:$0xff]
        %v1485 = vld [vmem:[%s1398 + $0x50] sm:$0xff]
        %v1486 = vld [vmem:[%s1398 + $0x58] sm:$0xff]
        %v1487 = vld [vmem:[%s1398 + $0x60] sm:$0xff]
        %v1488 = vld [vmem:[%s1398 + $0x68] sm:$0xff]
        %v1489 = vld [vmem:[%s1398 + $0x70] sm:$0xff]
        %v1490 = vld [vmem:[%s1398 + $0x78] sm:$0xff]
        %v1491 = vld [vmem:[%s1398 + $0x80] sm:$0xff]
        %v1492 = vld [vmem:[%s1398 + $0x88] sm:$0xff]
        %v1493 = vld [vmem:[%s1398 + $0x90] sm:$0xff]
        %v1494 = vld [vmem:[%s1398 + $0x98] sm:$0xff]
        %v1495 = vld [vmem:[%s1398 + $0xa0] sm:$0xff]
        %v1496 = vld [vmem:[%s1398 + $0xa8] sm:$0xff]
        %v1497 = vld [vmem:[%s1398 + $0xb0] sm:$0xff]
        %v1498 = vld [vmem:[%s1398 + $0xb8] sm:$0xff]
        %v1499 = vld [vmem:[%s1398 + $0xc0] sm:$0xff]
        %v1500 = vld [vmem:[%s1398 + $0xc8] sm:$0xff]
        %v1501 = vld [vmem:[%s1398 + $0xd0] sm:$0xff]
        %v1502 = vld [vmem:[%s1398 + $0xd8] sm:$0xff]
        %v1503 = vld [vmem:[%s1398 + $0xe0] sm:$0xff]
        %v1504 = vld [vmem:[%s1398 + $0xe8] sm:$0xff]
        %v1505 = vld [vmem:[%s1398 + $0xf0] sm:$0xff]
        %v1506 = vld [vmem:[%s1398 + $0xf8] sm:$0xff]
        %v1507 = vld [vmem:[%s1398 + $0x100] sm:$0xff]
        %v1508 = vld [vmem:[%s1398 + $0x108] sm:$0xff]
        %v1509 = vld [vmem:[%s1398 + $0x110] sm:$0xff]
        %v1510 = vld [vmem:[%s1398 + $0x118] sm:$0xff]
        %v1511 = vld [vmem:[%s1398 + $0x120] sm:$0xff]
        %v1512 = vld [vmem:[%s1398 + $0x128] sm:$0xff]
        %v1513 = vld [vmem:[%s1398 + $0x130] sm:$0xff]
        %v1514 = vld [vmem:[%s1398 + $0x138] sm:$0xff]
        %v1515 = vld [vmem:[%s1398 + $0x140] sm:$0xff]
        %v1516 = vld [vmem:[%s1398 + $0x148] sm:$0xff]
        %v1517 = vld [vmem:[%s1398 + $0x150] sm:$0xff]
        %v1518 = vld [vmem:[%s1398 + $0x158] sm:$0xff]
        %v1519 = vld [vmem:[%s1398 + $0x160] sm:$0xff]
        %v1520 = vld [vmem:[%s1398 + $0x168] sm:$0xff]
        %v1521 = vld [vmem:[%s1398 + $0x170] sm:$0xff]
        %v1522 = vld [vmem:[%s1398 + $0x178] sm:$0xff]
        %v1523 = vld [vmem:[%s1398 + $0x180] sm:$0xff]
        %v1524 = vld [vmem:[%s1398 + $0x188] sm:$0xff]
        %v1525 = vld [vmem:[%s1398 + $0x190] sm:$0xff]
        %v1526 = vld [vmem:[%s1398 + $0x198] sm:$0xff]
        %v1527 = vld [vmem:[%s1398 + $0x1a0] sm:$0xff]
        %v1528 = vld [vmem:[%s1398 + $0x1a8] sm:$0xff]
        %v1529 = vld [vmem:[%s1398 + $0x1b0] sm:$0xff]
        %v1530 = vld [vmem:[%s1398 + $0x1b8] sm:$0xff]
        %v1531 = vld [vmem:[%s1398 + $0x1c0] sm:$0xff]
        %v1532 = vld [vmem:[%s1398 + $0x1c8] sm:$0xff]
        %v1533 = vld [vmem:[%s1398 + $0x1d0] sm:$0xff]
        %v1534 = vld [vmem:[%s1398 + $0x1d8] sm:$0xff]
        %v1535 = vld [vmem:[%s1398 + $0x1e0] sm:$0xff]
        %v1536 = vld [vmem:[%s1398 + $0x1e8] sm:$0xff]
        %v1537 = vld [vmem:[%s1398 + $0x1f0] sm:$0xff]
        %v1538 = vld [vmem:[%s1398 + $0x1f8] sm:$0xff]
        %v1539 = vld [vmem:[%s1398 + $0x200] sm:$0xff]
        %v1540 = vld [vmem:[%s1398 + $0x208] sm:$0xff]
        %v1541 = vld [vmem:[%s1398 + $0x210] sm:$0xff]
        %v1542 = vld [vmem:[%s1398 + $0x218] sm:$0xff]
        %v1543 = vld [vmem:[%s1398 + $0x220] sm:$0xff]
        %v1544 = vld [vmem:[%s1398 + $0x228] sm:$0xff]
        %v1545 = vld [vmem:[%s1398 + $0x230] sm:$0xff]
        %v1546 = vld [vmem:[%s1398 + $0x238] sm:$0xff]
        %v1547 = vld [vmem:[%s1398 + $0x240] sm:$0xff]
        %v1548 = vld [vmem:[%s1398 + $0x248] sm:$0xff]
        %v1549 = vld [vmem:[%s1398 + $0x250] sm:$0xff]
        %v1550 = vld [vmem:[%s1398 + $0x258] sm:$0xff]
        %v1551 = vld [vmem:[%s1398 + $0x260] sm:$0xff]
        %v1552 = vld [vmem:[%s1398 + $0x268] sm:$0xff]
        %v1553 = vld [vmem:[%s1398 + $0x270] sm:$0xff]
        %v1554 = vld [vmem:[%s1398 + $0x278] sm:$0xff]
        %v1555 = vld [vmem:[%s1398 + $0x280] sm:$0xff]
        %v1556 = vld [vmem:[%s1398 + $0x288] sm:$0xff]
        %v1557 = vld [vmem:[%s1398 + $0x290] sm:$0xff]
        %v1558 = vld [vmem:[%s1398 + $0x298] sm:$0xff]
        %v1559 = vld [vmem:[%s1398 + $0x2a0] sm:$0xff]
        %v1560 = vld [vmem:[%s1398 + $0x2a8] sm:$0xff]
        %v1561 = vld [vmem:[%s1398 + $0x2b0] sm:$0xff]
        %v1562 = vld [vmem:[%s1398 + $0x2b8] sm:$0xff]
        %v1563 = vld [vmem:[%s1398 + $0x2c0] sm:$0xff]
        %v1564 = vld [vmem:[%s1398 + $0x2c8] sm:$0xff]
        %v1565 = vld [vmem:[%s1398 + $0x2d0] sm:$0xff]
        %v1566 = vld [vmem:[%s1398 + $0x2d8] sm:$0xff]
        %v1567 = vld [vmem:[%s1398 + $0x2e0] sm:$0xff]
        %v1568 = vld [vmem:[%s1398 + $0x2e8] sm:$0xff]
        %v1569 = vld [vmem:[%s1398 + $0x2f0] sm:$0xff]
        %v1570 = vld [vmem:[%s1398 + $0x2f8] sm:$0xff]
        %v1571 = vld [vmem:[%s1398 + $0x300] sm:$0xff]
        %v1572 = vld [vmem:[%s1398 + $0x308] sm:$0xff]
        %v1573 = vld [vmem:[%s1398 + $0x310] sm:$0xff]
        %v1574 = vld [vmem:[%s1398 + $0x318] sm:$0xff]
        %v1575 = vld [vmem:[%s1398 + $0x320] sm:$0xff]
        %v1576 = vld [vmem:[%s1398 + $0x328] sm:$0xff]
        %v1577 = vld [vmem:[%s1398 + $0x330] sm:$0xff]
        %v1578 = vld [vmem:[%s1398 + $0x338] sm:$0xff]
        %v1579 = vld [vmem:[%s1398 + $0x340] sm:$0xff]
        %v1580 = vld [vmem:[%s1398 + $0x348] sm:$0xff]
        %v1581 = vld [vmem:[%s1398 + $0x350] sm:$0xff]
        %v1582 = vld [vmem:[%s1398 + $0x358] sm:$0xff]
        %v1583 = vld [vmem:[%s1398 + $0x360] sm:$0xff]
        %v1584 = vld [vmem:[%s1398 + $0x368] sm:$0xff]
        %v1585 = vld [vmem:[%s1398 + $0x370] sm:$0xff]
        %v1586 = vld [vmem:[%s1398 + $0x378] sm:$0xff]
        %v1587 = vld [vmem:[%s1398 + $0x380] sm:$0xff]
        %v1588 = vld [vmem:[%s1398 + $0x388] sm:$0xff]
        %v1589 = vld [vmem:[%s1398 + $0x390] sm:$0xff]
        %v1590 = vld [vmem:[%s1398 + $0x398] sm:$0xff]
        %v1591 = vld [vmem:[%s1398 + $0x3a0] sm:$0xff]
        %v1592 = vld [vmem:[%s1398 + $0x3a8] sm:$0xff]
        %v1593 = vld [vmem:[%s1398 + $0x3b0] sm:$0xff]
        %v1594 = vld [vmem:[%s1398 + $0x3b8] sm:$0xff]
        %v1595 = vld [vmem:[%s1398 + $0x3c0] sm:$0xff]
        %v1596 = vld [vmem:[%s1398 + $0x3c8] sm:$0xff]
        %v1597 = vld [vmem:[%s1398 + $0x3d0] sm:$0xff]
        %v1598 = vld [vmem:[%s1398 + $0x3d8] sm:$0xff]
        %v1599 = vld [vmem:[%s1398 + $0x3e0] sm:$0xff]
        %v1600 = vld [vmem:[%s1398 + $0x3e8] sm:$0xff]
        %v1601 = vld [vmem:[%s1398 + $0x3f0] sm:$0xff]
        %v1602 = vld [vmem:[%s1398 + $0x3f8] sm:$0xff]
        %1603 = vadd.xlane.f32.xlu0 %v1475
        %v1604 = vpop.xlane.xlu0 %1603
        %1605 = vadd.xlane.f32.xlu0 %v1476
        %v1606 = vpop.xlane.xlu0 %1605
        %1607 = vadd.xlane.f32.xlu0 %v1477
        %v1608 = vpop.xlane.xlu0 %1607
        %1609 = vadd.xlane.f32.xlu0 %v1478
        %v1610 = vpop.xlane.xlu0 %1609
        %1611 = vadd.xlane.f32.xlu0 %v1479
        %v1612 = vpop.xlane.xlu0 %1611
        %1613 = vadd.xlane.f32.xlu0 %v1480
        %v1614 = vpop.xlane.xlu0 %1613
        %1615 = vadd.xlane.f32.xlu0 %v1481
        %v1616 = vpop.xlane.xlu0 %1615
        %1617 = vadd.xlane.f32.xlu0 %v1482
        %v1618 = vpop.xlane.xlu0 %1617
        %1619 = vadd.xlane.f32.xlu0 %v1483
        %v1620 = vpop.xlane.xlu0 %1619
        %1621 = vadd.xlane.f32.xlu0 %v1484
        %v1622 = vpop.xlane.xlu0 %1621
        %1623 = vadd.xlane.f32.xlu0 %v1485
        %v1624 = vpop.xlane.xlu0 %1623
        %1625 = vadd.xlane.f32.xlu0 %v1486
        %v1626 = vpop.xlane.xlu0 %1625
        %1627 = vadd.xlane.f32.xlu0 %v1487
        %v1628 = vpop.xlane.xlu0 %1627
        %1629 = vadd.xlane.f32.xlu0 %v1488
        %v1630 = vpop.xlane.xlu0 %1629
        %1631 = vadd.xlane.f32.xlu0 %v1489
        %v1632 = vpop.xlane.xlu0 %1631
        %1633 = vadd.xlane.f32.xlu0 %v1490
        %v1634 = vpop.xlane.xlu0 %1633
        %1635 = vadd.xlane.f32.xlu0 %v1491
        %v1636 = vpop.xlane.xlu0 %1635
        %1637 = vadd.xlane.f32.xlu0 %v1492
        %v1638 = vpop.xlane.xlu0 %1637
        %1639 = vadd.xlane.f32.xlu0 %v1493
        %v1640 = vpop.xlane.xlu0 %1639
        %1641 = vadd.xlane.f32.xlu0 %v1494
        %v1642 = vpop.xlane.xlu0 %1641
        %1643 = vadd.xlane.f32.xlu0 %v1495
        %v1644 = vpop.xlane.xlu0 %1643
        %1645 = vadd.xlane.f32.xlu0 %v1496
        %v1646 = vpop.xlane.xlu0 %1645
        %1647 = vadd.xlane.f32.xlu0 %v1497
        %v1648 = vpop.xlane.xlu0 %1647
        %1649 = vadd.xlane.f32.xlu0 %v1498
        %v1650 = vpop.xlane.xlu0 %1649
        %1651 = vadd.xlane.f32.xlu0 %v1499
        %v1652 = vpop.xlane.xlu0 %1651
        %1653 = vadd.xlane.f32.xlu0 %v1500
        %v1654 = vpop.xlane.xlu0 %1653
        %1655 = vadd.xlane.f32.xlu0 %v1501
        %v1656 = vpop.xlane.xlu0 %1655
        %1657 = vadd.xlane.f32.xlu0 %v1502
        %v1658 = vpop.xlane.xlu0 %1657
        %1659 = vadd.xlane.f32.xlu0 %v1503
        %v1660 = vpop.xlane.xlu0 %1659
        %1661 = vadd.xlane.f32.xlu0 %v1504
        %v1662 = vpop.xlane.xlu0 %1661
        %1663 = vadd.xlane.f32.xlu0 %v1505
        %v1664 = vpop.xlane.xlu0 %1663
        %1665 = vadd.xlane.f32.xlu0 %v1506
        %v1666 = vpop.xlane.xlu0 %1665
        %1667 = vadd.xlane.f32.xlu0 %v1507
        %v1668 = vpop.xlane.xlu0 %1667
        %1669 = vadd.xlane.f32.xlu0 %v1508
        %v1670 = vpop.xlane.xlu0 %1669
        %1671 = vadd.xlane.f32.xlu0 %v1509
        %v1672 = vpop.xlane.xlu0 %1671
        %1673 = vadd.xlane.f32.xlu0 %v1510
        %v1674 = vpop.xlane.xlu0 %1673
        %1675 = vadd.xlane.f32.xlu0 %v1511
        %v1676 = vpop.xlane.xlu0 %1675
        %1677 = vadd.xlane.f32.xlu0 %v1512
        %v1678 = vpop.xlane.xlu0 %1677
        %1679 = vadd.xlane.f32.xlu0 %v1513
        %v1680 = vpop.xlane.xlu0 %1679
        %1681 = vadd.xlane.f32.xlu0 %v1514
        %v1682 = vpop.xlane.xlu0 %1681
        %1683 = vadd.xlane.f32.xlu0 %v1515
        %v1684 = vpop.xlane.xlu0 %1683
        %1685 = vadd.xlane.f32.xlu0 %v1516
        %v1686 = vpop.xlane.xlu0 %1685
        %1687 = vadd.xlane.f32.xlu0 %v1517
        %v1688 = vpop.xlane.xlu0 %1687
        %1689 = vadd.xlane.f32.xlu0 %v1518
        %v1690 = vpop.xlane.xlu0 %1689
        %1691 = vadd.xlane.f32.xlu0 %v1519
        %v1692 = vpop.xlane.xlu0 %1691
        %1693 = vadd.xlane.f32.xlu0 %v1520
        %v1694 = vpop.xlane.xlu0 %1693
        %1695 = vadd.xlane.f32.xlu0 %v1521
        %v1696 = vpop.xlane.xlu0 %1695
        %1697 = vadd.xlane.f32.xlu0 %v1522
        %v1698 = vpop.xlane.xlu0 %1697
        %1699 = vadd.xlane.f32.xlu0 %v1523
        %v1700 = vpop.xlane.xlu0 %1699
        %1701 = vadd.xlane.f32.xlu0 %v1524
        %v1702 = vpop.xlane.xlu0 %1701
        %1703 = vadd.xlane.f32.xlu0 %v1525
        %v1704 = vpop.xlane.xlu0 %1703
        %1705 = vadd.xlane.f32.xlu0 %v1526
        %v1706 = vpop.xlane.xlu0 %1705
        %1707 = vadd.xlane.f32.xlu0 %v1527
        %v1708 = vpop.xlane.xlu0 %1707
        %1709 = vadd.xlane.f32.xlu0 %v1528
        %v1710 = vpop.xlane.xlu0 %1709
        %1711 = vadd.xlane.f32.xlu0 %v1529
        %v1712 = vpop.xlane.xlu0 %1711
        %1713 = vadd.xlane.f32.xlu0 %v1530
        %v1714 = vpop.xlane.xlu0 %1713
        %1715 = vadd.xlane.f32.xlu0 %v1531
        %v1716 = vpop.xlane.xlu0 %1715
        %1717 = vadd.xlane.f32.xlu0 %v1532
        %v1718 = vpop.xlane.xlu0 %1717
        %1719 = vadd.xlane.f32.xlu0 %v1533
        %v1720 = vpop.xlane.xlu0 %1719
        %1721 = vadd.xlane.f32.xlu0 %v1534
        %v1722 = vpop.xlane.xlu0 %1721
        %1723 = vadd.xlane.f32.xlu0 %v1535
        %v1724 = vpop.xlane.xlu0 %1723
        %1725 = vadd.xlane.f32.xlu0 %v1536
        %v1726 = vpop.xlane.xlu0 %1725
        %1727 = vadd.xlane.f32.xlu0 %v1537
        %v1728 = vpop.xlane.xlu0 %1727
        %1729 = vadd.xlane.f32.xlu0 %v1538
        %v1730 = vpop.xlane.xlu0 %1729
        %1731 = vadd.xlane.f32.xlu0 %v1539
        %v1732 = vpop.xlane.xlu0 %1731
        %1733 = vadd.xlane.f32.xlu0 %v1540
        %v1734 = vpop.xlane.xlu0 %1733
        %1735 = vadd.xlane.f32.xlu0 %v1541
        %v1736 = vpop.xlane.xlu0 %1735
        %1737 = vadd.xlane.f32.xlu0 %v1542
        %v1738 = vpop.xlane.xlu0 %1737
        %1739 = vadd.xlane.f32.xlu0 %v1543
        %v1740 = vpop.xlane.xlu0 %1739
        %1741 = vadd.xlane.f32.xlu0 %v1544
        %v1742 = vpop.xlane.xlu0 %1741
        %1743 = vadd.xlane.f32.xlu0 %v1545
        %v1744 = vpop.xlane.xlu0 %1743
        %1745 = vadd.xlane.f32.xlu0 %v1546
        %v1746 = vpop.xlane.xlu0 %1745
        %1747 = vadd.xlane.f32.xlu0 %v1547
        %v1748 = vpop.xlane.xlu0 %1747
        %1749 = vadd.xlane.f32.xlu0 %v1548
        %v1750 = vpop.xlane.xlu0 %1749
        %1751 = vadd.xlane.f32.xlu0 %v1549
        %v1752 = vpop.xlane.xlu0 %1751
        %1753 = vadd.xlane.f32.xlu0 %v1550
        %v1754 = vpop.xlane.xlu0 %1753
        %1755 = vadd.xlane.f32.xlu0 %v1551
        %v1756 = vpop.xlane.xlu0 %1755
        %1757 = vadd.xlane.f32.xlu0 %v1552
        %v1758 = vpop.xlane.xlu0 %1757
        %1759 = vadd.xlane.f32.xlu0 %v1553
        %v1760 = vpop.xlane.xlu0 %1759
        %1761 = vadd.xlane.f32.xlu0 %v1554
        %v1762 = vpop.xlane.xlu0 %1761
        %1763 = vadd.xlane.f32.xlu0 %v1555
        %v1764 = vpop.xlane.xlu0 %1763
        %1765 = vadd.xlane.f32.xlu0 %v1556
        %v1766 = vpop.xlane.xlu0 %1765
        %1767 = vadd.xlane.f32.xlu0 %v1557
        %v1768 = vpop.xlane.xlu0 %1767
        %1769 = vadd.xlane.f32.xlu0 %v1558
        %v1770 = vpop.xlane.xlu0 %1769
        %1771 = vadd.xlane.f32.xlu0 %v1559
        %v1772 = vpop.xlane.xlu0 %1771
        %1773 = vadd.xlane.f32.xlu0 %v1560
        %v1774 = vpop.xlane.xlu0 %1773
        %1775 = vadd.xlane.f32.xlu0 %v1561
        %v1776 = vpop.xlane.xlu0 %1775
        %1777 = vadd.xlane.f32.xlu0 %v1562
        %v1778 = vpop.xlane.xlu0 %1777
        %1779 = vadd.xlane.f32.xlu0 %v1563
        %v1780 = vpop.xlane.xlu0 %1779
        %1781 = vadd.xlane.f32.xlu0 %v1564
        %v1782 = vpop.xlane.xlu0 %1781
        %1783 = vadd.xlane.f32.xlu0 %v1565
        %v1784 = vpop.xlane.xlu0 %1783
        %1785 = vadd.xlane.f32.xlu0 %v1566
        %v1786 = vpop.xlane.xlu0 %1785
        %1787 = vadd.xlane.f32.xlu0 %v1567
        %v1788 = vpop.xlane.xlu0 %1787
        %1789 = vadd.xlane.f32.xlu0 %v1568
        %v1790 = vpop.xlane.xlu0 %1789
        %1791 = vadd.xlane.f32.xlu0 %v1569
        %v1792 = vpop.xlane.xlu0 %1791
        %1793 = vadd.xlane.f32.xlu0 %v1570
        %v1794 = vpop.xlane.xlu0 %1793
        %1795 = vadd.xlane.f32.xlu0 %v1571
        %v1796 = vpop.xlane.xlu0 %1795
        %1797 = vadd.xlane.f32.xlu0 %v1572
        %v1798 = vpop.xlane.xlu0 %1797
        %1799 = vadd.xlane.f32.xlu0 %v1573
        %v1800 = vpop.xlane.xlu0 %1799
        %1801 = vadd.xlane.f32.xlu0 %v1574
        %v1802 = vpop.xlane.xlu0 %1801
        %1803 = vadd.xlane.f32.xlu0 %v1575
        %v1804 = vpop.xlane.xlu0 %1803
        %1805 = vadd.xlane.f32.xlu0 %v1576
        %v1806 = vpop.xlane.xlu0 %1805
        %1807 = vadd.xlane.f32.xlu0 %v1577
        %v1808 = vpop.xlane.xlu0 %1807
        %1809 = vadd.xlane.f32.xlu0 %v1578
        %v1810 = vpop.xlane.xlu0 %1809
        %1811 = vadd.xlane.f32.xlu0 %v1579
        %v1812 = vpop.xlane.xlu0 %1811
        %1813 = vadd.xlane.f32.xlu0 %v1580
        %v1814 = vpop.xlane.xlu0 %1813
        %1815 = vadd.xlane.f32.xlu0 %v1581
        %v1816 = vpop.xlane.xlu0 %1815
        %1817 = vadd.xlane.f32.xlu0 %v1582
        %v1818 = vpop.xlane.xlu0 %1817
        %1819 = vadd.xlane.f32.xlu0 %v1583
        %v1820 = vpop.xlane.xlu0 %1819
        %1821 = vadd.xlane.f32.xlu0 %v1584
        %v1822 = vpop.xlane.xlu0 %1821
        %1823 = vadd.xlane.f32.xlu0 %v1585
        %v1824 = vpop.xlane.xlu0 %1823
        %1825 = vadd.xlane.f32.xlu0 %v1586
        %v1826 = vpop.xlane.xlu0 %1825
        %1827 = vadd.xlane.f32.xlu0 %v1587
        %v1828 = vpop.xlane.xlu0 %1827
        %1829 = vadd.xlane.f32.xlu0 %v1588
        %v1830 = vpop.xlane.xlu0 %1829
        %1831 = vadd.xlane.f32.xlu0 %v1589
        %v1832 = vpop.xlane.xlu0 %1831
        %1833 = vadd.xlane.f32.xlu0 %v1590
        %v1834 = vpop.xlane.xlu0 %1833
        %1835 = vadd.xlane.f32.xlu0 %v1591
        %v1836 = vpop.xlane.xlu0 %1835
        %1837 = vadd.xlane.f32.xlu0 %v1592
        %v1838 = vpop.xlane.xlu0 %1837
        %1839 = vadd.xlane.f32.xlu0 %v1593
        %v1840 = vpop.xlane.xlu0 %1839
        %1841 = vadd.xlane.f32.xlu0 %v1594
        %v1842 = vpop.xlane.xlu0 %1841
        %1843 = vadd.xlane.f32.xlu0 %v1595
        %v1844 = vpop.xlane.xlu0 %1843
        %1845 = vadd.xlane.f32.xlu0 %v1596
        %v1846 = vpop.xlane.xlu0 %1845
        %1847 = vadd.xlane.f32.xlu0 %v1597
        %v1848 = vpop.xlane.xlu0 %1847
        %1849 = vadd.xlane.f32.xlu0 %v1598
        %v1850 = vpop.xlane.xlu0 %1849
        %1851 = vadd.xlane.f32.xlu0 %v1599
        %v1852 = vpop.xlane.xlu0 %1851
        %1853 = vadd.xlane.f32.xlu0 %v1600
        %v1854 = vpop.xlane.xlu0 %1853
        %1855 = vadd.xlane.f32.xlu0 %v1601
        %v1856 = vpop.xlane.xlu0 %1855
        %1857 = vadd.xlane.f32.xlu0 %v1602
        %v1858 = vpop.xlane.xlu0 %1857
        %v1987 = vlaneseq
        %v1988 = vand.u32 %v1987, 127
        %v1989 = vlaneseq
        %v1990 = vshrl.u32 %v1989, 7
        %v1991 = vsub.s32 %v1988, %v1990
        %v1992 = vrot.slane %v1604, %v1991
        %v1993 = vadd.s32 %v1988, 4294967288
        %v1994 = vlaneseq
        %v1995 = vshrl.u32 %v1994, 7
        %v1996 = vsub.s32 %v1993, %v1995
        %v1997 = vrot.slane %v1606, %v1996
        %vm1998 = vcmask 130112
        %v1999 = vsel %vm1998, %v1997, %v1992
        %v2000 = vadd.s32 %v1988, 4294967280
        %v2001 = vlaneseq
        %v2002 = vshrl.u32 %v2001, 7
        %v2003 = vsub.s32 %v2000, %v2002
        %v2004 = vrot.slane %v1608, %v2003
        %vm2005 = vcmask 195712
        %v2006 = vsel %vm2005, %v2004, %v1999
        %v2007 = vadd.s32 %v1988, 4294967272
        %v2008 = vlaneseq
        %v2009 = vshrl.u32 %v2008, 7
        %v2010 = vsub.s32 %v2007, %v2009
        %v2011 = vrot.slane %v1610, %v2010
        %vm2012 = vcmask 261312
        %v2013 = vsel %vm2012, %v2011, %v2006
        %v2014 = vadd.s32 %v1988, 4294967264
        %v2015 = vlaneseq
        %v2016 = vshrl.u32 %v2015, 7
        %v2017 = vsub.s32 %v2014, %v2016
        %v2018 = vrot.slane %v1612, %v2017
        %vm2019 = vcmask 326912
        %v2020 = vsel %vm2019, %v2018, %v2013
        %v2021 = vadd.s32 %v1988, 4294967256
        %v2022 = vlaneseq
        %v2023 = vshrl.u32 %v2022, 7
        %v2024 = vsub.s32 %v2021, %v2023
        %v2025 = vrot.slane %v1614, %v2024
        %vm2026 = vcmask 392512
        %v2027 = vsel %vm2026, %v2025, %v2020
        %v2028 = vadd.s32 %v1988, 4294967248
        %v2029 = vlaneseq
        %v2030 = vshrl.u32 %v2029, 7
        %v2031 = vsub.s32 %v2028, %v2030
        %v2032 = vrot.slane %v1616, %v2031
        %vm2033 = vcmask 458112
        %v2034 = vsel %vm2033, %v2032, %v2027
        %v2035 = vadd.s32 %v1988, 4294967240
        %v2036 = vlaneseq
        %v2037 = vshrl.u32 %v2036, 7
        %v2038 = vsub.s32 %v2035, %v2037
        %v2039 = vrot.slane %v1618, %v2038
        %vm2040 = vcmask 523712
        %v2041 = vsel %vm2040, %v2039, %v2034
        %v2042 = vadd.s32 %v1988, 4294967232
        %v2043 = vlaneseq
        %v2044 = vshrl.u32 %v2043, 7
        %v2045 = vsub.s32 %v2042, %v2044
        %v2046 = vrot.slane %v1620, %v2045
        %vm2047 = vcmask 589312
        %v2048 = vsel %vm2047, %v2046, %v2041
        %v2049 = vadd.s32 %v1988, 4294967224
        %v2050 = vlaneseq
        %v2051 = vshrl.u32 %v2050, 7
        %v2052 = vsub.s32 %v2049, %v2051
        %v2053 = vrot.slane %v1622, %v2052
        %vm2054 = vcmask 654912
        %v2055 = vsel %vm2054, %v2053, %v2048
        %v2056 = vadd.s32 %v1988, 4294967216
        %v2057 = vlaneseq
        %v2058 = vshrl.u32 %v2057, 7
        %v2059 = vsub.s32 %v2056, %v2058
        %v2060 = vrot.slane %v1624, %v2059
        %vm2061 = vcmask 720512
        %v2062 = vsel %vm2061, %v2060, %v2055
        %v2063 = vadd.s32 %v1988, 4294967208
        %v2064 = vlaneseq
        %v2065 = vshrl.u32 %v2064, 7
        %v2066 = vsub.s32 %v2063, %v2065
        %v2067 = vrot.slane %v1626, %v2066
        %vm2068 = vcmask 786112
        %v2069 = vsel %vm2068, %v2067, %v2062
        %v2070 = vadd.s32 %v1988, 4294967200
        %v2071 = vlaneseq
        %v2072 = vshrl.u32 %v2071, 7
        %v2073 = vsub.s32 %v2070, %v2072
        %v2074 = vrot.slane %v1628, %v2073
        %vm2075 = vcmask 851712
        %v2076 = vsel %vm2075, %v2074, %v2069
        %v2077 = vadd.s32 %v1988, 4294967192
        %v2078 = vlaneseq
        %v2079 = vshrl.u32 %v2078, 7
        %v2080 = vsub.s32 %v2077, %v2079
        %v2081 = vrot.slane %v1630, %v2080
        %vm2082 = vcmask 917312
        %v2083 = vsel %vm2082, %v2081, %v2076
        %v2084 = vadd.s32 %v1988, 4294967184
        %v2085 = vlaneseq
        %v2086 = vshrl.u32 %v2085, 7
        %v2087 = vsub.s32 %v2084, %v2086
        %v2088 = vrot.slane %v1632, %v2087
        %vm2089 = vcmask 982912
        %v2090 = vsel %vm2089, %v2088, %v2083
        %v2091 = vadd.s32 %v1988, 4294967176
        %v2092 = vlaneseq
        %v2093 = vshrl.u32 %v2092, 7
        %v2094 = vsub.s32 %v2091, %v2093
        %v2095 = vrot.slane %v1634, %v2094
        %vm2096 = vcmask 1048512
        %v2097 = vsel %vm2096, %v2095, %v2090
        %v2098 = vlaneseq
        %v2099 = vshrl.u32 %v2098, 7
        %v2100 = vsub.s32 %v1988, %v2099
        %v2101 = vrot.slane %v1636, %v2100
        %v2102 = vlaneseq
        %v2103 = vshrl.u32 %v2102, 7
        %v2104 = vsub.s32 %v1993, %v2103
        %v2105 = vrot.slane %v1638, %v2104
        %v2106 = vsel %vm1998, %v2105, %v2101
        %v2107 = vlaneseq
        %v2108 = vshrl.u32 %v2107, 7
        %v2109 = vsub.s32 %v2000, %v2108
        %v2110 = vrot.slane %v1640, %v2109
        %v2111 = vsel %vm2005, %v2110, %v2106
        %v2112 = vlaneseq
        %v2113 = vshrl.u32 %v2112, 7
        %v2114 = vsub.s32 %v2007, %v2113
        %v2115 = vrot.slane %v1642, %v2114
        %v2116 = vsel %vm2012, %v2115, %v2111
        %v2117 = vlaneseq
        %v2118 = vshrl.u32 %v2117, 7
        %v2119 = vsub.s32 %v2014, %v2118
        %v2120 = vrot.slane %v1644, %v2119
        %v2121 = vsel %vm2019, %v2120, %v2116
        %v2122 = vlaneseq
        %v2123 = vshrl.u32 %v2122, 7
        %v2124 = vsub.s32 %v2021, %v2123
        %v2125 = vrot.slane %v1646, %v2124
        %v2126 = vsel %vm2026, %v2125, %v2121
        %v2127 = vlaneseq
        %v2128 = vshrl.u32 %v2127, 7
        %v2129 = vsub.s32 %v2028, %v2128
        %v2130 = vrot.slane %v1648, %v2129
        %v2131 = vsel %vm2033, %v2130, %v2126
        %v2132 = vlaneseq
        %v2133 = vshrl.u32 %v2132, 7
        %v2134 = vsub.s32 %v2035, %v2133
        %v2135 = vrot.slane %v1650, %v2134
        %v2136 = vsel %vm2040, %v2135, %v2131
        %v2137 = vlaneseq
        %v2138 = vshrl.u32 %v2137, 7
        %v2139 = vsub.s32 %v2042, %v2138
        %v2140 = vrot.slane %v1652, %v2139
        %v2141 = vsel %vm2047, %v2140, %v2136
        %v2142 = vlaneseq
        %v2143 = vshrl.u32 %v2142, 7
        %v2144 = vsub.s32 %v2049, %v2143
        %v2145 = vrot.slane %v1654, %v2144
        %v2146 = vsel %vm2054, %v2145, %v2141
        %v2147 = vlaneseq
        %v2148 = vshrl.u32 %v2147, 7
        %v2149 = vsub.s32 %v2056, %v2148
        %v2150 = vrot.slane %v1656, %v2149
        %v2151 = vsel %vm2061, %v2150, %v2146
        %v2152 = vlaneseq
        %v2153 = vshrl.u32 %v2152, 7
        %v2154 = vsub.s32 %v2063, %v2153
        %v2155 = vrot.slane %v1658, %v2154
        %v2156 = vsel %vm2068, %v2155, %v2151
        %v2157 = vlaneseq
        %v2158 = vshrl.u32 %v2157, 7
        %v2159 = vsub.s32 %v2070, %v2158
        %v2160 = vrot.slane %v1660, %v2159
        %v2161 = vsel %vm2075, %v2160, %v2156
        %v2162 = vlaneseq
        %v2163 = vshrl.u32 %v2162, 7
        %v2164 = vsub.s32 %v2077, %v2163
        %v2165 = vrot.slane %v1662, %v2164
        %v2166 = vsel %vm2082, %v2165, %v2161
        %v2167 = vlaneseq
        %v2168 = vshrl.u32 %v2167, 7
        %v2169 = vsub.s32 %v2084, %v2168
        %v2170 = vrot.slane %v1664, %v2169
        %v2171 = vsel %vm2089, %v2170, %v2166
        %v2172 = vlaneseq
        %v2173 = vshrl.u32 %v2172, 7
        %v2174 = vsub.s32 %v2091, %v2173
        %v2175 = vrot.slane %v1666, %v2174
        %v2176 = vsel %vm2096, %v2175, %v2171
        %v2177 = vlaneseq
        %v2178 = vshrl.u32 %v2177, 7
        %v2179 = vsub.s32 %v1988, %v2178
        %v2180 = vrot.slane %v1668, %v2179
        %v2181 = vlaneseq
        %v2182 = vshrl.u32 %v2181, 7
        %v2183 = vsub.s32 %v1993, %v2182
        %v2184 = vrot.slane %v1670, %v2183
        %v2185 = vsel %vm1998, %v2184, %v2180
        %v2186 = vlaneseq
        %v2187 = vshrl.u32 %v2186, 7
        %v2188 = vsub.s32 %v2000, %v2187
        %v2189 = vrot.slane %v1672, %v2188
        %v2190 = vsel %vm2005, %v2189, %v2185
        %v2191 = vlaneseq
        %v2192 = vshrl.u32 %v2191, 7
        %v2193 = vsub.s32 %v2007, %v2192
        %v2194 = vrot.slane %v1674, %v2193
        %v2195 = vsel %vm2012, %v2194, %v2190
        %v2196 = vlaneseq
        %v2197 = vshrl.u32 %v2196, 7
        %v2198 = vsub.s32 %v2014, %v2197
        %v2199 = vrot.slane %v1676, %v2198
        %v2200 = vsel %vm2019, %v2199, %v2195
        %v2201 = vlaneseq
        %v2202 = vshrl.u32 %v2201, 7
        %v2203 = vsub.s32 %v2021, %v2202
        %v2204 = vrot.slane %v1678, %v2203
        %v2205 = vsel %vm2026, %v2204, %v2200
        %v2206 = vlaneseq
        %v2207 = vshrl.u32 %v2206, 7
        %v2208 = vsub.s32 %v2028, %v2207
        %v2209 = vrot.slane %v1680, %v2208
        %v2210 = vsel %vm2033, %v2209, %v2205
        %v2211 = vlaneseq
        %v2212 = vshrl.u32 %v2211, 7
        %v2213 = vsub.s32 %v2035, %v2212
        %v2214 = vrot.slane %v1682, %v2213
        %v2215 = vsel %vm2040, %v2214, %v2210
        %v2216 = vlaneseq
        %v2217 = vshrl.u32 %v2216, 7
        %v2218 = vsub.s32 %v2042, %v2217
        %v2219 = vrot.slane %v1684, %v2218
        %v2220 = vsel %vm2047, %v2219, %v2215
        %v2221 = vlaneseq
        %v2222 = vshrl.u32 %v2221, 7
        %v2223 = vsub.s32 %v2049, %v2222
        %v2224 = vrot.slane %v1686, %v2223
        %v2225 = vsel %vm2054, %v2224, %v2220
        %v2226 = vlaneseq
        %v2227 = vshrl.u32 %v2226, 7
        %v2228 = vsub.s32 %v2056, %v2227
        %v2229 = vrot.slane %v1688, %v2228
        %v2230 = vsel %vm2061, %v2229, %v2225
        %v2231 = vlaneseq
        %v2232 = vshrl.u32 %v2231, 7
        %v2233 = vsub.s32 %v2063, %v2232
        %v2234 = vrot.slane %v1690, %v2233
        %v2235 = vsel %vm2068, %v2234, %v2230
        %v2236 = vlaneseq
        %v2237 = vshrl.u32 %v2236, 7
        %v2238 = vsub.s32 %v2070, %v2237
        %v2239 = vrot.slane %v1692, %v2238
        %v2240 = vsel %vm2075, %v2239, %v2235
        %v2241 = vlaneseq
        %v2242 = vshrl.u32 %v2241, 7
        %v2243 = vsub.s32 %v2077, %v2242
        %v2244 = vrot.slane %v1694, %v2243
        %v2245 = vsel %vm2082, %v2244, %v2240
        %v2246 = vlaneseq
        %v2247 = vshrl.u32 %v2246, 7
        %v2248 = vsub.s32 %v2084, %v2247
        %v2249 = vrot.slane %v1696, %v2248
        %v2250 = vsel %vm2089, %v2249, %v2245
        %v2251 = vlaneseq
        %v2252 = vshrl.u32 %v2251, 7
        %v2253 = vsub.s32 %v2091, %v2252
        %v2254 = vrot.slane %v1698, %v2253
        %v2255 = vsel %vm2096, %v2254, %v2250
        %v2256 = vlaneseq
        %v2257 = vshrl.u32 %v2256, 7
        %v2258 = vsub.s32 %v1988, %v2257
        %v2259 = vrot.slane %v1700, %v2258
        %v2260 = vlaneseq
        %v2261 = vshrl.u32 %v2260, 7
        %v2262 = vsub.s32 %v1993, %v2261
        %v2263 = vrot.slane %v1702, %v2262
        %v2264 = vsel %vm1998, %v2263, %v2259
        %v2265 = vlaneseq
        %v2266 = vshrl.u32 %v2265, 7
        %v2267 = vsub.s32 %v2000, %v2266
        %v2268 = vrot.slane %v1704, %v2267
        %v2269 = vsel %vm2005, %v2268, %v2264
        %v2270 = vlaneseq
        %v2271 = vshrl.u32 %v2270, 7
        %v2272 = vsub.s32 %v2007, %v2271
        %v2273 = vrot.slane %v1706, %v2272
        %v2274 = vsel %vm2012, %v2273, %v2269
        %v2275 = vlaneseq
        %v2276 = vshrl.u32 %v2275, 7
        %v2277 = vsub.s32 %v2014, %v2276
        %v2278 = vrot.slane %v1708, %v2277
        %v2279 = vsel %vm2019, %v2278, %v2274
        %v2280 = vlaneseq
        %v2281 = vshrl.u32 %v2280, 7
        %v2282 = vsub.s32 %v2021, %v2281
        %v2283 = vrot.slane %v1710, %v2282
        %v2284 = vsel %vm2026, %v2283, %v2279
        %v2285 = vlaneseq
        %v2286 = vshrl.u32 %v2285, 7
        %v2287 = vsub.s32 %v2028, %v2286
        %v2288 = vrot.slane %v1712, %v2287
        %v2289 = vsel %vm2033, %v2288, %v2284
        %v2290 = vlaneseq
        %v2291 = vshrl.u32 %v2290, 7
        %v2292 = vsub.s32 %v2035, %v2291
        %v2293 = vrot.slane %v1714, %v2292
        %v2294 = vsel %vm2040, %v2293, %v2289
        %v2295 = vlaneseq
        %v2296 = vshrl.u32 %v2295, 7
        %v2297 = vsub.s32 %v2042, %v2296
        %v2298 = vrot.slane %v1716, %v2297
        %v2299 = vsel %vm2047, %v2298, %v2294
        %v2300 = vlaneseq
        %v2301 = vshrl.u32 %v2300, 7
        %v2302 = vsub.s32 %v2049, %v2301
        %v2303 = vrot.slane %v1718, %v2302
        %v2304 = vsel %vm2054, %v2303, %v2299
        %v2305 = vlaneseq
        %v2306 = vshrl.u32 %v2305, 7
        %v2307 = vsub.s32 %v2056, %v2306
        %v2308 = vrot.slane %v1720, %v2307
        %v2309 = vsel %vm2061, %v2308, %v2304
        %v2310 = vlaneseq
        %v2311 = vshrl.u32 %v2310, 7
        %v2312 = vsub.s32 %v2063, %v2311
        %v2313 = vrot.slane %v1722, %v2312
        %v2314 = vsel %vm2068, %v2313, %v2309
        %v2315 = vlaneseq
        %v2316 = vshrl.u32 %v2315, 7
        %v2317 = vsub.s32 %v2070, %v2316
        %v2318 = vrot.slane %v1724, %v2317
        %v2319 = vsel %vm2075, %v2318, %v2314
        %v2320 = vlaneseq
        %v2321 = vshrl.u32 %v2320, 7
        %v2322 = vsub.s32 %v2077, %v2321
        %v2323 = vrot.slane %v1726, %v2322
        %v2324 = vsel %vm2082, %v2323, %v2319
        %v2325 = vlaneseq
        %v2326 = vshrl.u32 %v2325, 7
        %v2327 = vsub.s32 %v2084, %v2326
        %v2328 = vrot.slane %v1728, %v2327
        %v2329 = vsel %vm2089, %v2328, %v2324
        %v2330 = vlaneseq
        %v2331 = vshrl.u32 %v2330, 7
        %v2332 = vsub.s32 %v2091, %v2331
        %v2333 = vrot.slane %v1730, %v2332
        %v2334 = vsel %vm2096, %v2333, %v2329
        %v2335 = vlaneseq
        %v2336 = vshrl.u32 %v2335, 7
        %v2337 = vsub.s32 %v1988, %v2336
        %v2338 = vrot.slane %v1732, %v2337
        %v2339 = vlaneseq
        %v2340 = vshrl.u32 %v2339, 7
        %v2341 = vsub.s32 %v1993, %v2340
        %v2342 = vrot.slane %v1734, %v2341
        %v2343 = vsel %vm1998, %v2342, %v2338
        %v2344 = vlaneseq
        %v2345 = vshrl.u32 %v2344, 7
        %v2346 = vsub.s32 %v2000, %v2345
        %v2347 = vrot.slane %v1736, %v2346
        %v2348 = vsel %vm2005, %v2347, %v2343
        %v2349 = vlaneseq
        %v2350 = vshrl.u32 %v2349, 7
        %v2351 = vsub.s32 %v2007, %v2350
        %v2352 = vrot.slane %v1738, %v2351
        %v2353 = vsel %vm2012, %v2352, %v2348
        %v2354 = vlaneseq
        %v2355 = vshrl.u32 %v2354, 7
        %v2356 = vsub.s32 %v2014, %v2355
        %v2357 = vrot.slane %v1740, %v2356
        %v2358 = vsel %vm2019, %v2357, %v2353
        %v2359 = vlaneseq
        %v2360 = vshrl.u32 %v2359, 7
        %v2361 = vsub.s32 %v2021, %v2360
        %v2362 = vrot.slane %v1742, %v2361
        %v2363 = vsel %vm2026, %v2362, %v2358
        %v2364 = vlaneseq
        %v2365 = vshrl.u32 %v2364, 7
        %v2366 = vsub.s32 %v2028, %v2365
        %v2367 = vrot.slane %v1744, %v2366
        %v2368 = vsel %vm2033, %v2367, %v2363
        %v2369 = vlaneseq
        %v2370 = vshrl.u32 %v2369, 7
        %v2371 = vsub.s32 %v2035, %v2370
        %v2372 = vrot.slane %v1746, %v2371
        %v2373 = vsel %vm2040, %v2372, %v2368
        %v2374 = vlaneseq
        %v2375 = vshrl.u32 %v2374, 7
        %v2376 = vsub.s32 %v2042, %v2375
        %v2377 = vrot.slane %v1748, %v2376
        %v2378 = vsel %vm2047, %v2377, %v2373
        %v2379 = vlaneseq
        %v2380 = vshrl.u32 %v2379, 7
        %v2381 = vsub.s32 %v2049, %v2380
        %v2382 = vrot.slane %v1750, %v2381
        %v2383 = vsel %vm2054, %v2382, %v2378
        %v2384 = vlaneseq
        %v2385 = vshrl.u32 %v2384, 7
        %v2386 = vsub.s32 %v2056, %v2385
        %v2387 = vrot.slane %v1752, %v2386
        %v2388 = vsel %vm2061, %v2387, %v2383
        %v2389 = vlaneseq
        %v2390 = vshrl.u32 %v2389, 7
        %v2391 = vsub.s32 %v2063, %v2390
        %v2392 = vrot.slane %v1754, %v2391
        %v2393 = vsel %vm2068, %v2392, %v2388
        %v2394 = vlaneseq
        %v2395 = vshrl.u32 %v2394, 7
        %v2396 = vsub.s32 %v2070, %v2395
        %v2397 = vrot.slane %v1756, %v2396
        %v2398 = vsel %vm2075, %v2397, %v2393
        %v2399 = vlaneseq
        %v2400 = vshrl.u32 %v2399, 7
        %v2401 = vsub.s32 %v2077, %v2400
        %v2402 = vrot.slane %v1758, %v2401
        %v2403 = vsel %vm2082, %v2402, %v2398
        %v2404 = vlaneseq
        %v2405 = vshrl.u32 %v2404, 7
        %v2406 = vsub.s32 %v2084, %v2405
        %v2407 = vrot.slane %v1760, %v2406
        %v2408 = vsel %vm2089, %v2407, %v2403
        %v2409 = vlaneseq
        %v2410 = vshrl.u32 %v2409, 7
        %v2411 = vsub.s32 %v2091, %v2410
        %v2412 = vrot.slane %v1762, %v2411
        %v2413 = vsel %vm2096, %v2412, %v2408
        %v2414 = vlaneseq
        %v2415 = vshrl.u32 %v2414, 7
        %v2416 = vsub.s32 %v1988, %v2415
        %v2417 = vrot.slane %v1764, %v2416
        %v2418 = vlaneseq
        %v2419 = vshrl.u32 %v2418, 7
        %v2420 = vsub.s32 %v1993, %v2419
        %v2421 = vrot.slane %v1766, %v2420
        %v2422 = vsel %vm1998, %v2421, %v2417
        %v2423 = vlaneseq
        %v2424 = vshrl.u32 %v2423, 7
        %v2425 = vsub.s32 %v2000, %v2424
        %v2426 = vrot.slane %v1768, %v2425
        %v2427 = vsel %vm2005, %v2426, %v2422
        %v2428 = vlaneseq
        %v2429 = vshrl.u32 %v2428, 7
        %v2430 = vsub.s32 %v2007, %v2429
        %v2431 = vrot.slane %v1770, %v2430
        %v2432 = vsel %vm2012, %v2431, %v2427
        %v2433 = vlaneseq
        %v2434 = vshrl.u32 %v2433, 7
        %v2435 = vsub.s32 %v2014, %v2434
        %v2436 = vrot.slane %v1772, %v2435
        %v2437 = vsel %vm2019, %v2436, %v2432
        %v2438 = vlaneseq
        %v2439 = vshrl.u32 %v2438, 7
        %v2440 = vsub.s32 %v2021, %v2439
        %v2441 = vrot.slane %v1774, %v2440
        %v2442 = vsel %vm2026, %v2441, %v2437
        %v2443 = vlaneseq
        %v2444 = vshrl.u32 %v2443, 7
        %v2445 = vsub.s32 %v2028, %v2444
        %v2446 = vrot.slane %v1776, %v2445
        %v2447 = vsel %vm2033, %v2446, %v2442
        %v2448 = vlaneseq
        %v2449 = vshrl.u32 %v2448, 7
        %v2450 = vsub.s32 %v2035, %v2449
        %v2451 = vrot.slane %v1778, %v2450
        %v2452 = vsel %vm2040, %v2451, %v2447
        %v2453 = vlaneseq
        %v2454 = vshrl.u32 %v2453, 7
        %v2455 = vsub.s32 %v2042, %v2454
        %v2456 = vrot.slane %v1780, %v2455
        %v2457 = vsel %vm2047, %v2456, %v2452
        %v2458 = vlaneseq
        %v2459 = vshrl.u32 %v2458, 7
        %v2460 = vsub.s32 %v2049, %v2459
        %v2461 = vrot.slane %v1782, %v2460
        %v2462 = vsel %vm2054, %v2461, %v2457
        %v2463 = vlaneseq
        %v2464 = vshrl.u32 %v2463, 7
        %v2465 = vsub.s32 %v2056, %v2464
        %v2466 = vrot.slane %v1784, %v2465
        %v2467 = vsel %vm2061, %v2466, %v2462
        %v2468 = vlaneseq
        %v2469 = vshrl.u32 %v2468, 7
        %v2470 = vsub.s32 %v2063, %v2469
        %v2471 = vrot.slane %v1786, %v2470
        %v2472 = vsel %vm2068, %v2471, %v2467
        %v2473 = vlaneseq
        %v2474 = vshrl.u32 %v2473, 7
        %v2475 = vsub.s32 %v2070, %v2474
        %v2476 = vrot.slane %v1788, %v2475
        %v2477 = vsel %vm2075, %v2476, %v2472
        %v2478 = vlaneseq
        %v2479 = vshrl.u32 %v2478, 7
        %v2480 = vsub.s32 %v2077, %v2479
        %v2481 = vrot.slane %v1790, %v2480
        %v2482 = vsel %vm2082, %v2481, %v2477
        %v2483 = vlaneseq
        %v2484 = vshrl.u32 %v2483, 7
        %v2485 = vsub.s32 %v2084, %v2484
        %v2486 = vrot.slane %v1792, %v2485
        %v2487 = vsel %vm2089, %v2486, %v2482
        %v2488 = vlaneseq
        %v2489 = vshrl.u32 %v2488, 7
        %v2490 = vsub.s32 %v2091, %v2489
        %v2491 = vrot.slane %v1794, %v2490
        %v2492 = vsel %vm2096, %v2491, %v2487
        %v2493 = vlaneseq
        %v2494 = vshrl.u32 %v2493, 7
        %v2495 = vsub.s32 %v1988, %v2494
        %v2496 = vrot.slane %v1796, %v2495
        %v2497 = vlaneseq
        %v2498 = vshrl.u32 %v2497, 7
        %v2499 = vsub.s32 %v1993, %v2498
        %v2500 = vrot.slane %v1798, %v2499
        %v2501 = vsel %vm1998, %v2500, %v2496
        %v2502 = vlaneseq
        %v2503 = vshrl.u32 %v2502, 7
        %v2504 = vsub.s32 %v2000, %v2503
        %v2505 = vrot.slane %v1800, %v2504
        %v2506 = vsel %vm2005, %v2505, %v2501
        %v2507 = vlaneseq
        %v2508 = vshrl.u32 %v2507, 7
        %v2509 = vsub.s32 %v2007, %v2508
        %v2510 = vrot.slane %v1802, %v2509
        %v2511 = vsel %vm2012, %v2510, %v2506
        %v2512 = vlaneseq
        %v2513 = vshrl.u32 %v2512, 7
        %v2514 = vsub.s32 %v2014, %v2513
        %v2515 = vrot.slane %v1804, %v2514
        %v2516 = vsel %vm2019, %v2515, %v2511
        %v2517 = vlaneseq
        %v2518 = vshrl.u32 %v2517, 7
        %v2519 = vsub.s32 %v2021, %v2518
        %v2520 = vrot.slane %v1806, %v2519
        %v2521 = vsel %vm2026, %v2520, %v2516
        %v2522 = vlaneseq
        %v2523 = vshrl.u32 %v2522, 7
        %v2524 = vsub.s32 %v2028, %v2523
        %v2525 = vrot.slane %v1808, %v2524
        %v2526 = vsel %vm2033, %v2525, %v2521
        %v2527 = vlaneseq
        %v2528 = vshrl.u32 %v2527, 7
        %v2529 = vsub.s32 %v2035, %v2528
        %v2530 = vrot.slane %v1810, %v2529
        %v2531 = vsel %vm2040, %v2530, %v2526
        %v2532 = vlaneseq
        %v2533 = vshrl.u32 %v2532, 7
        %v2534 = vsub.s32 %v2042, %v2533
        %v2535 = vrot.slane %v1812, %v2534
        %v2536 = vsel %vm2047, %v2535, %v2531
        %v2537 = vlaneseq
        %v2538 = vshrl.u32 %v2537, 7
        %v2539 = vsub.s32 %v2049, %v2538
        %v2540 = vrot.slane %v1814, %v2539
        %v2541 = vsel %vm2054, %v2540, %v2536
        %v2542 = vlaneseq
        %v2543 = vshrl.u32 %v2542, 7
        %v2544 = vsub.s32 %v2056, %v2543
        %v2545 = vrot.slane %v1816, %v2544
        %v2546 = vsel %vm2061, %v2545, %v2541
        %v2547 = vlaneseq
        %v2548 = vshrl.u32 %v2547, 7
        %v2549 = vsub.s32 %v2063, %v2548
        %v2550 = vrot.slane %v1818, %v2549
        %v2551 = vsel %vm2068, %v2550, %v2546
        %v2552 = vlaneseq
        %v2553 = vshrl.u32 %v2552, 7
        %v2554 = vsub.s32 %v2070, %v2553
        %v2555 = vrot.slane %v1820, %v2554
        %v2556 = vsel %vm2075, %v2555, %v2551
        %v2557 = vlaneseq
        %v2558 = vshrl.u32 %v2557, 7
        %v2559 = vsub.s32 %v2077, %v2558
        %v2560 = vrot.slane %v1822, %v2559
        %v2561 = vsel %vm2082, %v2560, %v2556
        %v2562 = vlaneseq
        %v2563 = vshrl.u32 %v2562, 7
        %v2564 = vsub.s32 %v2084, %v2563
        %v2565 = vrot.slane %v1824, %v2564
        %v2566 = vsel %vm2089, %v2565, %v2561
        %v2567 = vlaneseq
        %v2568 = vshrl.u32 %v2567, 7
        %v2569 = vsub.s32 %v2091, %v2568
        %v2570 = vrot.slane %v1826, %v2569
        %v2571 = vsel %vm2096, %v2570, %v2566
        %v2572 = vlaneseq
        %v2573 = vshrl.u32 %v2572, 7
        %v2574 = vsub.s32 %v1988, %v2573
        %v2575 = vrot.slane %v1828, %v2574
        %v2576 = vlaneseq
        %v2577 = vshrl.u32 %v2576, 7
        %v2578 = vsub.s32 %v1993, %v2577
        %v2579 = vrot.slane %v1830, %v2578
        %v2580 = vsel %vm1998, %v2579, %v2575
        %v2581 = vlaneseq
        %v2582 = vshrl.u32 %v2581, 7
        %v2583 = vsub.s32 %v2000, %v2582
        %v2584 = vrot.slane %v1832, %v2583
        %v2585 = vsel %vm2005, %v2584, %v2580
        %v2586 = vlaneseq
        %v2587 = vshrl.u32 %v2586, 7
        %v2588 = vsub.s32 %v2007, %v2587
        %v2589 = vrot.slane %v1834, %v2588
        %v2590 = vsel %vm2012, %v2589, %v2585
        %v2591 = vlaneseq
        %v2592 = vshrl.u32 %v2591, 7
        %v2593 = vsub.s32 %v2014, %v2592
        %v2594 = vrot.slane %v1836, %v2593
        %v2595 = vsel %vm2019, %v2594, %v2590
        %v2596 = vlaneseq
        %v2597 = vshrl.u32 %v2596, 7
        %v2598 = vsub.s32 %v2021, %v2597
        %v2599 = vrot.slane %v1838, %v2598
        %v2600 = vsel %vm2026, %v2599, %v2595
        %v2601 = vlaneseq
        %v2602 = vshrl.u32 %v2601, 7
        %v2603 = vsub.s32 %v2028, %v2602
        %v2604 = vrot.slane %v1840, %v2603
        %v2605 = vsel %vm2033, %v2604, %v2600
        %v2606 = vlaneseq
        %v2607 = vshrl.u32 %v2606, 7
        %v2608 = vsub.s32 %v2035, %v2607
        %v2609 = vrot.slane %v1842, %v2608
        %v2610 = vsel %vm2040, %v2609, %v2605
        %v2611 = vlaneseq
        %v2612 = vshrl.u32 %v2611, 7
        %v2613 = vsub.s32 %v2042, %v2612
        %v2614 = vrot.slane %v1844, %v2613
        %v2615 = vsel %vm2047, %v2614, %v2610
        %v2616 = vlaneseq
        %v2617 = vshrl.u32 %v2616, 7
        %v2618 = vsub.s32 %v2049, %v2617
        %v2619 = vrot.slane %v1846, %v2618
        %v2620 = vsel %vm2054, %v2619, %v2615
        %v2621 = vlaneseq
        %v2622 = vshrl.u32 %v2621, 7
        %v2623 = vsub.s32 %v2056, %v2622
        %v2624 = vrot.slane %v1848, %v2623
        %v2625 = vsel %vm2061, %v2624, %v2620
        %v2626 = vlaneseq
        %v2627 = vshrl.u32 %v2626, 7
        %v2628 = vsub.s32 %v2063, %v2627
        %v2629 = vrot.slane %v1850, %v2628
        %v2630 = vsel %vm2068, %v2629, %v2625
        %v2631 = vlaneseq
        %v2632 = vshrl.u32 %v2631, 7
        %v2633 = vsub.s32 %v2070, %v2632
        %v2634 = vrot.slane %v1852, %v2633
        %v2635 = vsel %vm2075, %v2634, %v2630
        %v2636 = vlaneseq
        %v2637 = vshrl.u32 %v2636, 7
        %v2638 = vsub.s32 %v2077, %v2637
        %v2639 = vrot.slane %v1854, %v2638
        %v2640 = vsel %vm2082, %v2639, %v2635
        %v2641 = vlaneseq
        %v2642 = vshrl.u32 %v2641, 7
        %v2643 = vsub.s32 %v2084, %v2642
        %v2644 = vrot.slane %v1856, %v2643
        %v2645 = vsel %vm2089, %v2644, %v2640
        %v2646 = vlaneseq
        %v2647 = vshrl.u32 %v2646, 7
        %v2648 = vsub.s32 %v2091, %v2647
        %v2649 = vrot.slane %v1858, %v2648
        %v2650 = vsel %vm2096, %v2649, %v2645
        %vm2651 = vcmask 1041409
        %v2652 = vsel %vm2651, %v2176, %v2097
        %vm2653 = vcmask 1042434
        %v2654 = vsel %vm2653, %v2255, %v2652
        %vm2655 = vcmask 1043459
        %v2656 = vsel %vm2655, %v2334, %v2654
        %vm2657 = vcmask 1044484
        %v2658 = vsel %vm2657, %v2413, %v2656
        %vm2659 = vcmask 1045509
        %v2660 = vsel %vm2659, %v2492, %v2658
        %vm2661 = vcmask 1046534
        %v2662 = vsel %vm2661, %v2571, %v2660
        %vm2663 = vcmask 1047559
        %v2664 = vsel %vm2663, %v2650, %v2662
        %v2666 = vadd.f32 %v1474, %v2664
        %2667 = vst [vmem:[#allocation2] sm:$0xff] %v2666
        %v2668 = vld [vmem:[#allocation3] sm:$0xff]
        %v2669 = vld [vmem:[%s1405] sm:$0xff]
        %v2670 = vld [vmem:[%s1405 + $0x8] sm:$0xff]
        %v2671 = vld [vmem:[%s1405 + $0x10] sm:$0xff]
        %v2672 = vld [vmem:[%s1405 + $0x18] sm:$0xff]
        %v2673 = vld [vmem:[%s1405 + $0x20] sm:$0xff]
        %v2674 = vld [vmem:[%s1405 + $0x28] sm:$0xff]
        %v2675 = vld [vmem:[%s1405 + $0x30] sm:$0xff]
        %v2676 = vld [vmem:[%s1405 + $0x38] sm:$0xff]
        %v2677 = vld [vmem:[%s1405 + $0x40] sm:$0xff]
        %v2678 = vld [vmem:[%s1405 + $0x48] sm:$0xff]
        %v2679 = vld [vmem:[%s1405 + $0x50] sm:$0xff]
        %v2680 = vld [vmem:[%s1405 + $0x58] sm:$0xff]
        %v2681 = vld [vmem:[%s1405 + $0x60] sm:$0xff]
        %v2682 = vld [vmem:[%s1405 + $0x68] sm:$0xff]
        %v2683 = vld [vmem:[%s1405 + $0x70] sm:$0xff]
        %v2684 = vld [vmem:[%s1405 + $0x78] sm:$0xff]
        %v2685 = vld [vmem:[%s1405 + $0x80] sm:$0xff]
        %v2686 = vld [vmem:[%s1405 + $0x88] sm:$0xff]
        %v2687 = vld [vmem:[%s1405 + $0x90] sm:$0xff]
        %v2688 = vld [vmem:[%s1405 + $0x98] sm:$0xff]
        %v2689 = vld [vmem:[%s1405 + $0xa0] sm:$0xff]
        %v2690 = vld [vmem:[%s1405 + $0xa8] sm:$0xff]
        %v2691 = vld [vmem:[%s1405 + $0xb0] sm:$0xff]
        %v2692 = vld [vmem:[%s1405 + $0xb8] sm:$0xff]
        %v2693 = vld [vmem:[%s1405 + $0xc0] sm:$0xff]
        %v2694 = vld [vmem:[%s1405 + $0xc8] sm:$0xff]
        %v2695 = vld [vmem:[%s1405 + $0xd0] sm:$0xff]
        %v2696 = vld [vmem:[%s1405 + $0xd8] sm:$0xff]
        %v2697 = vld [vmem:[%s1405 + $0xe0] sm:$0xff]
        %v2698 = vld [vmem:[%s1405 + $0xe8] sm:$0xff]
        %v2699 = vld [vmem:[%s1405 + $0xf0] sm:$0xff]
        %v2700 = vld [vmem:[%s1405 + $0xf8] sm:$0xff]
        %v2701 = vld [vmem:[%s1405 + $0x100] sm:$0xff]
        %v2702 = vld [vmem:[%s1405 + $0x108] sm:$0xff]
        %v2703 = vld [vmem:[%s1405 + $0x110] sm:$0xff]
        %v2704 = vld [vmem:[%s1405 + $0x118] sm:$0xff]
        %v2705 = vld [vmem:[%s1405 + $0x120] sm:$0xff]
        %v2706 = vld [vmem:[%s1405 + $0x128] sm:$0xff]
        %v2707 = vld [vmem:[%s1405 + $0x130] sm:$0xff]
        %v2708 = vld [vmem:[%s1405 + $0x138] sm:$0xff]
        %v2709 = vld [vmem:[%s1405 + $0x140] sm:$0xff]
        %v2710 = vld [vmem:[%s1405 + $0x148] sm:$0xff]
        %v2711 = vld [vmem:[%s1405 + $0x150] sm:$0xff]
        %v2712 = vld [vmem:[%s1405 + $0x158] sm:$0xff]
        %v2713 = vld [vmem:[%s1405 + $0x160] sm:$0xff]
        %v2714 = vld [vmem:[%s1405 + $0x168] sm:$0xff]
        %v2715 = vld [vmem:[%s1405 + $0x170] sm:$0xff]
        %v2716 = vld [vmem:[%s1405 + $0x178] sm:$0xff]
        %v2717 = vld [vmem:[%s1405 + $0x180] sm:$0xff]
        %v2718 = vld [vmem:[%s1405 + $0x188] sm:$0xff]
        %v2719 = vld [vmem:[%s1405 + $0x190] sm:$0xff]
        %v2720 = vld [vmem:[%s1405 + $0x198] sm:$0xff]
        %v2721 = vld [vmem:[%s1405 + $0x1a0] sm:$0xff]
        %v2722 = vld [vmem:[%s1405 + $0x1a8] sm:$0xff]
        %v2723 = vld [vmem:[%s1405 + $0x1b0] sm:$0xff]
        %v2724 = vld [vmem:[%s1405 + $0x1b8] sm:$0xff]
        %v2725 = vld [vmem:[%s1405 + $0x1c0] sm:$0xff]
        %v2726 = vld [vmem:[%s1405 + $0x1c8] sm:$0xff]
        %v2727 = vld [vmem:[%s1405 + $0x1d0] sm:$0xff]
        %v2728 = vld [vmem:[%s1405 + $0x1d8] sm:$0xff]
        %v2729 = vld [vmem:[%s1405 + $0x1e0] sm:$0xff]
        %v2730 = vld [vmem:[%s1405 + $0x1e8] sm:$0xff]
        %v2731 = vld [vmem:[%s1405 + $0x1f0] sm:$0xff]
        %v2732 = vld [vmem:[%s1405 + $0x1f8] sm:$0xff]
        %v2733 = vld [vmem:[%s1405 + $0x200] sm:$0xff]
        %v2734 = vld [vmem:[%s1405 + $0x208] sm:$0xff]
        %v2735 = vld [vmem:[%s1405 + $0x210] sm:$0xff]
        %v2736 = vld [vmem:[%s1405 + $0x218] sm:$0xff]
        %v2737 = vld [vmem:[%s1405 + $0x220] sm:$0xff]
        %v2738 = vld [vmem:[%s1405 + $0x228] sm:$0xff]
        %v2739 = vld [vmem:[%s1405 + $0x230] sm:$0xff]
        %v2740 = vld [vmem:[%s1405 + $0x238] sm:$0xff]
        %v2741 = vld [vmem:[%s1405 + $0x240] sm:$0xff]
        %v2742 = vld [vmem:[%s1405 + $0x248] sm:$0xff]
        %v2743 = vld [vmem:[%s1405 + $0x250] sm:$0xff]
        %v2744 = vld [vmem:[%s1405 + $0x258] sm:$0xff]
        %v2745 = vld [vmem:[%s1405 + $0x260] sm:$0xff]
        %v2746 = vld [vmem:[%s1405 + $0x268] sm:$0xff]
        %v2747 = vld [vmem:[%s1405 + $0x270] sm:$0xff]
        %v2748 = vld [vmem:[%s1405 + $0x278] sm:$0xff]
        %v2749 = vld [vmem:[%s1405 + $0x280] sm:$0xff]
        %v2750 = vld [vmem:[%s1405 + $0x288] sm:$0xff]
        %v2751 = vld [vmem:[%s1405 + $0x290] sm:$0xff]
        %v2752 = vld [vmem:[%s1405 + $0x298] sm:$0xff]
        %v2753 = vld [vmem:[%s1405 + $0x2a0] sm:$0xff]
        %v2754 = vld [vmem:[%s1405 + $0x2a8] sm:$0xff]
        %v2755 = vld [vmem:[%s1405 + $0x2b0] sm:$0xff]
        %v2756 = vld [vmem:[%s1405 + $0x2b8] sm:$0xff]
        %v2757 = vld [vmem:[%s1405 + $0x2c0] sm:$0xff]
        %v2758 = vld [vmem:[%s1405 + $0x2c8] sm:$0xff]
        %v2759 = vld [vmem:[%s1405 + $0x2d0] sm:$0xff]
        %v2760 = vld [vmem:[%s1405 + $0x2d8] sm:$0xff]
        %v2761 = vld [vmem:[%s1405 + $0x2e0] sm:$0xff]
        %v2762 = vld [vmem:[%s1405 + $0x2e8] sm:$0xff]
        %v2763 = vld [vmem:[%s1405 + $0x2f0] sm:$0xff]
        %v2764 = vld [vmem:[%s1405 + $0x2f8] sm:$0xff]
        %v2765 = vld [vmem:[%s1405 + $0x300] sm:$0xff]
        %v2766 = vld [vmem:[%s1405 + $0x308] sm:$0xff]
        %v2767 = vld [vmem:[%s1405 + $0x310] sm:$0xff]
        %v2768 = vld [vmem:[%s1405 + $0x318] sm:$0xff]
        %v2769 = vld [vmem:[%s1405 + $0x320] sm:$0xff]
        %v2770 = vld [vmem:[%s1405 + $0x328] sm:$0xff]
        %v2771 = vld [vmem:[%s1405 + $0x330] sm:$0xff]
        %v2772 = vld [vmem:[%s1405 + $0x338] sm:$0xff]
        %v2773 = vld [vmem:[%s1405 + $0x340] sm:$0xff]
        %v2774 = vld [vmem:[%s1405 + $0x348] sm:$0xff]
        %v2775 = vld [vmem:[%s1405 + $0x350] sm:$0xff]
        %v2776 = vld [vmem:[%s1405 + $0x358] sm:$0xff]
        %v2777 = vld [vmem:[%s1405 + $0x360] sm:$0xff]
        %v2778 = vld [vmem:[%s1405 + $0x368] sm:$0xff]
        %v2779 = vld [vmem:[%s1405 + $0x370] sm:$0xff]
        %v2780 = vld [vmem:[%s1405 + $0x378] sm:$0xff]
        %v2781 = vld [vmem:[%s1405 + $0x380] sm:$0xff]
        %v2782 = vld [vmem:[%s1405 + $0x388] sm:$0xff]
        %v2783 = vld [vmem:[%s1405 + $0x390] sm:$0xff]
        %v2784 = vld [vmem:[%s1405 + $0x398] sm:$0xff]
        %v2785 = vld [vmem:[%s1405 + $0x3a0] sm:$0xff]
        %v2786 = vld [vmem:[%s1405 + $0x3a8] sm:$0xff]
        %v2787 = vld [vmem:[%s1405 + $0x3b0] sm:$0xff]
        %v2788 = vld [vmem:[%s1405 + $0x3b8] sm:$0xff]
        %v2789 = vld [vmem:[%s1405 + $0x3c0] sm:$0xff]
        %v2790 = vld [vmem:[%s1405 + $0x3c8] sm:$0xff]
        %v2791 = vld [vmem:[%s1405 + $0x3d0] sm:$0xff]
        %v2792 = vld [vmem:[%s1405 + $0x3d8] sm:$0xff]
        %v2793 = vld [vmem:[%s1405 + $0x3e0] sm:$0xff]
        %v2794 = vld [vmem:[%s1405 + $0x3e8] sm:$0xff]
        %v2795 = vld [vmem:[%s1405 + $0x3f0] sm:$0xff]
        %v2796 = vld [vmem:[%s1405 + $0x3f8] sm:$0xff]
        %2797 = vadd.xlane.f32.xlu0 %v2669
        %v2798 = vpop.xlane.xlu0 %2797
        %2799 = vadd.xlane.f32.xlu0 %v2670
        %v2800 = vpop.xlane.xlu0 %2799
        %2801 = vadd.xlane.f32.xlu0 %v2671
        %v2802 = vpop.xlane.xlu0 %2801
        %2803 = vadd.xlane.f32.xlu0 %v2672
        %v2804 = vpop.xlane.xlu0 %2803
        %2805 = vadd.xlane.f32.xlu0 %v2673
        %v2806 = vpop.xlane.xlu0 %2805
        %2807 = vadd.xlane.f32.xlu0 %v2674
        %v2808 = vpop.xlane.xlu0 %2807
        %2809 = vadd.xlane.f32.xlu0 %v2675
        %v2810 = vpop.xlane.xlu0 %2809
        %2811 = vadd.xlane.f32.xlu0 %v2676
        %v2812 = vpop.xlane.xlu0 %2811
        %2813 = vadd.xlane.f32.xlu0 %v2677
        %v2814 = vpop.xlane.xlu0 %2813
        %2815 = vadd.xlane.f32.xlu0 %v2678
        %v2816 = vpop.xlane.xlu0 %2815
        %2817 = vadd.xlane.f32.xlu0 %v2679
        %v2818 = vpop.xlane.xlu0 %2817
        %2819 = vadd.xlane.f32.xlu0 %v2680
        %v2820 = vpop.xlane.xlu0 %2819
        %2821 = vadd.xlane.f32.xlu0 %v2681
        %v2822 = vpop.xlane.xlu0 %2821
        %2823 = vadd.xlane.f32.xlu0 %v2682
        %v2824 = vpop.xlane.xlu0 %2823
        %2825 = vadd.xlane.f32.xlu0 %v2683
        %v2826 = vpop.xlane.xlu0 %2825
        %2827 = vadd.xlane.f32.xlu0 %v2684
        %v2828 = vpop.xlane.xlu0 %2827
        %2829 = vadd.xlane.f32.xlu0 %v2685
        %v2830 = vpop.xlane.xlu0 %2829
        %2831 = vadd.xlane.f32.xlu0 %v2686
        %v2832 = vpop.xlane.xlu0 %2831
        %2833 = vadd.xlane.f32.xlu0 %v2687
        %v2834 = vpop.xlane.xlu0 %2833
        %2835 = vadd.xlane.f32.xlu0 %v2688
        %v2836 = vpop.xlane.xlu0 %2835
        %2837 = vadd.xlane.f32.xlu0 %v2689
        %v2838 = vpop.xlane.xlu0 %2837
        %2839 = vadd.xlane.f32.xlu0 %v2690
        %v2840 = vpop.xlane.xlu0 %2839
        %2841 = vadd.xlane.f32.xlu0 %v2691
        %v2842 = vpop.xlane.xlu0 %2841
        %2843 = vadd.xlane.f32.xlu0 %v2692
        %v2844 = vpop.xlane.xlu0 %2843
        %2845 = vadd.xlane.f32.xlu0 %v2693
        %v2846 = vpop.xlane.xlu0 %2845
        %2847 = vadd.xlane.f32.xlu0 %v2694
        %v2848 = vpop.xlane.xlu0 %2847
        %2849 = vadd.xlane.f32.xlu0 %v2695
        %v2850 = vpop.xlane.xlu0 %2849
        %2851 = vadd.xlane.f32.xlu0 %v2696
        %v2852 = vpop.xlane.xlu0 %2851
        %2853 = vadd.xlane.f32.xlu0 %v2697
        %v2854 = vpop.xlane.xlu0 %2853
        %2855 = vadd.xlane.f32.xlu0 %v2698
        %v2856 = vpop.xlane.xlu0 %2855
        %2857 = vadd.xlane.f32.xlu0 %v2699
        %v2858 = vpop.xlane.xlu0 %2857
        %2859 = vadd.xlane.f32.xlu0 %v2700
        %v2860 = vpop.xlane.xlu0 %2859
        %2861 = vadd.xlane.f32.xlu0 %v2701
        %v2862 = vpop.xlane.xlu0 %2861
        %2863 = vadd.xlane.f32.xlu0 %v2702
        %v2864 = vpop.xlane.xlu0 %2863
        %2865 = vadd.xlane.f32.xlu0 %v2703
        %v2866 = vpop.xlane.xlu0 %2865
        %2867 = vadd.xlane.f32.xlu0 %v2704
        %v2868 = vpop.xlane.xlu0 %2867
        %2869 = vadd.xlane.f32.xlu0 %v2705
        %v2870 = vpop.xlane.xlu0 %2869
        %2871 = vadd.xlane.f32.xlu0 %v2706
        %v2872 = vpop.xlane.xlu0 %2871
        %2873 = vadd.xlane.f32.xlu0 %v2707
        %v2874 = vpop.xlane.xlu0 %2873
        %2875 = vadd.xlane.f32.xlu0 %v2708
        %v2876 = vpop.xlane.xlu0 %2875
        %2877 = vadd.xlane.f32.xlu0 %v2709
        %v2878 = vpop.xlane.xlu0 %2877
        %2879 = vadd.xlane.f32.xlu0 %v2710
        %v2880 = vpop.xlane.xlu0 %2879
        %2881 = vadd.xlane.f32.xlu0 %v2711
        %v2882 = vpop.xlane.xlu0 %2881
        %2883 = vadd.xlane.f32.xlu0 %v2712
        %v2884 = vpop.xlane.xlu0 %2883
        %2885 = vadd.xlane.f32.xlu0 %v2713
        %v2886 = vpop.xlane.xlu0 %2885
        %2887 = vadd.xlane.f32.xlu0 %v2714
        %v2888 = vpop.xlane.xlu0 %2887
        %2889 = vadd.xlane.f32.xlu0 %v2715
        %v2890 = vpop.xlane.xlu0 %2889
        %2891 = vadd.xlane.f32.xlu0 %v2716
        %v2892 = vpop.xlane.xlu0 %2891
        %2893 = vadd.xlane.f32.xlu0 %v2717
        %v2894 = vpop.xlane.xlu0 %2893
        %2895 = vadd.xlane.f32.xlu0 %v2718
        %v2896 = vpop.xlane.xlu0 %2895
        %2897 = vadd.xlane.f32.xlu0 %v2719
        %v2898 = vpop.xlane.xlu0 %2897
        %2899 = vadd.xlane.f32.xlu0 %v2720
        %v2900 = vpop.xlane.xlu0 %2899
        %2901 = vadd.xlane.f32.xlu0 %v2721
        %v2902 = vpop.xlane.xlu0 %2901
        %2903 = vadd.xlane.f32.xlu0 %v2722
        %v2904 = vpop.xlane.xlu0 %2903
        %2905 = vadd.xlane.f32.xlu0 %v2723
        %v2906 = vpop.xlane.xlu0 %2905
        %2907 = vadd.xlane.f32.xlu0 %v2724
        %v2908 = vpop.xlane.xlu0 %2907
        %2909 = vadd.xlane.f32.xlu0 %v2725
        %v2910 = vpop.xlane.xlu0 %2909
        %2911 = vadd.xlane.f32.xlu0 %v2726
        %v2912 = vpop.xlane.xlu0 %2911
        %2913 = vadd.xlane.f32.xlu0 %v2727
        %v2914 = vpop.xlane.xlu0 %2913
        %2915 = vadd.xlane.f32.xlu0 %v2728
        %v2916 = vpop.xlane.xlu0 %2915
        %2917 = vadd.xlane.f32.xlu0 %v2729
        %v2918 = vpop.xlane.xlu0 %2917
        %2919 = vadd.xlane.f32.xlu0 %v2730
        %v2920 = vpop.xlane.xlu0 %2919
        %2921 = vadd.xlane.f32.xlu0 %v2731
        %v2922 = vpop.xlane.xlu0 %2921
        %2923 = vadd.xlane.f32.xlu0 %v2732
        %v2924 = vpop.xlane.xlu0 %2923
        %2925 = vadd.xlane.f32.xlu0 %v2733
        %v2926 = vpop.xlane.xlu0 %2925
        %2927 = vadd.xlane.f32.xlu0 %v2734
        %v2928 = vpop.xlane.xlu0 %2927
        %2929 = vadd.xlane.f32.xlu0 %v2735
        %v2930 = vpop.xlane.xlu0 %2929
        %2931 = vadd.xlane.f32.xlu0 %v2736
        %v2932 = vpop.xlane.xlu0 %2931
        %2933 = vadd.xlane.f32.xlu0 %v2737
        %v2934 = vpop.xlane.xlu0 %2933
        %2935 = vadd.xlane.f32.xlu0 %v2738
        %v2936 = vpop.xlane.xlu0 %2935
        %2937 = vadd.xlane.f32.xlu0 %v2739
        %v2938 = vpop.xlane.xlu0 %2937
        %2939 = vadd.xlane.f32.xlu0 %v2740
        %v2940 = vpop.xlane.xlu0 %2939
        %2941 = vadd.xlane.f32.xlu0 %v2741
        %v2942 = vpop.xlane.xlu0 %2941
        %2943 = vadd.xlane.f32.xlu0 %v2742
        %v2944 = vpop.xlane.xlu0 %2943
        %2945 = vadd.xlane.f32.xlu0 %v2743
        %v2946 = vpop.xlane.xlu0 %2945
        %2947 = vadd.xlane.f32.xlu0 %v2744
        %v2948 = vpop.xlane.xlu0 %2947
        %2949 = vadd.xlane.f32.xlu0 %v2745
        %v2950 = vpop.xlane.xlu0 %2949
        %2951 = vadd.xlane.f32.xlu0 %v2746
        %v2952 = vpop.xlane.xlu0 %2951
        %2953 = vadd.xlane.f32.xlu0 %v2747
        %v2954 = vpop.xlane.xlu0 %2953
        %2955 = vadd.xlane.f32.xlu0 %v2748
        %v2956 = vpop.xlane.xlu0 %2955
        %2957 = vadd.xlane.f32.xlu0 %v2749
        %v2958 = vpop.xlane.xlu0 %2957
        %2959 = vadd.xlane.f32.xlu0 %v2750
        %v2960 = vpop.xlane.xlu0 %2959
        %2961 = vadd.xlane.f32.xlu0 %v2751
        %v2962 = vpop.xlane.xlu0 %2961
        %2963 = vadd.xlane.f32.xlu0 %v2752
        %v2964 = vpop.xlane.xlu0 %2963
        %2965 = vadd.xlane.f32.xlu0 %v2753
        %v2966 = vpop.xlane.xlu0 %2965
        %2967 = vadd.xlane.f32.xlu0 %v2754
        %v2968 = vpop.xlane.xlu0 %2967
        %2969 = vadd.xlane.f32.xlu0 %v2755
        %v2970 = vpop.xlane.xlu0 %2969
        %2971 = vadd.xlane.f32.xlu0 %v2756
        %v2972 = vpop.xlane.xlu0 %2971
        %2973 = vadd.xlane.f32.xlu0 %v2757
        %v2974 = vpop.xlane.xlu0 %2973
        %2975 = vadd.xlane.f32.xlu0 %v2758
        %v2976 = vpop.xlane.xlu0 %2975
        %2977 = vadd.xlane.f32.xlu0 %v2759
        %v2978 = vpop.xlane.xlu0 %2977
        %2979 = vadd.xlane.f32.xlu0 %v2760
        %v2980 = vpop.xlane.xlu0 %2979
        %2981 = vadd.xlane.f32.xlu0 %v2761
        %v2982 = vpop.xlane.xlu0 %2981
        %2983 = vadd.xlane.f32.xlu0 %v2762
        %v2984 = vpop.xlane.xlu0 %2983
        %2985 = vadd.xlane.f32.xlu0 %v2763
        %v2986 = vpop.xlane.xlu0 %2985
        %2987 = vadd.xlane.f32.xlu0 %v2764
        %v2988 = vpop.xlane.xlu0 %2987
        %2989 = vadd.xlane.f32.xlu0 %v2765
        %v2990 = vpop.xlane.xlu0 %2989
        %2991 = vadd.xlane.f32.xlu0 %v2766
        %v2992 = vpop.xlane.xlu0 %2991
        %2993 = vadd.xlane.f32.xlu0 %v2767
        %v2994 = vpop.xlane.xlu0 %2993
        %2995 = vadd.xlane.f32.xlu0 %v2768
        %v2996 = vpop.xlane.xlu0 %2995
        %2997 = vadd.xlane.f32.xlu0 %v2769
        %v2998 = vpop.xlane.xlu0 %2997
        %2999 = vadd.xlane.f32.xlu0 %v2770
        %v3000 = vpop.xlane.xlu0 %2999
        %3001 = vadd.xlane.f32.xlu0 %v2771
        %v3002 = vpop.xlane.xlu0 %3001
        %3003 = vadd.xlane.f32.xlu0 %v2772
        %v3004 = vpop.xlane.xlu0 %3003
        %3005 = vadd.xlane.f32.xlu0 %v2773
        %v3006 = vpop.xlane.xlu0 %3005
        %3007 = vadd.xlane.f32.xlu0 %v2774
        %v3008 = vpop.xlane.xlu0 %3007
        %3009 = vadd.xlane.f32.xlu0 %v2775
        %v3010 = vpop.xlane.xlu0 %3009
        %3011 = vadd.xlane.f32.xlu0 %v2776
        %v3012 = vpop.xlane.xlu0 %3011
        %3013 = vadd.xlane.f32.xlu0 %v2777
        %v3014 = vpop.xlane.xlu0 %3013
        %3015 = vadd.xlane.f32.xlu0 %v2778
        %v3016 = vpop.xlane.xlu0 %3015
        %3017 = vadd.xlane.f32.xlu0 %v2779
        %v3018 = vpop.xlane.xlu0 %3017
        %3019 = vadd.xlane.f32.xlu0 %v2780
        %v3020 = vpop.xlane.xlu0 %3019
        %3021 = vadd.xlane.f32.xlu0 %v2781
        %v3022 = vpop.xlane.xlu0 %3021
        %3023 = vadd.xlane.f32.xlu0 %v2782
        %v3024 = vpop.xlane.xlu0 %3023
        %3025 = vadd.xlane.f32.xlu0 %v2783
        %v3026 = vpop.xlane.xlu0 %3025
        %3027 = vadd.xlane.f32.xlu0 %v2784
        %v3028 = vpop.xlane.xlu0 %3027
        %3029 = vadd.xlane.f32.xlu0 %v2785
        %v3030 = vpop.xlane.xlu0 %3029
        %3031 = vadd.xlane.f32.xlu0 %v2786
        %v3032 = vpop.xlane.xlu0 %3031
        %3033 = vadd.xlane.f32.xlu0 %v2787
        %v3034 = vpop.xlane.xlu0 %3033
        %3035 = vadd.xlane.f32.xlu0 %v2788
        %v3036 = vpop.xlane.xlu0 %3035
        %3037 = vadd.xlane.f32.xlu0 %v2789
        %v3038 = vpop.xlane.xlu0 %3037
        %3039 = vadd.xlane.f32.xlu0 %v2790
        %v3040 = vpop.xlane.xlu0 %3039
        %3041 = vadd.xlane.f32.xlu0 %v2791
        %v3042 = vpop.xlane.xlu0 %3041
        %3043 = vadd.xlane.f32.xlu0 %v2792
        %v3044 = vpop.xlane.xlu0 %3043
        %3045 = vadd.xlane.f32.xlu0 %v2793
        %v3046 = vpop.xlane.xlu0 %3045
        %3047 = vadd.xlane.f32.xlu0 %v2794
        %v3048 = vpop.xlane.xlu0 %3047
        %3049 = vadd.xlane.f32.xlu0 %v2795
        %v3050 = vpop.xlane.xlu0 %3049
        %3051 = vadd.xlane.f32.xlu0 %v2796
        %v3052 = vpop.xlane.xlu0 %3051
        %v3181 = vlaneseq
        %v3182 = vshrl.u32 %v3181, 7
        %v3183 = vsub.s32 %v1988, %v3182
        %v3184 = vrot.slane %v2798, %v3183
        %v3185 = vlaneseq
        %v3186 = vshrl.u32 %v3185, 7
        %v3187 = vsub.s32 %v1993, %v3186
        %v3188 = vrot.slane %v2800, %v3187
        %v3189 = vsel %vm1998, %v3188, %v3184
        %v3190 = vlaneseq
        %v3191 = vshrl.u32 %v3190, 7
        %v3192 = vsub.s32 %v2000, %v3191
        %v3193 = vrot.slane %v2802, %v3192
        %v3194 = vsel %vm2005, %v3193, %v3189
        %v3195 = vlaneseq
        %v3196 = vshrl.u32 %v3195, 7
        %v3197 = vsub.s32 %v2007, %v3196
        %v3198 = vrot.slane %v2804, %v3197
        %v3199 = vsel %vm2012, %v3198, %v3194
        %v3200 = vlaneseq
        %v3201 = vshrl.u32 %v3200, 7
        %v3202 = vsub.s32 %v2014, %v3201
        %v3203 = vrot.slane %v2806, %v3202
        %v3204 = vsel %vm2019, %v3203, %v3199
        %v3205 = vlaneseq
        %v3206 = vshrl.u32 %v3205, 7
        %v3207 = vsub.s32 %v2021, %v3206
        %v3208 = vrot.slane %v2808, %v3207
        %v3209 = vsel %vm2026, %v3208, %v3204
        %v3210 = vlaneseq
        %v3211 = vshrl.u32 %v3210, 7
        %v3212 = vsub.s32 %v2028, %v3211
        %v3213 = vrot.slane %v2810, %v3212
        %v3214 = vsel %vm2033, %v3213, %v3209
        %v3215 = vlaneseq
        %v3216 = vshrl.u32 %v3215, 7
        %v3217 = vsub.s32 %v2035, %v3216
        %v3218 = vrot.slane %v2812, %v3217
        %v3219 = vsel %vm2040, %v3218, %v3214
        %v3220 = vlaneseq
        %v3221 = vshrl.u32 %v3220, 7
        %v3222 = vsub.s32 %v2042, %v3221
        %v3223 = vrot.slane %v2814, %v3222
        %v3224 = vsel %vm2047, %v3223, %v3219
        %v3225 = vlaneseq
        %v3226 = vshrl.u32 %v3225, 7
        %v3227 = vsub.s32 %v2049, %v3226
        %v3228 = vrot.slane %v2816, %v3227
        %v3229 = vsel %vm2054, %v3228, %v3224
        %v3230 = vlaneseq
        %v3231 = vshrl.u32 %v3230, 7
        %v3232 = vsub.s32 %v2056, %v3231
        %v3233 = vrot.slane %v2818, %v3232
        %v3234 = vsel %vm2061, %v3233, %v3229
        %v3235 = vlaneseq
        %v3236 = vshrl.u32 %v3235, 7
        %v3237 = vsub.s32 %v2063, %v3236
        %v3238 = vrot.slane %v2820, %v3237
        %v3239 = vsel %vm2068, %v3238, %v3234
        %v3240 = vlaneseq
        %v3241 = vshrl.u32 %v3240, 7
        %v3242 = vsub.s32 %v2070, %v3241
        %v3243 = vrot.slane %v2822, %v3242
        %v3244 = vsel %vm2075, %v3243, %v3239
        %v3245 = vlaneseq
        %v3246 = vshrl.u32 %v3245, 7
        %v3247 = vsub.s32 %v2077, %v3246
        %v3248 = vrot.slane %v2824, %v3247
        %v3249 = vsel %vm2082, %v3248, %v3244
        %v3250 = vlaneseq
        %v3251 = vshrl.u32 %v3250, 7
        %v3252 = vsub.s32 %v2084, %v3251
        %v3253 = vrot.slane %v2826, %v3252
        %v3254 = vsel %vm2089, %v3253, %v3249
        %v3255 = vlaneseq
        %v3256 = vshrl.u32 %v3255, 7
        %v3257 = vsub.s32 %v2091, %v3256
        %v3258 = vrot.slane %v2828, %v3257
        %v3259 = vsel %vm2096, %v3258, %v3254
        %v3260 = vlaneseq
        %v3261 = vshrl.u32 %v3260, 7
        %v3262 = vsub.s32 %v1988, %v3261
        %v3263 = vrot.slane %v2830, %v3262
        %v3264 = vlaneseq
        %v3265 = vshrl.u32 %v3264, 7
        %v3266 = vsub.s32 %v1993, %v3265
        %v3267 = vrot.slane %v2832, %v3266
        %v3268 = vsel %vm1998, %v3267, %v3263
        %v3269 = vlaneseq
        %v3270 = vshrl.u32 %v3269, 7
        %v3271 = vsub.s32 %v2000, %v3270
        %v3272 = vrot.slane %v2834, %v3271
        %v3273 = vsel %vm2005, %v3272, %v3268
        %v3274 = vlaneseq
        %v3275 = vshrl.u32 %v3274, 7
        %v3276 = vsub.s32 %v2007, %v3275
        %v3277 = vrot.slane %v2836, %v3276
        %v3278 = vsel %vm2012, %v3277, %v3273
        %v3279 = vlaneseq
        %v3280 = vshrl.u32 %v3279, 7
        %v3281 = vsub.s32 %v2014, %v3280
        %v3282 = vrot.slane %v2838, %v3281
        %v3283 = vsel %vm2019, %v3282, %v3278
        %v3284 = vlaneseq
        %v3285 = vshrl.u32 %v3284, 7
        %v3286 = vsub.s32 %v2021, %v3285
        %v3287 = vrot.slane %v2840, %v3286
        %v3288 = vsel %vm2026, %v3287, %v3283
        %v3289 = vlaneseq
        %v3290 = vshrl.u32 %v3289, 7
        %v3291 = vsub.s32 %v2028, %v3290
        %v3292 = vrot.slane %v2842, %v3291
        %v3293 = vsel %vm2033, %v3292, %v3288
        %v3294 = vlaneseq
        %v3295 = vshrl.u32 %v3294, 7
        %v3296 = vsub.s32 %v2035, %v3295
        %v3297 = vrot.slane %v2844, %v3296
        %v3298 = vsel %vm2040, %v3297, %v3293
        %v3299 = vlaneseq
        %v3300 = vshrl.u32 %v3299, 7
        %v3301 = vsub.s32 %v2042, %v3300
        %v3302 = vrot.slane %v2846, %v3301
        %v3303 = vsel %vm2047, %v3302, %v3298
        %v3304 = vlaneseq
        %v3305 = vshrl.u32 %v3304, 7
        %v3306 = vsub.s32 %v2049, %v3305
        %v3307 = vrot.slane %v2848, %v3306
        %v3308 = vsel %vm2054, %v3307, %v3303
        %v3309 = vlaneseq
        %v3310 = vshrl.u32 %v3309, 7
        %v3311 = vsub.s32 %v2056, %v3310
        %v3312 = vrot.slane %v2850, %v3311
        %v3313 = vsel %vm2061, %v3312, %v3308
        %v3314 = vlaneseq
        %v3315 = vshrl.u32 %v3314, 7
        %v3316 = vsub.s32 %v2063, %v3315
        %v3317 = vrot.slane %v2852, %v3316
        %v3318 = vsel %vm2068, %v3317, %v3313
        %v3319 = vlaneseq
        %v3320 = vshrl.u32 %v3319, 7
        %v3321 = vsub.s32 %v2070, %v3320
        %v3322 = vrot.slane %v2854, %v3321
        %v3323 = vsel %vm2075, %v3322, %v3318
        %v3324 = vlaneseq
        %v3325 = vshrl.u32 %v3324, 7
        %v3326 = vsub.s32 %v2077, %v3325
        %v3327 = vrot.slane %v2856, %v3326
        %v3328 = vsel %vm2082, %v3327, %v3323
        %v3329 = vlaneseq
        %v3330 = vshrl.u32 %v3329, 7
        %v3331 = vsub.s32 %v2084, %v3330
        %v3332 = vrot.slane %v2858, %v3331
        %v3333 = vsel %vm2089, %v3332, %v3328
        %v3334 = vlaneseq
        %v3335 = vshrl.u32 %v3334, 7
        %v3336 = vsub.s32 %v2091, %v3335
        %v3337 = vrot.slane %v2860, %v3336
        %v3338 = vsel %vm2096, %v3337, %v3333
        %v3339 = vlaneseq
        %v3340 = vshrl.u32 %v3339, 7
        %v3341 = vsub.s32 %v1988, %v3340
        %v3342 = vrot.slane %v2862, %v3341
        %v3343 = vlaneseq
        %v3344 = vshrl.u32 %v3343, 7
        %v3345 = vsub.s32 %v1993, %v3344
        %v3346 = vrot.slane %v2864, %v3345
        %v3347 = vsel %vm1998, %v3346, %v3342
        %v3348 = vlaneseq
        %v3349 = vshrl.u32 %v3348, 7
        %v3350 = vsub.s32 %v2000, %v3349
        %v3351 = vrot.slane %v2866, %v3350
        %v3352 = vsel %vm2005, %v3351, %v3347
        %v3353 = vlaneseq
        %v3354 = vshrl.u32 %v3353, 7
        %v3355 = vsub.s32 %v2007, %v3354
        %v3356 = vrot.slane %v2868, %v3355
        %v3357 = vsel %vm2012, %v3356, %v3352
        %v3358 = vlaneseq
        %v3359 = vshrl.u32 %v3358, 7
        %v3360 = vsub.s32 %v2014, %v3359
        %v3361 = vrot.slane %v2870, %v3360
        %v3362 = vsel %vm2019, %v3361, %v3357
        %v3363 = vlaneseq
        %v3364 = vshrl.u32 %v3363, 7
        %v3365 = vsub.s32 %v2021, %v3364
        %v3366 = vrot.slane %v2872, %v3365
        %v3367 = vsel %vm2026, %v3366, %v3362
        %v3368 = vlaneseq
        %v3369 = vshrl.u32 %v3368, 7
        %v3370 = vsub.s32 %v2028, %v3369
        %v3371 = vrot.slane %v2874, %v3370
        %v3372 = vsel %vm2033, %v3371, %v3367
        %v3373 = vlaneseq
        %v3374 = vshrl.u32 %v3373, 7
        %v3375 = vsub.s32 %v2035, %v3374
        %v3376 = vrot.slane %v2876, %v3375
        %v3377 = vsel %vm2040, %v3376, %v3372
        %v3378 = vlaneseq
        %v3379 = vshrl.u32 %v3378, 7
        %v3380 = vsub.s32 %v2042, %v3379
        %v3381 = vrot.slane %v2878, %v3380
        %v3382 = vsel %vm2047, %v3381, %v3377
        %v3383 = vlaneseq
        %v3384 = vshrl.u32 %v3383, 7
        %v3385 = vsub.s32 %v2049, %v3384
        %v3386 = vrot.slane %v2880, %v3385
        %v3387 = vsel %vm2054, %v3386, %v3382
        %v3388 = vlaneseq
        %v3389 = vshrl.u32 %v3388, 7
        %v3390 = vsub.s32 %v2056, %v3389
        %v3391 = vrot.slane %v2882, %v3390
        %v3392 = vsel %vm2061, %v3391, %v3387
        %v3393 = vlaneseq
        %v3394 = vshrl.u32 %v3393, 7
        %v3395 = vsub.s32 %v2063, %v3394
        %v3396 = vrot.slane %v2884, %v3395
        %v3397 = vsel %vm2068, %v3396, %v3392
        %v3398 = vlaneseq
        %v3399 = vshrl.u32 %v3398, 7
        %v3400 = vsub.s32 %v2070, %v3399
        %v3401 = vrot.slane %v2886, %v3400
        %v3402 = vsel %vm2075, %v3401, %v3397
        %v3403 = vlaneseq
        %v3404 = vshrl.u32 %v3403, 7
        %v3405 = vsub.s32 %v2077, %v3404
        %v3406 = vrot.slane %v2888, %v3405
        %v3407 = vsel %vm2082, %v3406, %v3402
        %v3408 = vlaneseq
        %v3409 = vshrl.u32 %v3408, 7
        %v3410 = vsub.s32 %v2084, %v3409
        %v3411 = vrot.slane %v2890, %v3410
        %v3412 = vsel %vm2089, %v3411, %v3407
        %v3413 = vlaneseq
        %v3414 = vshrl.u32 %v3413, 7
        %v3415 = vsub.s32 %v2091, %v3414
        %v3416 = vrot.slane %v2892, %v3415
        %v3417 = vsel %vm2096, %v3416, %v3412
        %v3418 = vlaneseq
        %v3419 = vshrl.u32 %v3418, 7
        %v3420 = vsub.s32 %v1988, %v3419
        %v3421 = vrot.slane %v2894, %v3420
        %v3422 = vlaneseq
        %v3423 = vshrl.u32 %v3422, 7
        %v3424 = vsub.s32 %v1993, %v3423
        %v3425 = vrot.slane %v2896, %v3424
        %v3426 = vsel %vm1998, %v3425, %v3421
        %v3427 = vlaneseq
        %v3428 = vshrl.u32 %v3427, 7
        %v3429 = vsub.s32 %v2000, %v3428
        %v3430 = vrot.slane %v2898, %v3429
        %v3431 = vsel %vm2005, %v3430, %v3426
        %v3432 = vlaneseq
        %v3433 = vshrl.u32 %v3432, 7
        %v3434 = vsub.s32 %v2007, %v3433
        %v3435 = vrot.slane %v2900, %v3434
        %v3436 = vsel %vm2012, %v3435, %v3431
        %v3437 = vlaneseq
        %v3438 = vshrl.u32 %v3437, 7
        %v3439 = vsub.s32 %v2014, %v3438
        %v3440 = vrot.slane %v2902, %v3439
        %v3441 = vsel %vm2019, %v3440, %v3436
        %v3442 = vlaneseq
        %v3443 = vshrl.u32 %v3442, 7
        %v3444 = vsub.s32 %v2021, %v3443
        %v3445 = vrot.slane %v2904, %v3444
        %v3446 = vsel %vm2026, %v3445, %v3441
        %v3447 = vlaneseq
        %v3448 = vshrl.u32 %v3447, 7
        %v3449 = vsub.s32 %v2028, %v3448
        %v3450 = vrot.slane %v2906, %v3449
        %v3451 = vsel %vm2033, %v3450, %v3446
        %v3452 = vlaneseq
        %v3453 = vshrl.u32 %v3452, 7
        %v3454 = vsub.s32 %v2035, %v3453
        %v3455 = vrot.slane %v2908, %v3454
        %v3456 = vsel %vm2040, %v3455, %v3451
        %v3457 = vlaneseq
        %v3458 = vshrl.u32 %v3457, 7
        %v3459 = vsub.s32 %v2042, %v3458
        %v3460 = vrot.slane %v2910, %v3459
        %v3461 = vsel %vm2047, %v3460, %v3456
        %v3462 = vlaneseq
        %v3463 = vshrl.u32 %v3462, 7
        %v3464 = vsub.s32 %v2049, %v3463
        %v3465 = vrot.slane %v2912, %v3464
        %v3466 = vsel %vm2054, %v3465, %v3461
        %v3467 = vlaneseq
        %v3468 = vshrl.u32 %v3467, 7
        %v3469 = vsub.s32 %v2056, %v3468
        %v3470 = vrot.slane %v2914, %v3469
        %v3471 = vsel %vm2061, %v3470, %v3466
        %v3472 = vlaneseq
        %v3473 = vshrl.u32 %v3472, 7
        %v3474 = vsub.s32 %v2063, %v3473
        %v3475 = vrot.slane %v2916, %v3474
        %v3476 = vsel %vm2068, %v3475, %v3471
        %v3477 = vlaneseq
        %v3478 = vshrl.u32 %v3477, 7
        %v3479 = vsub.s32 %v2070, %v3478
        %v3480 = vrot.slane %v2918, %v3479
        %v3481 = vsel %vm2075, %v3480, %v3476
        %v3482 = vlaneseq
        %v3483 = vshrl.u32 %v3482, 7
        %v3484 = vsub.s32 %v2077, %v3483
        %v3485 = vrot.slane %v2920, %v3484
        %v3486 = vsel %vm2082, %v3485, %v3481
        %v3487 = vlaneseq
        %v3488 = vshrl.u32 %v3487, 7
        %v3489 = vsub.s32 %v2084, %v3488
        %v3490 = vrot.slane %v2922, %v3489
        %v3491 = vsel %vm2089, %v3490, %v3486
        %v3492 = vlaneseq
        %v3493 = vshrl.u32 %v3492, 7
        %v3494 = vsub.s32 %v2091, %v3493
        %v3495 = vrot.slane %v2924, %v3494
        %v3496 = vsel %vm2096, %v3495, %v3491
        %v3497 = vlaneseq
        %v3498 = vshrl.u32 %v3497, 7
        %v3499 = vsub.s32 %v1988, %v3498
        %v3500 = vrot.slane %v2926, %v3499
        %v3501 = vlaneseq
        %v3502 = vshrl.u32 %v3501, 7
        %v3503 = vsub.s32 %v1993, %v3502
        %v3504 = vrot.slane %v2928, %v3503
        %v3505 = vsel %vm1998, %v3504, %v3500
        %v3506 = vlaneseq
        %v3507 = vshrl.u32 %v3506, 7
        %v3508 = vsub.s32 %v2000, %v3507
        %v3509 = vrot.slane %v2930, %v3508
        %v3510 = vsel %vm2005, %v3509, %v3505
        %v3511 = vlaneseq
        %v3512 = vshrl.u32 %v3511, 7
        %v3513 = vsub.s32 %v2007, %v3512
        %v3514 = vrot.slane %v2932, %v3513
        %v3515 = vsel %vm2012, %v3514, %v3510
        %v3516 = vlaneseq
        %v3517 = vshrl.u32 %v3516, 7
        %v3518 = vsub.s32 %v2014, %v3517
        %v3519 = vrot.slane %v2934, %v3518
        %v3520 = vsel %vm2019, %v3519, %v3515
        %v3521 = vlaneseq
        %v3522 = vshrl.u32 %v3521, 7
        %v3523 = vsub.s32 %v2021, %v3522
        %v3524 = vrot.slane %v2936, %v3523
        %v3525 = vsel %vm2026, %v3524, %v3520
        %v3526 = vlaneseq
        %v3527 = vshrl.u32 %v3526, 7
        %v3528 = vsub.s32 %v2028, %v3527
        %v3529 = vrot.slane %v2938, %v3528
        %v3530 = vsel %vm2033, %v3529, %v3525
        %v3531 = vlaneseq
        %v3532 = vshrl.u32 %v3531, 7
        %v3533 = vsub.s32 %v2035, %v3532
        %v3534 = vrot.slane %v2940, %v3533
        %v3535 = vsel %vm2040, %v3534, %v3530
        %v3536 = vlaneseq
        %v3537 = vshrl.u32 %v3536, 7
        %v3538 = vsub.s32 %v2042, %v3537
        %v3539 = vrot.slane %v2942, %v3538
        %v3540 = vsel %vm2047, %v3539, %v3535
        %v3541 = vlaneseq
        %v3542 = vshrl.u32 %v3541, 7
        %v3543 = vsub.s32 %v2049, %v3542
        %v3544 = vrot.slane %v2944, %v3543
        %v3545 = vsel %vm2054, %v3544, %v3540
        %v3546 = vlaneseq
        %v3547 = vshrl.u32 %v3546, 7
        %v3548 = vsub.s32 %v2056, %v3547
        %v3549 = vrot.slane %v2946, %v3548
        %v3550 = vsel %vm2061, %v3549, %v3545
        %v3551 = vlaneseq
        %v3552 = vshrl.u32 %v3551, 7
        %v3553 = vsub.s32 %v2063, %v3552
        %v3554 = vrot.slane %v2948, %v3553
        %v3555 = vsel %vm2068, %v3554, %v3550
        %v3556 = vlaneseq
        %v3557 = vshrl.u32 %v3556, 7
        %v3558 = vsub.s32 %v2070, %v3557
        %v3559 = vrot.slane %v2950, %v3558
        %v3560 = vsel %vm2075, %v3559, %v3555
        %v3561 = vlaneseq
        %v3562 = vshrl.u32 %v3561, 7
        %v3563 = vsub.s32 %v2077, %v3562
        %v3564 = vrot.slane %v2952, %v3563
        %v3565 = vsel %vm2082, %v3564, %v3560
        %v3566 = vlaneseq
        %v3567 = vshrl.u32 %v3566, 7
        %v3568 = vsub.s32 %v2084, %v3567
        %v3569 = vrot.slane %v2954, %v3568
        %v3570 = vsel %vm2089, %v3569, %v3565
        %v3571 = vlaneseq
        %v3572 = vshrl.u32 %v3571, 7
        %v3573 = vsub.s32 %v2091, %v3572
        %v3574 = vrot.slane %v2956, %v3573
        %v3575 = vsel %vm2096, %v3574, %v3570
        %v3576 = vlaneseq
        %v3577 = vshrl.u32 %v3576, 7
        %v3578 = vsub.s32 %v1988, %v3577
        %v3579 = vrot.slane %v2958, %v3578
        %v3580 = vlaneseq
        %v3581 = vshrl.u32 %v3580, 7
        %v3582 = vsub.s32 %v1993, %v3581
        %v3583 = vrot.slane %v2960, %v3582
        %v3584 = vsel %vm1998, %v3583, %v3579
        %v3585 = vlaneseq
        %v3586 = vshrl.u32 %v3585, 7
        %v3587 = vsub.s32 %v2000, %v3586
        %v3588 = vrot.slane %v2962, %v3587
        %v3589 = vsel %vm2005, %v3588, %v3584
        %v3590 = vlaneseq
        %v3591 = vshrl.u32 %v3590, 7
        %v3592 = vsub.s32 %v2007, %v3591
        %v3593 = vrot.slane %v2964, %v3592
        %v3594 = vsel %vm2012, %v3593, %v3589
        %v3595 = vlaneseq
        %v3596 = vshrl.u32 %v3595, 7
        %v3597 = vsub.s32 %v2014, %v3596
        %v3598 = vrot.slane %v2966, %v3597
        %v3599 = vsel %vm2019, %v3598, %v3594
        %v3600 = vlaneseq
        %v3601 = vshrl.u32 %v3600, 7
        %v3602 = vsub.s32 %v2021, %v3601
        %v3603 = vrot.slane %v2968, %v3602
        %v3604 = vsel %vm2026, %v3603, %v3599
        %v3605 = vlaneseq
        %v3606 = vshrl.u32 %v3605, 7
        %v3607 = vsub.s32 %v2028, %v3606
        %v3608 = vrot.slane %v2970, %v3607
        %v3609 = vsel %vm2033, %v3608, %v3604
        %v3610 = vlaneseq
        %v3611 = vshrl.u32 %v3610, 7
        %v3612 = vsub.s32 %v2035, %v3611
        %v3613 = vrot.slane %v2972, %v3612
        %v3614 = vsel %vm2040, %v3613, %v3609
        %v3615 = vlaneseq
        %v3616 = vshrl.u32 %v3615, 7
        %v3617 = vsub.s32 %v2042, %v3616
        %v3618 = vrot.slane %v2974, %v3617
        %v3619 = vsel %vm2047, %v3618, %v3614
        %v3620 = vlaneseq
        %v3621 = vshrl.u32 %v3620, 7
        %v3622 = vsub.s32 %v2049, %v3621
        %v3623 = vrot.slane %v2976, %v3622
        %v3624 = vsel %vm2054, %v3623, %v3619
        %v3625 = vlaneseq
        %v3626 = vshrl.u32 %v3625, 7
        %v3627 = vsub.s32 %v2056, %v3626
        %v3628 = vrot.slane %v2978, %v3627
        %v3629 = vsel %vm2061, %v3628, %v3624
        %v3630 = vlaneseq
        %v3631 = vshrl.u32 %v3630, 7
        %v3632 = vsub.s32 %v2063, %v3631
        %v3633 = vrot.slane %v2980, %v3632
        %v3634 = vsel %vm2068, %v3633, %v3629
        %v3635 = vlaneseq
        %v3636 = vshrl.u32 %v3635, 7
        %v3637 = vsub.s32 %v2070, %v3636
        %v3638 = vrot.slane %v2982, %v3637
        %v3639 = vsel %vm2075, %v3638, %v3634
        %v3640 = vlaneseq
        %v3641 = vshrl.u32 %v3640, 7
        %v3642 = vsub.s32 %v2077, %v3641
        %v3643 = vrot.slane %v2984, %v3642
        %v3644 = vsel %vm2082, %v3643, %v3639
        %v3645 = vlaneseq
        %v3646 = vshrl.u32 %v3645, 7
        %v3647 = vsub.s32 %v2084, %v3646
        %v3648 = vrot.slane %v2986, %v3647
        %v3649 = vsel %vm2089, %v3648, %v3644
        %v3650 = vlaneseq
        %v3651 = vshrl.u32 %v3650, 7
        %v3652 = vsub.s32 %v2091, %v3651
        %v3653 = vrot.slane %v2988, %v3652
        %v3654 = vsel %vm2096, %v3653, %v3649
        %v3655 = vlaneseq
        %v3656 = vshrl.u32 %v3655, 7
        %v3657 = vsub.s32 %v1988, %v3656
        %v3658 = vrot.slane %v2990, %v3657
        %v3659 = vlaneseq
        %v3660 = vshrl.u32 %v3659, 7
        %v3661 = vsub.s32 %v1993, %v3660
        %v3662 = vrot.slane %v2992, %v3661
        %v3663 = vsel %vm1998, %v3662, %v3658
        %v3664 = vlaneseq
        %v3665 = vshrl.u32 %v3664, 7
        %v3666 = vsub.s32 %v2000, %v3665
        %v3667 = vrot.slane %v2994, %v3666
        %v3668 = vsel %vm2005, %v3667, %v3663
        %v3669 = vlaneseq
        %v3670 = vshrl.u32 %v3669, 7
        %v3671 = vsub.s32 %v2007, %v3670
        %v3672 = vrot.slane %v2996, %v3671
        %v3673 = vsel %vm2012, %v3672, %v3668
        %v3674 = vlaneseq
        %v3675 = vshrl.u32 %v3674, 7
        %v3676 = vsub.s32 %v2014, %v3675
        %v3677 = vrot.slane %v2998, %v3676
        %v3678 = vsel %vm2019, %v3677, %v3673
        %v3679 = vlaneseq
        %v3680 = vshrl.u32 %v3679, 7
        %v3681 = vsub.s32 %v2021, %v3680
        %v3682 = vrot.slane %v3000, %v3681
        %v3683 = vsel %vm2026, %v3682, %v3678
        %v3684 = vlaneseq
        %v3685 = vshrl.u32 %v3684, 7
        %v3686 = vsub.s32 %v2028, %v3685
        %v3687 = vrot.slane %v3002, %v3686
        %v3688 = vsel %vm2033, %v3687, %v3683
        %v3689 = vlaneseq
        %v3690 = vshrl.u32 %v3689, 7
        %v3691 = vsub.s32 %v2035, %v3690
        %v3692 = vrot.slane %v3004, %v3691
        %v3693 = vsel %vm2040, %v3692, %v3688
        %v3694 = vlaneseq
        %v3695 = vshrl.u32 %v3694, 7
        %v3696 = vsub.s32 %v2042, %v3695
        %v3697 = vrot.slane %v3006, %v3696
        %v3698 = vsel %vm2047, %v3697, %v3693
        %v3699 = vlaneseq
        %v3700 = vshrl.u32 %v3699, 7
        %v3701 = vsub.s32 %v2049, %v3700
        %v3702 = vrot.slane %v3008, %v3701
        %v3703 = vsel %vm2054, %v3702, %v3698
        %v3704 = vlaneseq
        %v3705 = vshrl.u32 %v3704, 7
        %v3706 = vsub.s32 %v2056, %v3705
        %v3707 = vrot.slane %v3010, %v3706
        %v3708 = vsel %vm2061, %v3707, %v3703
        %v3709 = vlaneseq
        %v3710 = vshrl.u32 %v3709, 7
        %v3711 = vsub.s32 %v2063, %v3710
        %v3712 = vrot.slane %v3012, %v3711
        %v3713 = vsel %vm2068, %v3712, %v3708
        %v3714 = vlaneseq
        %v3715 = vshrl.u32 %v3714, 7
        %v3716 = vsub.s32 %v2070, %v3715
        %v3717 = vrot.slane %v3014, %v3716
        %v3718 = vsel %vm2075, %v3717, %v3713
        %v3719 = vlaneseq
        %v3720 = vshrl.u32 %v3719, 7
        %v3721 = vsub.s32 %v2077, %v3720
        %v3722 = vrot.slane %v3016, %v3721
        %v3723 = vsel %vm2082, %v3722, %v3718
        %v3724 = vlaneseq
        %v3725 = vshrl.u32 %v3724, 7
        %v3726 = vsub.s32 %v2084, %v3725
        %v3727 = vrot.slane %v3018, %v3726
        %v3728 = vsel %vm2089, %v3727, %v3723
        %v3729 = vlaneseq
        %v3730 = vshrl.u32 %v3729, 7
        %v3731 = vsub.s32 %v2091, %v3730
        %v3732 = vrot.slane %v3020, %v3731
        %v3733 = vsel %vm2096, %v3732, %v3728
        %v3734 = vlaneseq
        %v3735 = vshrl.u32 %v3734, 7
        %v3736 = vsub.s32 %v1988, %v3735
        %v3737 = vrot.slane %v3022, %v3736
        %v3738 = vlaneseq
        %v3739 = vshrl.u32 %v3738, 7
        %v3740 = vsub.s32 %v1993, %v3739
        %v3741 = vrot.slane %v3024, %v3740
        %v3742 = vsel %vm1998, %v3741, %v3737
        %v3743 = vlaneseq
        %v3744 = vshrl.u32 %v3743, 7
        %v3745 = vsub.s32 %v2000, %v3744
        %v3746 = vrot.slane %v3026, %v3745
        %v3747 = vsel %vm2005, %v3746, %v3742
        %v3748 = vlaneseq
        %v3749 = vshrl.u32 %v3748, 7
        %v3750 = vsub.s32 %v2007, %v3749
        %v3751 = vrot.slane %v3028, %v3750
        %v3752 = vsel %vm2012, %v3751, %v3747
        %v3753 = vlaneseq
        %v3754 = vshrl.u32 %v3753, 7
        %v3755 = vsub.s32 %v2014, %v3754
        %v3756 = vrot.slane %v3030, %v3755
        %v3757 = vsel %vm2019, %v3756, %v3752
        %v3758 = vlaneseq
        %v3759 = vshrl.u32 %v3758, 7
        %v3760 = vsub.s32 %v2021, %v3759
        %v3761 = vrot.slane %v3032, %v3760
        %v3762 = vsel %vm2026, %v3761, %v3757
        %v3763 = vlaneseq
        %v3764 = vshrl.u32 %v3763, 7
        %v3765 = vsub.s32 %v2028, %v3764
        %v3766 = vrot.slane %v3034, %v3765
        %v3767 = vsel %vm2033, %v3766, %v3762
        %v3768 = vlaneseq
        %v3769 = vshrl.u32 %v3768, 7
        %v3770 = vsub.s32 %v2035, %v3769
        %v3771 = vrot.slane %v3036, %v3770
        %v3772 = vsel %vm2040, %v3771, %v3767
        %v3773 = vlaneseq
        %v3774 = vshrl.u32 %v3773, 7
        %v3775 = vsub.s32 %v2042, %v3774
        %v3776 = vrot.slane %v3038, %v3775
        %v3777 = vsel %vm2047, %v3776, %v3772
        %v3778 = vlaneseq
        %v3779 = vshrl.u32 %v3778, 7
        %v3780 = vsub.s32 %v2049, %v3779
        %v3781 = vrot.slane %v3040, %v3780
        %v3782 = vsel %vm2054, %v3781, %v3777
        %v3783 = vlaneseq
        %v3784 = vshrl.u32 %v3783, 7
        %v3785 = vsub.s32 %v2056, %v3784
        %v3786 = vrot.slane %v3042, %v3785
        %v3787 = vsel %vm2061, %v3786, %v3782
        %v3788 = vlaneseq
        %v3789 = vshrl.u32 %v3788, 7
        %v3790 = vsub.s32 %v2063, %v3789
        %v3791 = vrot.slane %v3044, %v3790
        %v3792 = vsel %vm2068, %v3791, %v3787
        %v3793 = vlaneseq
        %v3794 = vshrl.u32 %v3793, 7
        %v3795 = vsub.s32 %v2070, %v3794
        %v3796 = vrot.slane %v3046, %v3795
        %v3797 = vsel %vm2075, %v3796, %v3792
        %v3798 = vlaneseq
        %v3799 = vshrl.u32 %v3798, 7
        %v3800 = vsub.s32 %v2077, %v3799
        %v3801 = vrot.slane %v3048, %v3800
        %v3802 = vsel %vm2082, %v3801, %v3797
        %v3803 = vlaneseq
        %v3804 = vshrl.u32 %v3803, 7
        %v3805 = vsub.s32 %v2084, %v3804
        %v3806 = vrot.slane %v3050, %v3805
        %v3807 = vsel %vm2089, %v3806, %v3802
        %v3808 = vlaneseq
        %v3809 = vshrl.u32 %v3808, 7
        %v3810 = vsub.s32 %v2091, %v3809
        %v3811 = vrot.slane %v3052, %v3810
        %v3812 = vsel %vm2096, %v3811, %v3807
        %v3813 = vsel %vm2651, %v3338, %v3259
        %v3814 = vsel %vm2653, %v3417, %v3813
        %v3815 = vsel %vm2655, %v3496, %v3814
        %v3816 = vsel %vm2657, %v3575, %v3815
        %v3817 = vsel %vm2659, %v3654, %v3816
        %v3818 = vsel %vm2661, %v3733, %v3817
        %v3819 = vsel %vm2663, %v3812, %v3818
        %v3821 = vadd.f32 %v2668, %v3819
        %3822 = vst [vmem:[#allocation3] sm:$0xff] %v3821
        %p3823 = scmp.eq.s32.totalorder %s27, 1
        // Predicated region
        $region125: #{agg_head_forward.3} parent=111 // pred_check
          %p3824 = pneg %p3823
        $region126: #{agg_head_forward.3} parent=111 // pred_check_branch
          %3826 = sbr.rel (%p3824) target = $region128
        $region127: #{agg_head_forward.3} parent=111 // pred_region
          %v3827 = vld [vmem:[#allocation2] sm:$0xff]
          %v3828 = vmul.f32 %v3827, 0.00390625
          %v3829 = vld [vmem:[#allocation3] sm:$0xff]
          %v3830 = vmul.f32 %v3829, 0.00390625
          %3831 = vst [vmem:[%s1447] sm:$0xff] %v3828
          %v3832 = vld [vmem:[%s1458] sm:$0x1]
          %v3833 = vld [vmem:[%s1461] sm:$0x1]
          %v3834 = vrot.slane %v3828, 4
          %v3835 = vadd.f32 %v3828, %v3834
          %v3836 = vrot.slane %v3835, 2
          %v3837 = vadd.f32 %v3835, %v3836
          %v3838 = vrot.slane %v3837, 1
          %v3839 = vadd.f32 %v3837, %v3838
          %v3840 = vrcp.pop 8.0
          %v3841 = vmul.f32 %v3839, %v3840
          %v3842 = vsub.f32 %v3828, %v3841
          %v3843 = vmul.f32 %v3842, %v3842
          %v3844 = vrot.slane %v3843, 4
          %v3845 = vadd.f32 %v3843, %v3844
          %v3846 = vrot.slane %v3845, 2
          %v3847 = vadd.f32 %v3845, %v3846
          %v3848 = vrot.slane %v3847, 1
          %v3849 = vadd.f32 %v3847, %v3848
          %v3850 = vmul.f32 %v3849, %v3840
          %v3851 = vadd.f32 %v3850, 1e-05
          %v3852 = vrsqrt.pop %v3851
          %v3853 = vmul.f32 %v3842, %v3852
          %v3855 = vlaneseq
          %v3856 = vshrl.u32 %v3855, 7
          %v3857 = vsub.s32 0, %v3856
          %v3858 = vrot.slane %v3832, %v3857
          %v3860 = vmul.f32 %v3853, %v3858
          %v3862 = vlaneseq
          %v3863 = vshrl.u32 %v3862, 7
          %v3864 = vsub.s32 0, %v3863
          %v3865 = vrot.slane %v3833, %v3864
          %v3867 = vadd.f32 %v3860, %v3865
          %v3868 = vpack.c.bf16 %v3867, %v3867
          %3869 = vst [vmem:[%s1453] sm:$0xf] %v3868
          %v3870 = vld [vmem:[%s1464] sm:$0x1]
          %v3871 = vld [vmem:[%s1467] sm:$0x1]
          %v3872 = vrot.slane %v3830, 4
          %v3873 = vadd.f32 %v3830, %v3872
          %v3874 = vrot.slane %v3873, 2
          %v3875 = vadd.f32 %v3873, %v3874
          %v3876 = vrot.slane %v3875, 1
          %v3877 = vadd.f32 %v3875, %v3876
          %v3878 = vmul.f32 %v3877, %v3840
          %v3879 = vsub.f32 %v3830, %v3878
          %v3880 = vmul.f32 %v3879, %v3879
          %v3881 = vrot.slane %v3880, 4
          %v3882 = vadd.f32 %v3880, %v3881
          %v3883 = vrot.slane %v3882, 2
          %v3884 = vadd.f32 %v3882, %v3883
          %v3885 = vrot.slane %v3884, 1
          %v3886 = vadd.f32 %v3884, %v3885
          %v3887 = vmul.f32 %v3886, %v3840
          %v3888 = vadd.f32 %v3887, 1e-05
          %v3889 = vrsqrt.pop %v3888
          %v3890 = vmul.f32 %v3879, %v3889
          %v3892 = vlaneseq
          %v3893 = vshrl.u32 %v3892, 7
          %v3894 = vsub.s32 0, %v3893
          %v3895 = vrot.slane %v3870, %v3894
          %v3897 = vmul.f32 %v3890, %v3895
          %v3899 = vlaneseq
          %v3900 = vshrl.u32 %v3899, 7
          %v3901 = vsub.s32 0, %v3900
          %v3902 = vrot.slane %v3871, %v3901
          %v3904 = vadd.f32 %v3897, %v3902
          %v3905 = vpack.c.bf16 %v3904, %v3904
          %s3906 = scalar_lea.vmem %s1453, 4 [#allocation8]
          %3907 = vst [vmem:[%s3906] sm:$0xf] %v3905
        $region128: #{agg_head_forward.3} parent=111 // pred_fallthru
          _
        %s3908 = sand.u32 %s202, 1
        %s3909 = scalar_lea.sflag [#allocation7], %s3908
        %s3910 = sand.u32 %s202, 1
        %s3911 = smul.addr %s3910, 8
        %s3912 = scalar_lea.vmem [#allocation6], %s3911
        %s3913 = sand.u32 %s228, 1
        %s3914 = sand.u32 %s228, 1
        %s3915 = smul.addr %s3914, 8
        %s3916 = scalar_lea.vmem [#allocation8], %s3915
        // Predicated region
        $region129: #{agg_head_forward.3} parent=111 // pred_check
          %p3917 = pneg %p212
        $region130: #{agg_head_forward.3} parent=111 // pred_check_branch
          %3919 = sbr.rel (%p3917) target = $region132
        $region131: #{agg_head_forward.3} parent=111 // pred_region
          %s3921 = ssub.s32 128, 128
          %3922 = vsyncadd %s3909, %s3921
          %s3923 = smul.addr %s26, 128
          %s3924 = scalar_lea.hbm %s6, %s3923
          %s3926 = sshll.u32 %s3912, 4
          %s3927 = int_to_ptr.vmem [resolvable:$true] %s3926
          %3929 = dma.vmem_to_hbm [thread:$0]  %s3927, 128, %s3924, %s3909
        $region132: #{agg_head_forward.3} parent=111 // pred_fallthru
          _
        // Predicated region
        $region133: #{agg_head_forward.3} parent=111 // pred_check
          %p3930 = pneg %p238
        $region134: #{agg_head_forward.3} parent=111 // pred_check_branch
          %3932 = sbr.rel (%p3930) target = $region136
        $region135: #{agg_head_forward.3} parent=111 // pred_region
          %s3933 = smul.addr %s26, 4
          %s3934 = scalar_lea.vmem %s7, %s3933
          // Predicated region
          $region137: #{agg_head_forward.3} parent=135 // pred_check
            _
          $region138: #{agg_head_forward.3} parent=135 // pred_check_branch
            %3936 = sbr.rel (0) target = $region140
          $region139: #{agg_head_forward.3} parent=135 // pred_region
            // Predicated region
            $region141: #{agg_head_forward.3} parent=139 // pred_check
              _
            $region142: #{agg_head_forward.3} parent=139 // pred_check_branch
              %3938 = sbr.rel target = $region144
            $region143: #{agg_head_forward.3} parent=139 // pred_region
              // Predicated region
              $region156: #{agg_head_forward.3} parent=143 // pred_check
                _
              $region157: #{agg_head_forward.3} parent=143 // pred_check_branch
                %3955 = sbr.rel (0) target = $region159
              $region158: #{agg_head_forward.3} parent=143 // pred_region
                loop: start=0, step=1, limit=1
                $region160: #{agg_head_forward.3} parent=158 // loop_pre_header
                  _
                $region161: #{agg_head_forward.3} parent=158 // loop_header
                  %s3957 = sphi 0, %s3961
                  %p3958 = scmp.ge.s32.totalorder %s3957, 1
                  %s3962 = sphi %s3916, %s3916
                  %s3963 = sphi %s3934, %s3934
                $region162: #{agg_head_forward.3} parent=158 // loop_header_branch
                  %3960 = sbr.rel (%p3958) target = $region166
                $region163: #{agg_head_forward.3} parent=158 // loop_body
                  _
                $region164: #{agg_head_forward.3} parent=158 // loop_footer
                  %s3961 = sadd.s32 1, %s3957
                $region165: #{agg_head_forward.3} parent=158 // loop_footer_branch
                  %3956 = sbr.rel target = $region161
                $region166: #{agg_head_forward.3} parent=158 // loop_exit
                  _
                loop: start=0, step=1, limit=1
                $region167: #{agg_head_forward.3} parent=158 // loop_pre_header
                  _
                $region168: #{agg_head_forward.3} parent=158 // loop_header
                  %s3966 = sphi 0, %s3970
                  %p3967 = scmp.ge.s32.totalorder %s3966, 1
                  %s3971 = sphi %s3916, %s3916
                  %s3972 = sphi %s3934, %s3934
                $region169: #{agg_head_forward.3} parent=158 // loop_header_branch
                  %3969 = sbr.rel (%p3967) target = $region173
                $region170: #{agg_head_forward.3} parent=158 // loop_body
                  %v3973 = vld [vmem:[%s3971] sm:$0xf]
                  %3974 = vst [vmem:[%s3972] sm:$0xf] %v3973
                  %v3975 = vld [vmem:[%s3971 + $0x4] sm:$0xf]
                  %3976 = vst [vmem:[%s3972 + $0x8] sm:$0xf] %v3975
                $region171: #{agg_head_forward.3} parent=158 // loop_footer
                  %s3970 = sadd.s32 1, %s3966
                $region172: #{agg_head_forward.3} parent=158 // loop_footer_branch
                  %3965 = sbr.rel target = $region168
                $region173: #{agg_head_forward.3} parent=158 // loop_exit
                  _
              $region159: #{agg_head_forward.3} parent=143 // pred_fallthru
                _
            $region144: #{agg_head_forward.3} parent=139 // pred_fallthru
              _
            // Predicated region
            $region145: #{agg_head_forward.3} parent=139 // pred_check
              _
            $region146: #{agg_head_forward.3} parent=139 // pred_check_branch
              %3940 = sbr.rel (0) target = $region148
            $region147: #{agg_head_forward.3} parent=139 // pred_region
              loop: start=0, step=1, limit=1
              $region149: #{agg_head_forward.3} parent=147 // loop_pre_header
                _
              $region150: #{agg_head_forward.3} parent=147 // loop_header
                %s3943 = sphi 0, %s3947
                %p3944 = scmp.ge.s32.totalorder %s3943, 1
                %s3948 = sphi %s3916, %s3916
                %s3949 = sphi %s3934, %s3934
              $region151: #{agg_head_forward.3} parent=147 // loop_header_branch
                %3946 = sbr.rel (%p3944) target = $region155
              $region152: #{agg_head_forward.3} parent=147 // loop_body
                %v3950 = vld [vmem:[%s3948] sm:$0xf]
                %3951 = vst [vmem:[%s3949] sm:$0xf] %v3950
                %v3952 = vld [vmem:[%s3948 + $0x4] sm:$0xf]
                %3953 = vst [vmem:[%s3949 + $0x8] sm:$0xf] %v3952
              $region153: #{agg_head_forward.3} parent=147 // loop_footer
                %s3947 = sadd.s32 1, %s3943
              $region154: #{agg_head_forward.3} parent=147 // loop_footer_branch
                %3942 = sbr.rel target = $region150
              $region155: #{agg_head_forward.3} parent=147 // loop_exit
                _
            $region148: #{agg_head_forward.3} parent=139 // pred_fallthru
              _
          $region140: #{agg_head_forward.3} parent=135 // pred_fallthru
            _
          %3977 = vnop
        $region136: #{agg_head_forward.3} parent=111 // pred_fallthru
          _
      $region112: #{agg_head_forward.3} parent=5 // pred_fallthru
        _
      %p3978 = scmp.le.s32.totalorder 2, %s17
      // Predicated region
      $region174: #{agg_head_forward.3} parent=5 // pred_check
        %p3979 = pneg %p3978
      $region175: #{agg_head_forward.3} parent=5 // pred_check_branch
        %3981 = sbr.rel (%p3979) target = $region177
      $region176: #{agg_head_forward.3} parent=5 // pred_region
        %s3982 = ssub.s32 %s17, 2
        // Predicated region
        $region178: #{agg_head_forward.3} parent=176 // pred_check
          %p3983 = pneg %p218
        $region179: #{agg_head_forward.3} parent=176 // pred_check_branch
          %3985 = sbr.rel (%p3983) target = $region181
        $region180: #{agg_head_forward.3} parent=176 // pred_region
          %s3986 = sand.u32 %s203, 1
          %s3987 = scalar_lea.sflag [#allocation7], %s3986
          %s3988 = sand.u32 %s203, 1
          %s3989 = smul.addr %s3988, 8
          %s3990 = scalar_lea.vmem [#allocation6], %s3989
          %3991 = dma.done %s3987, 128
        $region181: #{agg_head_forward.3} parent=176 // pred_fallthru
          _
        // Predicated region
        $region182: #{agg_head_forward.3} parent=176 // pred_check
          %p3992 = pneg %p244
        $region183: #{agg_head_forward.3} parent=176 // pred_check_branch
          %3994 = sbr.rel (%p3992) target = $region185
        $region184: #{agg_head_forward.3} parent=176 // pred_region
          %s3995 = sand.u32 %s229, 1
          %s3996 = sand.u32 %s229, 1
          %s3997 = smul.addr %s3996, 8
          %s3998 = scalar_lea.vmem [#allocation8], %s3997
        $region185: #{agg_head_forward.3} parent=176 // pred_fallthru
          _
      $region177: #{agg_head_forward.3} parent=5 // pred_fallthru
        _
    $region6: #{agg_head_forward.3} parent=1 // loop_footer
      %s21 = sadd.s32 1, %s17
    $region7: #{agg_head_forward.3} parent=1 // loop_footer_branch
      %16 = sbr.rel target = $region3
    $region8: #{agg_head_forward.3} parent=1 // loop_exit
      _
    %3999 = vsyncpa [#allocation7], 1
    %s4000 = scalar_lea.sflag [#allocation7], 1
    %4001 = vsyncpa %s4000, 1

// kernel: agg_head_forward.5
$region0: #{agg_head_forward.5}
  #allocation0 [shape = 'u32[]', space=smem, size = 0x4, offset = 0x4, fixed_abs, tag = 'smem constant byte address 0x4 - core index']
  #allocation1 [shape = 'u32[144,128]{1,0:T(1,128)}', space=vmem, size = 0x12000, scoped, tag = 'internal scratch']
  %s0 = inlined_call_operand.vmem [shape: f32[3,8,256], index: 0, kind: input, shape index: {}]
  %s1 = inlined_call_operand.vmem [shape: f32[3,1,256], index: 1, kind: input, shape index: {}]
  %s2 = inlined_call_operand.vmem [shape: f32[3,1,256], index: 2, kind: input, shape index: {}]
  %s3 = inlined_call_operand.vmem [shape: bf16[3,256,384], index: 3, kind: input, shape index: {}]
  %s4 = inlined_call_operand.vmem [shape: f32[3,8,384], index: 4, kind: output, shape index: {}]
  %s5 = sld [smem:[#allocation0]]
  $region90: #{agg_head_forward.5} parent=0
    _
  %s7 = ssub.s32 1, %s5
  %s8 = scalar_select 0, %s7, %s5
  $region1: #{agg_head_forward.5} parent=0
    #allocation2 [shape = 'u8[131072]{0}', space=vmem, size = 0x20000, scoped, tag = 'input window, operand 3']
    loop: start=0, step=1, limit=11
    $region2: #{agg_head_forward.5} parent=1 // loop_pre_header
      _
    $region3: #{agg_head_forward.5} parent=1 // loop_header
      %s10 = sphi 0, %s14
      %p11 = scmp.ge.s32.totalorder %s10, 11
      %s17 = sphi 0, %s29
      %s18 = sphi 0, %s25
      %s19 = sphi 0, %s17
      %s20 = sphi 0, %s18
      %s21 = sphi 0, %s19
      %s22 = sphi 0, %s20
      %s32 = sphi 0, %s34
      %s35 = sphi 0, %s32
      %s36 = sphi 0, %s35
      %s52 = sphi 0, %s36
      %s58 = sphi 0, %s60
      %s61 = sphi 0, %s58
      %s62 = sphi 0, %s61
      %s78 = sphi 0, %s62
      %s84 = sphi 0, %s86
      %s87 = sphi 0, %s84
      %s88 = sphi 0, %s87
      %s104 = sphi 0, %s88
      %s112 = sphi 0, %s114
      %s115 = sphi 0, %s112
      %s116 = sphi 0, %s115
      %s132 = sphi 0, %s116
      %s140 = sphi 0, %s142
      %s143 = sphi 0, %s140
      %s144 = sphi 0, %s143
      %s160 = sphi 0, %s144
    $region4: #{agg_head_forward.5} parent=1 // loop_header_branch
      %13 = sbr.rel (%p11) target = $region8
    $region5: #{agg_head_forward.5} parent=1 // loop_body
      %s15 = ssub.s32 %s10, 1
      %s16 = ssub.s32 %s10, 2
      %s23 = sadd.s32 1, %s18
      %p24 = scmp.ge.s32.totalorder %s23, 3
      %s25 = scalar_select %p24, 0, %s23
      %s26 = sadd.s32 1, %s17
      %s27 = scalar_select %p24, %s26, %s17
      %p28 = scmp.ge.s32.totalorder %s27, 3
      %s29 = scalar_select %p28, 0, %s27
      %s30 = ssub.s32 %s17, %s29
      %p31 = scmp.eq.s32.totalorder %s30, 0
      %s33 = sadd.s32 %s32, 1
      %s34 = scalar_select %p31, %s32, %s33
      %p37 = pneg %p31
      %p38 = scmp.eq.s32.totalorder %s10, 8
      %p39 = por %p37, %p38
      %p40 = scmp.ne.s32.totalorder %s32, %s35
      %p41 = scmp.eq.s32.totalorder %s10, 0
      %p42 = por %p40, %p41
      %p43 = scmp.ne.s32.totalorder %s32, %s35
      %p44 = scmp.eq.s32.totalorder %s15, 8
      %p45 = por %p43, %p44
      %p46 = scmp.ne.s32.totalorder %s35, %s36
      %p47 = scmp.eq.s32.totalorder %s15, 0
      %p48 = por %p46, %p47
      %p49 = scmp.ne.s32.totalorder %s35, %s36
      %p50 = scmp.eq.s32.totalorder %s16, 8
      %p51 = por %p49, %p50
      %p53 = scmp.ne.s32.totalorder %s36, %s52
      %p54 = scmp.eq.s32.totalorder %s16, 0
      %p55 = por %p53, %p54
      %s56 = ssub.s32 %s17, %s29
      %p57 = scmp.eq.s32.totalorder %s56, 0
      %s59 = sadd.s32 %s58, 1
      %s60 = scalar_select %p57, %s58, %s59
      %p63 = pneg %p57
      %p64 = scmp.eq.s32.totalorder %s10, 8
      %p65 = por %p63, %p64
      %p66 = scmp.ne.s32.totalorder %s58, %s61
      %p67 = scmp.eq.s32.totalorder %s10, 0
      %p68 = por %p66, %p67
      %p69 = scmp.ne.s32.totalorder %s58, %s61
      %p70 = scmp.eq.s32.totalorder %s15, 8
      %p71 = por %p69, %p70
      %p72 = scmp.ne.s32.totalorder %s61, %s62
      %p73 = scmp.eq.s32.totalorder %s15, 0
      %p74 = por %p72, %p73
      %p75 = scmp.ne.s32.totalorder %s61, %s62
      %p76 = scmp.eq.s32.totalorder %s16, 8
      %p77 = por %p75, %p76
      %p79 = scmp.ne.s32.totalorder %s62, %s78
      %p80 = scmp.eq.s32.totalorder %s16, 0
      %p81 = por %p79, %p80
      %s82 = ssub.s32 %s17, %s29
      %p83 = scmp.eq.s32.totalorder %s82, 0
      %s85 = sadd.s32 %s84, 1
      %s86 = scalar_select %p83, %s84, %s85
      %p89 = pneg %p83
      %p90 = scmp.eq.s32.totalorder %s10, 8
      %p91 = por %p89, %p90
      %p92 = scmp.ne.s32.totalorder %s84, %s87
      %p93 = scmp.eq.s32.totalorder %s10, 0
      %p94 = por %p92, %p93
      %p95 = scmp.ne.s32.totalorder %s84, %s87
      %p96 = scmp.eq.s32.totalorder %s15, 8
      %p97 = por %p95, %p96
      %p98 = scmp.ne.s32.totalorder %s87, %s88
      %p99 = scmp.eq.s32.totalorder %s15, 0
      %p100 = por %p98, %p99
      %p101 = scmp.ne.s32.totalorder %s87, %s88
      %p102 = scmp.eq.s32.totalorder %s16, 8
      %p103 = por %p101, %p102
      %p105 = scmp.ne.s32.totalorder %s88, %s104
      %p106 = scmp.eq.s32.totalorder %s16, 0
      %p107 = por %p105, %p106
      %s108 = ssub.s32 %s17, %s29
      %s109 = ssub.s32 %s18, %s25
      %s110 = sor.u32 %s108, %s109
      %p111 = scmp.eq.s32.totalorder %s110, 0
      %s113 = sadd.s32 %s112, 1
      %s114 = scalar_select %p111, %s112, %s113
      %p117 = pneg %p111
      %p118 = scmp.eq.s32.totalorder %s10, 8
      %p119 = por %p117, %p118
      %p120 = scmp.ne.s32.totalorder %s112, %s115
      %p121 = scmp.eq.s32.totalorder %s10, 0
      %p122 = por %p120, %p121
      %p123 = scmp.ne.s32.totalorder %s112, %s115
      %p124 = scmp.eq.s32.totalorder %s15, 8
      %p125 = por %p123, %p124
      %p126 = scmp.ne.s32.totalorder %s115, %s116
      %p127 = scmp.eq.s32.totalorder %s15, 0
      %p128 = por %p126, %p127
      %p129 = scmp.ne.s32.totalorder %s115, %s116
      %p130 = scmp.eq.s32.totalorder %s16, 8
      %p131 = por %p129, %p130
      %p133 = scmp.ne.s32.totalorder %s116, %s132
      %p134 = scmp.eq.s32.totalorder %s16, 0
      %p135 = por %p133, %p134
      %s136 = ssub.s32 %s17, %s29
      %s137 = ssub.s32 %s18, %s25
      %s138 = sor.u32 %s136, %s137
      %p139 = scmp.eq.s32.totalorder %s138, 0
      %s141 = sadd.s32 %s140, 1
      %s142 = scalar_select %p139, %s140, %s141
      %p145 = pneg %p139
      %p146 = scmp.eq.s32.totalorder %s10, 8
      %p147 = por %p145, %p146
      %p148 = scmp.ne.s32.totalorder %s140, %s143
      %p149 = scmp.eq.s32.totalorder %s10, 0
      %p150 = por %p148, %p149
      %p151 = scmp.ne.s32.totalorder %s140, %s143
      %p152 = scmp.eq.s32.totalorder %s15, 8
      %p153 = por %p151, %p152
      %p154 = scmp.ne.s32.totalorder %s143, %s144
      %p155 = scmp.eq.s32.totalorder %s15, 0
      %p156 = por %p154, %p155
      %p157 = scmp.ne.s32.totalorder %s143, %s144
      %p158 = scmp.eq.s32.totalorder %s16, 8
      %p159 = por %p157, %p158
      %p161 = scmp.ne.s32.totalorder %s144, %s160
      %p162 = scmp.eq.s32.totalorder %s16, 0
      %p163 = por %p161, %p162
      %p164 = scmp.le.s32.totalorder 1, %s10
      %p165 = scmp.lt.s32.totalorder %s10, 10
      %p166 = pnand %p164, %p165
      %p167 = pneg %p166
      // Predicated region
      $region9: #{agg_head_forward.5} parent=5 // pred_check
        _
      $region10: #{agg_head_forward.5} parent=5 // pred_check_branch
        %169 = sbr.rel (%p166) target = $region12
      $region11: #{agg_head_forward.5} parent=5 // pred_region
        %s170 = ssub.s32 %s10, 1
      $region12: #{agg_head_forward.5} parent=5 // pred_fallthru
        _
      %p171 = scmp.lt.s32.totalorder %s10, 9
      // Predicated region
      $region13: #{agg_head_forward.5} parent=5 // pred_check
        %p172 = pneg %p171
      $region14: #{agg_head_forward.5} parent=5 // pred_check_branch
        %174 = sbr.rel (%p172) target = $region16
      $region15: #{agg_head_forward.5} parent=5 // pred_region
        // Predicated region
        $region17: #{agg_head_forward.5} parent=15 // pred_check
          %p175 = pneg %p42
        $region18: #{agg_head_forward.5} parent=15 // pred_check_branch
          %177 = sbr.rel (%p175) target = $region20
        $region19: #{agg_head_forward.5} parent=15 // pred_region
          %p178 = scmp.lt.s32.totalorder %s17, 2
          %s179 = scalar_select %p178, %s17, 2
          %s180 = smul.addr %s179, 2
          %s181 = smul.addr %s180, 8
          %s182 = scalar_lea.vmem %s0, %s181
        $region20: #{agg_head_forward.5} parent=15 // pred_fallthru
          _
        // Predicated region
        $region21: #{agg_head_forward.5} parent=15 // pred_check
          %p183 = pneg %p68
        $region22: #{agg_head_forward.5} parent=15 // pred_check_branch
          %185 = sbr.rel (%p183) target = $region24
        $region23: #{agg_head_forward.5} parent=15 // pred_region
          %p186 = scmp.lt.s32.totalorder %s17, 2
          %s187 = scalar_select %p186, %s17, 2
          %s188 = smul.addr %s187, 2
          %s189 = scalar_lea.vmem %s1, %s188
        $region24: #{agg_head_forward.5} parent=15 // pred_fallthru
          _
        // Predicated region
        $region25: #{agg_head_forward.5} parent=15 // pred_check
          %p190 = pneg %p94
        $region26: #{agg_head_forward.5} parent=15 // pred_check_branch
          %192 = sbr.rel (%p190) target = $region28
        $region27: #{agg_head_forward.5} parent=15 // pred_region
          %p193 = scmp.lt.s32.totalorder %s17, 2
          %s194 = scalar_select %p193, %s17, 2
          %s195 = smul.addr %s194, 2
          %s196 = scalar_lea.vmem %s2, %s195
        $region28: #{agg_head_forward.5} parent=15 // pred_fallthru
          _
        // Predicated region
        $region29: #{agg_head_forward.5} parent=15 // pred_check
          %p197 = pneg %p122
        $region30: #{agg_head_forward.5} parent=15 // pred_check_branch
          %199 = sbr.rel (%p197) target = $region32
        $region31: #{agg_head_forward.5} parent=15 // pred_region
          %s200 = sand.u32 %s112, 1
          %s201 = sand.u32 %s112, 1
          %s202 = smul.addr %s201, 128
          %s203 = scalar_lea.vmem [#allocation2], %s202
          %s204 = smul.addr %s17, 96
          %s205 = sadd.s32 %s18, %s204
          %s206 = smul.addr %s205, 4
          %s207 = scalar_lea.vmem %s3, %s206
          // Predicated region
          $region33: #{agg_head_forward.5} parent=31 // pred_check
            _
          $region34: #{agg_head_forward.5} parent=31 // pred_check_branch
            %209 = sbr.rel (0) target = $region36
          $region35: #{agg_head_forward.5} parent=31 // pred_region
            // Predicated region
            $region37: #{agg_head_forward.5} parent=35 // pred_check
              _
            $region38: #{agg_head_forward.5} parent=35 // pred_check_branch
              %211 = sbr.rel target = $region40
            $region39: #{agg_head_forward.5} parent=35 // pred_region
              // Predicated region
              $region52: #{agg_head_forward.5} parent=39 // pred_check
                _
              $region53: #{agg_head_forward.5} parent=39 // pred_check_branch
                %288 = sbr.rel (0) target = $region55
              $region54: #{agg_head_forward.5} parent=39 // pred_region
                loop: start=0, step=1, limit=1
                $region56: #{agg_head_forward.5} parent=54 // loop_pre_header
                  _
                $region57: #{agg_head_forward.5} parent=54 // loop_header
                  %s290 = sphi 0, %s294
                  %p291 = scmp.ge.s32.totalorder %s290, 1
                  %s295 = sphi %s207, %s207
                  %s296 = sphi %s203, %s203
                $region58: #{agg_head_forward.5} parent=54 // loop_header_branch
                  %293 = sbr.rel (%p291) target = $region62
                $region59: #{agg_head_forward.5} parent=54 // loop_body
                  _
                $region60: #{agg_head_forward.5} parent=54 // loop_footer
                  %s294 = sadd.s32 1, %s290
                $region61: #{agg_head_forward.5} parent=54 // loop_footer_branch
                  %289 = sbr.rel target = $region57
                $region62: #{agg_head_forward.5} parent=54 // loop_exit
                  _
                loop: start=0, step=1, limit=1
                $region63: #{agg_head_forward.5} parent=54 // loop_pre_header
                  _
                $region64: #{agg_head_forward.5} parent=54 // loop_header
                  %s299 = sphi 0, %s303
                  %p300 = scmp.ge.s32.totalorder %s299, 1
                  %s304 = sphi %s207, %s207
                  %s305 = sphi %s203, %s203
                $region65: #{agg_head_forward.5} parent=54 // loop_header_branch
                  %302 = sbr.rel (%p300) target = $region69
                $region66: #{agg_head_forward.5} parent=54 // loop_body
                  %v306 = vld [vmem:[%s304] sm:$0xf]
                  %307 = vst [vmem:[%s305] sm:$0xf] %v306
                  %v308 = vld [vmem:[%s304 + $0xc] sm:$0xf]
                  %309 = vst [vmem:[%s305 + $0x4] sm:$0xf] %v308
                  %v310 = vld [vmem:[%s304 + $0x18] sm:$0xf]
                  %311 = vst [vmem:[%s305 + $0x8] sm:$0xf] %v310
                  %v312 = vld [vmem:[%s304 + $0x24] sm:$0xf]
                  %313 = vst [vmem:[%s305 + $0xc] sm:$0xf] %v312
                  %v314 = vld [vmem:[%s304 + $0x30] sm:$0xf]
                  %315 = vst [vmem:[%s305 + $0x10] sm:$0xf] %v314
                  %v316 = vld [vmem:[%s304 + $0x3c] sm:$0xf]
                  %317 = vst [vmem:[%s305 + $0x14] sm:$0xf] %v316
                  %v318 = vld [vmem:[%s304 + $0x48] sm:$0xf]
                  %319 = vst [vmem:[%s305 + $0x18] sm:$0xf] %v318
                  %v320 = vld [vmem:[%s304 + $0x54] sm:$0xf]
                  %321 = vst [vmem:[%s305 + $0x1c] sm:$0xf] %v320
                  %v322 = vld [vmem:[%s304 + $0x60] sm:$0xf]
                  %323 = vst [vmem:[%s305 + $0x20] sm:$0xf] %v322
                  %v324 = vld [vmem:[%s304 + $0x6c] sm:$0xf]
                  %325 = vst [vmem:[%s305 + $0x24] sm:$0xf] %v324
                  %v326 = vld [vmem:[%s304 + $0x78] sm:$0xf]
                  %327 = vst [vmem:[%s305 + $0x28] sm:$0xf] %v326
                  %v328 = vld [vmem:[%s304 + $0x84] sm:$0xf]
                  %329 = vst [vmem:[%s305 + $0x2c] sm:$0xf] %v328
                  %v330 = vld [vmem:[%s304 + $0x90] sm:$0xf]
                  %331 = vst [vmem:[%s305 + $0x30] sm:$0xf] %v330
                  %v332 = vld [vmem:[%s304 + $0x9c] sm:$0xf]
                  %333 = vst [vmem:[%s305 + $0x34] sm:$0xf] %v332
                  %v334 = vld [vmem:[%s304 + $0xa8] sm:$0xf]
                  %335 = vst [vmem:[%s305 + $0x38] sm:$0xf] %v334
                  %v336 = vld [vmem:[%s304 + $0xb4] sm:$0xf]
                  %337 = vst [vmem:[%s305 + $0x3c] sm:$0xf] %v336
                  %v338 = vld [vmem:[%s304 + $0xc0] sm:$0xf]
                  %339 = vst [vmem:[%s305 + $0x40] sm:$0xf] %v338
                  %v340 = vld [vmem:[%s304 + $0xcc] sm:$0xf]
                  %341 = vst [vmem:[%s305 + $0x44] sm:$0xf] %v340
                  %v342 = vld [vmem:[%s304 + $0xd8] sm:$0xf]
                  %343 = vst [vmem:[%s305 + $0x48] sm:$0xf] %v342
                  %v344 = vld [vmem:[%s304 + $0xe4] sm:$0xf]
                  %345 = vst [vmem:[%s305 + $0x4c] sm:$0xf] %v344
                  %v346 = vld [vmem:[%s304 + $0xf0] sm:$0xf]
                  %347 = vst [vmem:[%s305 + $0x50] sm:$0xf] %v346
                  %v348 = vld [vmem:[%s304 + $0xfc] sm:$0xf]
                  %349 = vst [vmem:[%s305 + $0x54] sm:$0xf] %v348
                  %v350 = vld [vmem:[%s304 + $0x108] sm:$0xf]
                  %351 = vst [vmem:[%s305 + $0x58] sm:$0xf] %v350
                  %v352 = vld [vmem:[%s304 + $0x114] sm:$0xf]
                  %353 = vst [vmem:[%s305 + $0x5c] sm:$0xf] %v352
                  %v354 = vld [vmem:[%s304 + $0x120] sm:$0xf]
                  %355 = vst [vmem:[%s305 + $0x60] sm:$0xf] %v354
                  %v356 = vld [vmem:[%s304 + $0x12c] sm:$0xf]
                  %357 = vst [vmem:[%s305 + $0x64] sm:$0xf] %v356
                  %v358 = vld [vmem:[%s304 + $0x138] sm:$0xf]
                  %359 = vst [vmem:[%s305 + $0x68] sm:$0xf] %v358
                  %v360 = vld [vmem:[%s304 + $0x144] sm:$0xf]
                  %361 = vst [vmem:[%s305 + $0x6c] sm:$0xf] %v360
                  %v362 = vld [vmem:[%s304 + $0x150] sm:$0xf]
                  %363 = vst [vmem:[%s305 + $0x70] sm:$0xf] %v362
                  %v364 = vld [vmem:[%s304 + $0x15c] sm:$0xf]
                  %365 = vst [vmem:[%s305 + $0x74] sm:$0xf] %v364
                  %v366 = vld [vmem:[%s304 + $0x168] sm:$0xf]
                  %367 = vst [vmem:[%s305 + $0x78] sm:$0xf] %v366
                  %v368 = vld [vmem:[%s304 + $0x174] sm:$0xf]
                  %369 = vst [vmem:[%s305 + $0x7c] sm:$0xf] %v368
                $region67: #{agg_head_forward.5} parent=54 // loop_footer
                  %s303 = sadd.s32 1, %s299
                $region68: #{agg_head_forward.5} parent=54 // loop_footer_branch
                  %298 = sbr.rel target = $region64
                $region69: #{agg_head_forward.5} parent=54 // loop_exit
                  _
              $region55: #{agg_head_forward.5} parent=39 // pred_fallthru
                _
            $region40: #{agg_head_forward.5} parent=35 // pred_fallthru
              _
            // Predicated region
            $region41: #{agg_head_forward.5} parent=35 // pred_check
              _
            $region42: #{agg_head_forward.5} parent=35 // pred_check_branch
              %213 = sbr.rel (0) target = $region44
            $region43: #{agg_head_forward.5} parent=35 // pred_region
              loop: start=0, step=1, limit=1
              $region45: #{agg_head_forward.5} parent=43 // loop_pre_header
                _
              $region46: #{agg_head_forward.5} parent=43 // loop_header
                %s216 = sphi 0, %s220
                %p217 = scmp.ge.s32.totalorder %s216, 1
                %s221 = sphi %s207, %s207
                %s222 = sphi %s203, %s203
              $region47: #{agg_head_forward.5} parent=43 // loop_header_branch
                %219 = sbr.rel (%p217) target = $region51
              $region48: #{agg_head_forward.5} parent=43 // loop_body
                %v223 = vld [vmem:[%s221] sm:$0xf]
                %224 = vst [vmem:[%s222] sm:$0xf] %v223
                %v225 = vld [vmem:[%s221 + $0xc] sm:$0xf]
                %226 = vst [vmem:[%s222 + $0x4] sm:$0xf] %v225
                %v227 = vld [vmem:[%s221 + $0x18] sm:$0xf]
                %228 = vst [vmem:[%s222 + $0x8] sm:$0xf] %v227
                %v229 = vld [vmem:[%s221 + $0x24] sm:$0xf]
                %230 = vst [vmem:[%s222 + $0xc] sm:$0xf] %v229
                %v231 = vld [vmem:[%s221 + $0x30] sm:$0xf]
                %232 = vst [vmem:[%s222 + $0x10] sm:$0xf] %v231
                %v233 = vld [vmem:[%s221 + $0x3c] sm:$0xf]
                %234 = vst [vmem:[%s222 + $0x14] sm:$0xf] %v233
                %v235 = vld [vmem:[%s221 + $0x48] sm:$0xf]
                %236 = vst [vmem:[%s222 + $0x18] sm:$0xf] %v235
                %v237 = vld [vmem:[%s221 + $0x54] sm:$0xf]
                %238 = vst [vmem:[%s222 + $0x1c] sm:$0xf] %v237
                %v239 = vld [vmem:[%s221 + $0x60] sm:$0xf]
                %240 = vst [vmem:[%s222 + $0x20] sm:$0xf] %v239
                %v241 = vld [vmem:[%s221 + $0x6c] sm:$0xf]
                %242 = vst [vmem:[%s222 + $0x24] sm:$0xf] %v241
                %v243 = vld [vmem:[%s221 + $0x78] sm:$0xf]
                %244 = vst [vmem:[%s222 + $0x28] sm:$0xf] %v243
                %v245 = vld [vmem:[%s221 + $0x84] sm:$0xf]
                %246 = vst [vmem:[%s222 + $0x2c] sm:$0xf] %v245
                %v247 = vld [vmem:[%s221 + $0x90] sm:$0xf]
                %248 = vst [vmem:[%s222 + $0x30] sm:$0xf] %v247
                %v249 = vld [vmem:[%s221 + $0x9c] sm:$0xf]
                %250 = vst [vmem:[%s222 + $0x34] sm:$0xf] %v249
                %v251 = vld [vmem:[%s221 + $0xa8] sm:$0xf]
                %252 = vst [vmem:[%s222 + $0x38] sm:$0xf] %v251
                %v253 = vld [vmem:[%s221 + $0xb4] sm:$0xf]
                %254 = vst [vmem:[%s222 + $0x3c] sm:$0xf] %v253
                %v255 = vld [vmem:[%s221 + $0xc0] sm:$0xf]
                %256 = vst [vmem:[%s222 + $0x40] sm:$0xf] %v255
                %v257 = vld [vmem:[%s221 + $0xcc] sm:$0xf]
                %258 = vst [vmem:[%s222 + $0x44] sm:$0xf] %v257
                %v259 = vld [vmem:[%s221 + $0xd8] sm:$0xf]
                %260 = vst [vmem:[%s222 + $0x48] sm:$0xf] %v259
                %v261 = vld [vmem:[%s221 + $0xe4] sm:$0xf]
                %262 = vst [vmem:[%s222 + $0x4c] sm:$0xf] %v261
                %v263 = vld [vmem:[%s221 + $0xf0] sm:$0xf]
                %264 = vst [vmem:[%s222 + $0x50] sm:$0xf] %v263
                %v265 = vld [vmem:[%s221 + $0xfc] sm:$0xf]
                %266 = vst [vmem:[%s222 + $0x54] sm:$0xf] %v265
                %v267 = vld [vmem:[%s221 + $0x108] sm:$0xf]
                %268 = vst [vmem:[%s222 + $0x58] sm:$0xf] %v267
                %v269 = vld [vmem:[%s221 + $0x114] sm:$0xf]
                %270 = vst [vmem:[%s222 + $0x5c] sm:$0xf] %v269
                %v271 = vld [vmem:[%s221 + $0x120] sm:$0xf]
                %272 = vst [vmem:[%s222 + $0x60] sm:$0xf] %v271
                %v273 = vld [vmem:[%s221 + $0x12c] sm:$0xf]
                %274 = vst [vmem:[%s222 + $0x64] sm:$0xf] %v273
                %v275 = vld [vmem:[%s221 + $0x138] sm:$0xf]
                %276 = vst [vmem:[%s222 + $0x68] sm:$0xf] %v275
                %v277 = vld [vmem:[%s221 + $0x144] sm:$0xf]
                %278 = vst [vmem:[%s222 + $0x6c] sm:$0xf] %v277
                %v279 = vld [vmem:[%s221 + $0x150] sm:$0xf]
                %280 = vst [vmem:[%s222 + $0x70] sm:$0xf] %v279
                %v281 = vld [vmem:[%s221 + $0x15c] sm:$0xf]
                %282 = vst [vmem:[%s222 + $0x74] sm:$0xf] %v281
                %v283 = vld [vmem:[%s221 + $0x168] sm:$0xf]
                %284 = vst [vmem:[%s222 + $0x78] sm:$0xf] %v283
                %v285 = vld [vmem:[%s221 + $0x174] sm:$0xf]
                %286 = vst [vmem:[%s222 + $0x7c] sm:$0xf] %v285
              $region49: #{agg_head_forward.5} parent=43 // loop_footer
                %s220 = sadd.s32 1, %s216
              $region50: #{agg_head_forward.5} parent=43 // loop_footer_branch
                %215 = sbr.rel target = $region46
              $region51: #{agg_head_forward.5} parent=43 // loop_exit
                _
            $region44: #{agg_head_forward.5} parent=35 // pred_fallthru
              _
          $region36: #{agg_head_forward.5} parent=31 // pred_fallthru
            _
          %370 = vnop
        $region32: #{agg_head_forward.5} parent=15 // pred_fallthru
          _
      $region16: #{agg_head_forward.5} parent=5 // pred_fallthru
        _
      %p371 = scmp.le.s32.totalorder 1, %s10
      %p372 = scmp.lt.s32.totalorder %s10, 10
      %p373 = pnand %p371, %p372
      %p374 = pneg %p373
      // Predicated region
      $region70: #{agg_head_forward.5} parent=5 // pred_check
        _
      $region71: #{agg_head_forward.5} parent=5 // pred_check_branch
        %376 = sbr.rel (%p373) target = $region73
      $region72: #{agg_head_forward.5} parent=5 // pred_region
        %s377 = ssub.s32 %s10, 1
        %s378 = sand.u32 %s115, 1
        %s379 = sand.u32 %s115, 1
        %s380 = smul.addr %s379, 128
        %s381 = scalar_lea.vmem [#allocation2], %s380
        // Predicated region
        $region74: #{agg_head_forward.5} parent=72 // pred_check
          %p382 = pneg %p128
        $region75: #{agg_head_forward.5} parent=72 // pred_check_branch
          %384 = sbr.rel (%p382) target = $region77
        $region76: #{agg_head_forward.5} parent=72 // pred_region
          _
        $region77: #{agg_head_forward.5} parent=72 // pred_fallthru
          _
        %p385 = scmp.lt.s32.totalorder %s19, 2
        %s386 = scalar_select %p385, %s19, 2
        %s387 = smul.addr %s386, 2
        %s388 = smul.addr %s387, 8
        %s389 = scalar_lea.vmem %s0, %s388
        %p390 = pneg %p48
        %p391 = pneg %p45
        %p392 = scmp.lt.s32.totalorder %s19, 2
        %s393 = scalar_select %p392, %s19, 2
        %s394 = smul.addr %s393, 2
        %s395 = scalar_lea.vmem %s1, %s394
        %p396 = pneg %p74
        %p397 = pneg %p71
        %p398 = scmp.lt.s32.totalorder %s19, 2
        %s399 = scalar_select %p398, %s19, 2
        %s400 = smul.addr %s399, 2
        %s401 = scalar_lea.vmem %s2, %s400
        %p402 = pneg %p100
        %p403 = pneg %p97
        %s404 = sand.u32 %s115, 1
        %s405 = sand.u32 %s115, 1
        %s406 = smul.addr %s405, 128
        %s407 = scalar_lea.vmem [#allocation2], %s406
        %p408 = pneg %p128
        %p409 = pneg %p125
        %p410 = pneg %p156
        %p411 = pneg %p153
        %p412 = scmp.lt.s32.totalorder %s19, 2
        %s413 = scalar_select %p412, %s19, 2
        %p414 = scmp.lt.s32.totalorder %s20, 2
        %s415 = scalar_select %p414, %s20, 2
        %s416 = smul.addr %s413, 3
        %s417 = sadd.s32 %s415, %s416
        %s418 = smul.addr %s417, 8
        %s419 = scalar_lea.vmem %s4, %s418
        %p420 = scmp.lt.s32.totalorder %s19, 2
        %s421 = scalar_select %p420, %s19, 2
        %s422 = smul.addr %s421, 2
        %s423 = smul.addr %s422, 8
        %s424 = scalar_lea.vmem %s0, %s423
        %p425 = scmp.lt.s32.totalorder %s19, 2
        %s426 = scalar_select %p425, %s19, 2
        %s427 = smul.addr %s426, 2
        %s428 = scalar_lea.vmem %s1, %s427
        %p429 = scmp.lt.s32.totalorder %s19, 2
        %s430 = scalar_select %p429, %s19, 2
        %s431 = smul.addr %s430, 2
        %s432 = scalar_lea.vmem %s2, %s431
        %p433 = scmp.lt.s32.totalorder %s19, 2
        %s434 = scalar_select %p433, %s19, 2
        %p435 = scmp.lt.s32.totalorder %s20, 2
        %s436 = scalar_select %p435, %s20, 2
        %s437 = smul.addr %s434, 3
        %s438 = sadd.s32 %s436, %s437
        %s439 = smul.addr %s438, 8
        %s440 = scalar_lea.vmem %s4, %s439
        %v442 = vld [vmem:[%s424] sm:$0xff]
        %v443 = vld [vmem:[%s424 + $0x8] sm:$0xff]
        %v444 = vrot.slane %v442, 4
        %v445 = vadd.f32 %v442, %v444
        %v446 = vrot.slane %v445, 2
        %v447 = vadd.f32 %v445, %v446
        %v448 = vrot.slane %v447, 1
        %v449 = vadd.f32 %v447, %v448
        %v450 = vrot.slane %v443, 4
        %v451 = vadd.f32 %v443, %v450
        %v452 = vrot.slane %v451, 2
        %v453 = vadd.f32 %v451, %v452
        %v454 = vrot.slane %v453, 1
        %v455 = vadd.f32 %v453, %v454
        %v456 = vrcp.pop 8.0
        %v457 = vmul.f32 %v449, %v456
        %v458 = vmul.f32 %v455, %v456
        %v459 = vsub.f32 %v442, %v457
        %v460 = vsub.f32 %v443, %v458
        %v461 = vmul.f32 %v459, %v459
        %v462 = vmul.f32 %v460, %v460
        %v463 = vrot.slane %v461, 4
        %v464 = vadd.f32 %v461, %v463
        %v465 = vrot.slane %v464, 2
        %v466 = vadd.f32 %v464, %v465
        %v467 = vrot.slane %v466, 1
        %v468 = vadd.f32 %v466, %v467
        %v469 = vrot.slane %v462, 4
        %v470 = vadd.f32 %v462, %v469
        %v471 = vrot.slane %v470, 2
        %v472 = vadd.f32 %v470, %v471
        %v473 = vrot.slane %v472, 1
        %v474 = vadd.f32 %v472, %v473
        %v475 = vmul.f32 %v468, %v456
        %v476 = vmul.f32 %v474, %v456
        %v477 = vadd.f32 %v475, 1e-05
        %v478 = vadd.f32 %v476, 1e-05
        %v479 = vrsqrt.pop %v477
        %v480 = vrsqrt.pop %v478
        %v481 = vmul.f32 %v459, %v479
        %v482 = vmul.f32 %v460, %v480
        %v483 = vld [vmem:[%s428] sm:$0x3]
        %v485 = vlaneseq
        %v486 = vshrl.u32 %v485, 7
        %v487 = vsub.s32 0, %v486
        %v488 = vrot.slane %v483, %v487
        %v489 = vlaneseq
        %v490 = vshrl.u32 %v489, 7
        %v491 = vsub.s32 1, %v490
        %v492 = vrot.slane %v483, %v491
        %v495 = vmul.f32 %v481, %v488
        %v496 = vmul.f32 %v482, %v492
        %v497 = vld [vmem:[%s432] sm:$0x3]
        %v499 = vlaneseq
        %v500 = vshrl.u32 %v499, 7
        %v501 = vsub.s32 0, %v500
        %v502 = vrot.slane %v497, %v501
        %v503 = vlaneseq
        %v504 = vshrl.u32 %v503, 7
        %v505 = vsub.s32 1, %v504
        %v506 = vrot.slane %v497, %v505
        %v509 = vadd.f32 %v495, %v502
        %v510 = vadd.f32 %v496, %v506
        %v511 = vpack.c.bf16 %v509, %v509
        %v512 = vpack.c.bf16 %v510, %v510
        %v513 = vld [vmem:[%s381] sm:$0xf]
        %v514 = vld [vmem:[%s381 + $0x4] sm:$0xf]
        %v515 = vld [vmem:[%s381 + $0x8] sm:$0xf]
        %v516 = vld [vmem:[%s381 + $0xc] sm:$0xf]
        %v517 = vld [vmem:[%s381 + $0x10] sm:$0xf]
        %v518 = vld [vmem:[%s381 + $0x14] sm:$0xf]
        %v519 = vld [vmem:[%s381 + $0x18] sm:$0xf]
        %v520 = vld [vmem:[%s381 + $0x1c] sm:$0xf]
        %v521 = vld [vmem:[%s381 + $0x20] sm:$0xf]
        %v522 = vld [vmem:[%s381 + $0x24] sm:$0xf]
        %v523 = vld [vmem:[%s381 + $0x28] sm:$0xf]
        %v524 = vld [vmem:[%s381 + $0x2c] sm:$0xf]
        %v525 = vld [vmem:[%s381 + $0x30] sm:$0xf]
        %v526 = vld [vmem:[%s381 + $0x34] sm:$0xf]
        %v527 = vld [vmem:[%s381 + $0x38] sm:$0xf]
        %v528 = vld [vmem:[%s381 + $0x3c] sm:$0xf]
        %v529 = vld [vmem:[%s381 + $0x40] sm:$0xf]
        %v530 = vld [vmem:[%s381 + $0x44] sm:$0xf]
        %v531 = vld [vmem:[%s381 + $0x48] sm:$0xf]
        %v532 = vld [vmem:[%s381 + $0x4c] sm:$0xf]
        %v533 = vld [vmem:[%s381 + $0x50] sm:$0xf]
        %v534 = vld [vmem:[%s381 + $0x54] sm:$0xf]
        %v535 = vld [vmem:[%s381 + $0x58] sm:$0xf]
        %v536 = vld [vmem:[%s381 + $0x5c] sm:$0xf]
        %v537 = vld [vmem:[%s381 + $0x60] sm:$0xf]
        %v538 = vld [vmem:[%s381 + $0x64] sm:$0xf]
        %v539 = vld [vmem:[%s381 + $0x68] sm:$0xf]
        %v540 = vld [vmem:[%s381 + $0x6c] sm:$0xf]
        %v541 = vld [vmem:[%s381 + $0x70] sm:$0xf]
        %v542 = vld [vmem:[%s381 + $0x74] sm:$0xf]
        %v543 = vld [vmem:[%s381 + $0x78] sm:$0xf]
        %v544 = vld [vmem:[%s381 + $0x7c] sm:$0xf]
        %v577 = vunpack.c.l.b16 %v513
        %v578 = vunpack.c.l.b16 %v514
        %v579 = vunpack.c.l.b16 %v515
        %v580 = vunpack.c.l.b16 %v516
        %v581 = vunpack.c.l.b16 %v517
        %v582 = vunpack.c.l.b16 %v518
        %v583 = vunpack.c.l.b16 %v519
        %v584 = vunpack.c.l.b16 %v520
        %v585 = vunpack.c.l.b16 %v521
        %v586 = vunpack.c.l.b16 %v522
        %v587 = vunpack.c.l.b16 %v523
        %v588 = vunpack.c.l.b16 %v524
        %v589 = vunpack.c.l.b16 %v525
        %v590 = vunpack.c.l.b16 %v526
        %v591 = vunpack.c.l.b16 %v527
        %v592 = vunpack.c.l.b16 %v528
        %v593 = vunpack.c.l.b16 %v529
        %v594 = vunpack.c.l.b16 %v530
        %v595 = vunpack.c.l.b16 %v531
        %v596 = vunpack.c.l.b16 %v532
        %v597 = vunpack.c.l.b16 %v533
        %v598 = vunpack.c.l.b16 %v534
        %v599 = vunpack.c.l.b16 %v535
        %v600 = vunpack.c.l.b16 %v536
        %v601 = vunpack.c.l.b16 %v537
        %v602 = vunpack.c.l.b16 %v538
        %v603 = vunpack.c.l.b16 %v539
        %v604 = vunpack.c.l.b16 %v540
        %v605 = vunpack.c.l.b16 %v541
        %v606 = vunpack.c.l.b16 %v542
        %v607 = vunpack.c.l.b16 %v543
        %v608 = vunpack.c.l.b16 %v544
        %v609 = vpack.c.b16 %v578, %v577
        %v610 = vpack.c.b16 %v580, %v579
        %v611 = vpack.c.b16 %v582, %v581
        %v612 = vpack.c.b16 %v584, %v583
        %v613 = vpack.c.b16 %v586, %v585
        %v614 = vpack.c.b16 %v588, %v587
        %v615 = vpack.c.b16 %v590, %v589
        %v616 = vpack.c.b16 %v592, %v591
        %v617 = vpack.c.b16 %v594, %v593
        %v618 = vpack.c.b16 %v596, %v595
        %v619 = vpack.c.b16 %v598, %v597
        %v620 = vpack.c.b16 %v600, %v599
        %v621 = vpack.c.b16 %v602, %v601
        %v622 = vpack.c.b16 %v604, %v603
        %v623 = vpack.c.b16 %v606, %v605
        %v624 = vpack.c.b16 %v608, %v607
        %641 = vmatprep.subr.bf16.mxu0 0
        %642 = vmatpush1.bf16.msra.mxu0 %v609
        %643 = vmatprep.subr.bf16.mxu0 0
        %644 = vmatpush1.bf16.msra.mxu0 %v610
        %645 = vmatprep.subr.bf16.mxu0 0
        %646 = vmatpush1.bf16.msra.mxu0 %v611
        %647 = vmatprep.subr.bf16.mxu0 0
        %648 = vmatpush1.bf16.msra.mxu0 %v612
        %649 = vmatprep.subr.bf16.mxu0 0
        %650 = vmatpush1.bf16.msra.mxu0 %v613
        %651 = vmatprep.subr.bf16.mxu0 0
        %652 = vmatpush1.bf16.msra.mxu0 %v614
        %653 = vmatprep.subr.bf16.mxu0 0
        %654 = vmatpush1.bf16.msra.mxu0 %v615
        %655 = vmatprep.subr.bf16.mxu0 0
        %656 = vmatpush1.bf16.msra.mxu0 %v616
        %657 = vmatprep.subr.bf16.mxu0 0
        %658 = vmatpush1.bf16.msra.mxu0 %v617
        %659 = vmatprep.subr.bf16.mxu0 0
        %660 = vmatpush1.bf16.msra.mxu0 %v618
        %661 = vmatprep.subr.bf16.mxu0 0
        %662 = vmatpush1.bf16.msra.mxu0 %v619
        %663 = vmatprep.subr.bf16.mxu0 0
        %664 = vmatpush1.bf16.msra.mxu0 %v620
        %665 = vmatprep.subr.bf16.mxu0 0
        %666 = vmatpush1.bf16.msra.mxu0 %v621
        %667 = vmatprep.subr.bf16.mxu0 0
        %668 = vmatpush1.bf16.msra.mxu0 %v622
        %669 = vmatprep.subr.bf16.mxu0 0
        %670 = vmatpush1.bf16.msra.mxu0 %v623
        %671 = vmatprep.subr.bf16.mxu0 0
        %672 = vmatpush1.bf16.msra.mxu0 %v624
        %673 = vmatprep.mubr.bf16.mxu0 %v512
        %674 = vmatmul.mubr.bf16.gmra.mrb[0].mxu0 %v511
        %v675 = vpop.f32.mrb[0].mxu0
        %v676 = vadd.f32 0.0, %v675
        %v677 = vpop.f32.mrb[0].mxu0
        %v678 = vpop.f32.mrb[0].mxu0
        %v679 = vpop.f32.mrb[0].mxu0
        %680 = vdwg.mxu0
        %681 = vst [vmem:[%s440] sm:$0xff] %v676
        %p682 = scmp.lt.s32.totalorder %s19, 2
        %s683 = scalar_select %p682, %s19, 2
        %p684 = scmp.lt.s32.totalorder %s20, 2
        %s685 = scalar_select %p684, %s20, 2
        %s686 = smul.addr %s683, 3
        %s687 = sadd.s32 %s685, %s686
        %s688 = smul.addr %s687, 8
        %s689 = scalar_lea.vmem %s4, %s688
        // Predicated region
        $region78: #{agg_head_forward.5} parent=72 // pred_check
          %p690 = pneg %p153
        $region79: #{agg_head_forward.5} parent=72 // pred_check_branch
          %692 = sbr.rel (%p690) target = $region81
        $region80: #{agg_head_forward.5} parent=72 // pred_region
          _
        $region81: #{agg_head_forward.5} parent=72 // pred_fallthru
          _
      $region73: #{agg_head_forward.5} parent=5 // pred_fallthru
        _
      %p693 = scmp.le.s32.totalorder 2, %s10
      // Predicated region
      $region82: #{agg_head_forward.5} parent=5 // pred_check
        %p694 = pneg %p693
      $region83: #{agg_head_forward.5} parent=5 // pred_check_branch
        %696 = sbr.rel (%p694) target = $region85
      $region84: #{agg_head_forward.5} parent=5 // pred_region
        %s697 = ssub.s32 %s10, 2
        // Predicated region
        $region86: #{agg_head_forward.5} parent=84 // pred_check
          %p698 = pneg %p159
        $region87: #{agg_head_forward.5} parent=84 // pred_check_branch
          %700 = sbr.rel (%p698) target = $region89
        $region88: #{agg_head_forward.5} parent=84 // pred_region
          %p701 = scmp.lt.s32.totalorder %s21, 2
          %s702 = scalar_select %p701, %s21, 2
          %p703 = scmp.lt.s32.totalorder %s22, 2
          %s704 = scalar_select %p703, %s22, 2
          %s705 = smul.addr %s702, 3
          %s706 = sadd.s32 %s704, %s705
          %s707 = smul.addr %s706, 8
          %s708 = scalar_lea.vmem %s4, %s707
        $region89: #{agg_head_forward.5} parent=84 // pred_fallthru
          _
      $region85: #{agg_head_forward.5} parent=5 // pred_fallthru
        _
    $region6: #{agg_head_forward.5} parent=1 // loop_footer
      %s14 = sadd.s32 1, %s10
    $region7: #{agg_head_forward.5} parent=1 // loop_footer_branch
      %9 = sbr.rel target = $region3
    $region8: #{agg_head_forward.5} parent=1 // loop_exit
      _

</llo_original>
